<compile_context>
chip_gen: v7x
topology: tpu7x:2x2x1
jax: 0.10.0
libtpu: 0.0.40
codegen_flags: <defaults>
</compile_context>

<pallas_src>
import jax
import jax.numpy as jnp
from jax.experimental import pallas as pl
from jax.experimental.pallas import tpu as pltpu


def _round_up(x, m):
    return ((x + m - 1) // m) * m


def _decoder_kernel(z_ref, w1_ref, b1_ref, w2_ref, b2_ref,
                    w3_ref, b3_ref, w4_ref, b4_ref, o_ref):
    # fc1 + swish.  z tile is f32 (tiny); cast to bf16 on the VPU, accumulate f32.
    h = jnp.dot(z_ref[...].astype(w1_ref.dtype), w1_ref[...],
                preferred_element_type=jnp.float32) + b1_ref[...]
    h = h * jax.nn.sigmoid(h)

    # fc2 + swish
    h = jnp.dot(h.astype(w2_ref.dtype), w2_ref[...],
                preferred_element_type=jnp.float32) + b2_ref[...]
    h = h * jax.nn.sigmoid(h)

    # fc3 + swish
    h = jnp.dot(h.astype(w3_ref.dtype), w3_ref[...],
                preferred_element_type=jnp.float32) + b3_ref[...]
    h = h * jax.nn.sigmoid(h)

    # fc4 (linear); f32 accumulate + f32 bias, cast to output dtype on store.
    o_ref[...] = (jnp.dot(h.astype(w4_ref.dtype), w4_ref[...],
                          preferred_element_type=jnp.float32)
                  + b4_ref[...]).astype(o_ref.dtype)


def prepare_params(params, compute_dtype=jnp.bfloat16):
    """One-time prep of decoder params for the kernel (hoisted off the call path).

    Weights are (in_features, out_features) -- transpose of PyTorch's (out, in)
    layout -- and are cast to bf16 once; biases become f32 (1, out) rows.
    """
    w1, b1, w2, b2, w3, b3, w4, b4 = params
    return (
        w1.astype(compute_dtype), b1.reshape(1, -1).astype(jnp.float32),
        w2.astype(compute_dtype), b2.reshape(1, -1).astype(jnp.float32),
        w3.astype(compute_dtype), b3.reshape(1, -1).astype(jnp.float32),
        w4.astype(compute_dtype), b4.reshape(1, -1).astype(jnp.float32),
    )


def image_decoder_forward(z, prepared_params, *, out_dtype=jnp.bfloat16,
                          block_m=None):
    """z: (B, n_latents) float32.  Returns x_logits: (B, 784) in out_dtype."""
    w1, b1, w2, b2, w3, b3, w4, b4 = prepared_params
    B, n_latents = z.shape
    OUT = w4.shape[1]                       # 784

    # Batch tile: multiple of 16 (bf16 sublane pack).  512 amortizes the
    # ~0.35us/step grid overhead on large batches and fits all generations'
    # default scoped VMEM; small batches get a single small tile.
    TM = block_m if block_m is not None else min(512, _round_up(B, 16))
    B_pad = _round_up(B, TM)
    grid = (B_pad // TM,)

    # Only batch rows are padded (cheap: B x n_latents is tiny); no lane pad.
    z_p = z if B_pad == B else jnp.pad(z, ((0, B_pad - B), (0, 0)))

    # Weights/biases: whole-array blocks with constant index_map -> VMEM-resident.
    const = lambda a: pl.BlockSpec(a.shape, lambda i: (0,) * a.ndim)

    out = pl.pallas_call(
        _decoder_kernel,
        out_shape=jax.ShapeDtypeStruct((B_pad, OUT), out_dtype),
        grid=grid,
        in_specs=[
            pl.BlockSpec((TM, n_latents), lambda i: (i, 0)),  # z streams over batch
            const(w1), const(b1),
            const(w2), const(b2),
            const(w3), const(b3),
            const(w4), const(b4),
        ],
        # Block last dim == full array dim (784): lane-legal, no padded columns.
        out_specs=pl.BlockSpec((TM, OUT), lambda i: (i, 0)),
        compiler_params=pltpu.CompilerParams(
            dimension_semantics=("parallel",)),   # 2-TC sharding candidate on v7x
    )(z_p, w1, b1, w2, b2, w3, b3, w4, b4)

    # Row un-pad only when needed; downstream consumers that can take the padded
    # (B_pad, 784) layout should pick block_m | B and skip this slice entirely.
    return out if B_pad == B else out[:B]


def init_params(key, n_latents):
    """Synthetic parameters matching nn.Linear shapes ((in, out) layout)."""
    ks = jax.random.split(key, 8)
    scale = 0.02
    w1 = scale * jax.random.normal(ks[0], (n_latents, 512), jnp.float32)
    b1 = scale * jax.random.normal(ks[1], (512,), jnp.float32)
    w2 = scale * jax.random.normal(ks[2], (512, 512), jnp.float32)
    b2 = scale * jax.random.normal(ks[3], (512,), jnp.float32)
    w3 = scale * jax.random.normal(ks[4], (512, 512), jnp.float32)
    b3 = scale * jax.random.normal(ks[5], (512,), jnp.float32)
    w4 = scale * jax.random.normal(ks[6], (512, 784), jnp.float32)
    b4 = scale * jax.random.normal(ks[7], (784,), jnp.float32)
    return (w1, b1, w2, b2, w3, b3, w4, b4)


def reference_forward(z, params):
    """Pure-JAX reference mirroring the kernel's bf16-matmul / f32-accum math."""
    w1, b1, w2, b2, w3, b3, w4, b4 = params
    bf = jnp.bfloat16
    h = jnp.dot(z.astype(bf), w1.astype(bf),
                preferred_element_type=jnp.float32) + b1
    h = h * jax.nn.sigmoid(h)
    h = jnp.dot(h.astype(bf), w2.astype(bf),
                preferred_element_type=jnp.float32) + b2
    h = h * jax.nn.sigmoid(h)
    h = jnp.dot(h.astype(bf), w3.astype(bf),
                preferred_element_type=jnp.float32) + b3
    h = h * jax.nn.sigmoid(h)
    return jnp.dot(h.astype(bf), w4.astype(bf),
                   preferred_element_type=jnp.float32) + b4


if __name__ == "__main__":
    key = jax.random.PRNGKey(0)
    k_z, k_p = jax.random.split(key)

    B, n_latents = 2, 16
    z = jax.random.normal(k_z, (B, n_latents), jnp.float32)
    params = init_params(k_p, n_latents)

    # One-time param prep (NOT on the per-call path).
    prepared = prepare_params(params)
    prepared = jax.tree_util.tree_map(jax.block_until_ready, prepared)

    out = image_decoder_forward(z, prepared)           # bf16 logits by default
    jax.block_until_ready(out)

    ref = reference_forward(z, params)
    assert out.shape == (B, 784), out.shape
    assert jnp.allclose(out.astype(jnp.float32), ref, atol=1e-2, rtol=1e-2), (
        float(jnp.max(jnp.abs(out.astype(jnp.float32) - ref))))

    # Also exercise the f32-output path once for the semantics-preserving mode.
    out_f32 = image_decoder_forward(z, prepared, out_dtype=jnp.float32)
    jax.block_until_ready(out_f32)
    assert jnp.allclose(out_f32, ref, atol=1e-2, rtol=1e-2)

    print("KERNEL_OK")
</pallas_src>

<mosaic_0001>
module attributes {stable_mosaic.version = 11 : i64} {
  func.func @_decoder_kernel(%arg0: i32, %arg1: memref<16x16xf32, #tpu.memory_space<vmem>>, %arg2: memref<16x512xbf16, #tpu.memory_space<vmem>>, %arg3: memref<1x512xf32, #tpu.memory_space<vmem>>, %arg4: memref<512x512xbf16, #tpu.memory_space<vmem>>, %arg5: memref<1x512xf32, #tpu.memory_space<vmem>>, %arg6: memref<512x512xbf16, #tpu.memory_space<vmem>>, %arg7: memref<1x512xf32, #tpu.memory_space<vmem>>, %arg8: memref<512x784xbf16, #tpu.memory_space<vmem>>, %arg9: memref<1x784xf32, #tpu.memory_space<vmem>>, %arg10: memref<16x784xbf16, #tpu.memory_space<vmem>>) attributes {dimension_semantics = [#tpu.dimension_semantics<parallel>], iteration_bounds = array<i64: 1>, scalar_prefetch = 0 : i64, scratch_operands = 0 : i64, tpu.core_type = #tpu.core_type<tc>, window_params = [{transform_indices = @transform_0, window_bounds = array<i64: 16, 16>}, {pipeline_mode = #tpu.pipeline_mode<synchronous>, transform_indices = @transform_1, window_bounds = array<i64: 16, 512>}, {pipeline_mode = #tpu.pipeline_mode<synchronous>, transform_indices = @transform_2, window_bounds = array<i64: 1, 512>}, {pipeline_mode = #tpu.pipeline_mode<synchronous>, transform_indices = @transform_3, window_bounds = array<i64: 512, 512>}, {pipeline_mode = #tpu.pipeline_mode<synchronous>, transform_indices = @transform_4, window_bounds = array<i64: 1, 512>}, {pipeline_mode = #tpu.pipeline_mode<synchronous>, transform_indices = @transform_5, window_bounds = array<i64: 512, 512>}, {pipeline_mode = #tpu.pipeline_mode<synchronous>, transform_indices = @transform_6, window_bounds = array<i64: 1, 512>}, {pipeline_mode = #tpu.pipeline_mode<synchronous>, transform_indices = @transform_7, window_bounds = array<i64: 512, 784>}, {pipeline_mode = #tpu.pipeline_mode<synchronous>, transform_indices = @transform_8, window_bounds = array<i64: 1, 784>}, {transform_indices = @transform_9, window_bounds = array<i64: 16, 784>}]} {
    %c0 = arith.constant 0 : index
    %c0_0 = arith.constant 0 : index
    %0 = vector.load %arg1[%c0, %c0_0] : memref<16x16xf32, #tpu.memory_space<vmem>>, vector<16x16xf32>
    %1 = arith.truncf %0 : vector<16x16xf32> to vector<16x16xbf16>
    %c0_1 = arith.constant 0 : index
    %c0_2 = arith.constant 0 : index
    %2 = vector.load %arg2[%c0_1, %c0_2] : memref<16x512xbf16, #tpu.memory_space<vmem>>, vector<16x512xbf16>
    %cst = arith.constant dense<0.000000e+00> : vector<16x512xf32>
    %3 = tpu.matmul %1, %2, %cst {dimension_numbers = #tpu.dot_dimension_numbers<[1], [0], [0], [1], [0, 0, 1, 1], [], []>} : vector<16x16xbf16>, vector<16x512xbf16>, vector<16x512xf32> -> vector<16x512xf32>
    %c0_3 = arith.constant 0 : index
    %c0_4 = arith.constant 0 : index
    %4 = vector.load %arg3[%c0_3, %c0_4] : memref<1x512xf32, #tpu.memory_space<vmem>>, vector<1x512xf32>
    %5 = vector.broadcast %4 : vector<1x512xf32> to vector<16x512xf32>
    %6 = arith.addf %3, %5 : vector<16x512xf32>
    %7 = arith.negf %6 : vector<16x512xf32>
    %8 = math.exp %7 : vector<16x512xf32>
    %cst_5 = arith.constant 1.000000e+00 : f32
    %9 = vector.broadcast %cst_5 : f32 to vector<16x512xf32>
    %10 = arith.addf %9, %8 : vector<16x512xf32>
    %11 = arith.divf %9, %10 : vector<16x512xf32>
    %12 = arith.mulf %6, %11 : vector<16x512xf32>
    %13 = arith.truncf %12 : vector<16x512xf32> to vector<16x512xbf16>
    %c0_6 = arith.constant 0 : index
    %c0_7 = arith.constant 0 : index
    %14 = vector.load %arg4[%c0_6, %c0_7] : memref<512x512xbf16, #tpu.memory_space<vmem>>, vector<512x512xbf16>
    %cst_8 = arith.constant dense<0.000000e+00> : vector<16x512xf32>
    %15 = tpu.matmul %13, %14, %cst_8 {dimension_numbers = #tpu.dot_dimension_numbers<[1], [0], [0], [1], [0, 0, 1, 1], [], []>} : vector<16x512xbf16>, vector<512x512xbf16>, vector<16x512xf32> -> vector<16x512xf32>
    %c0_9 = arith.constant 0 : index
    %c0_10 = arith.constant 0 : index
    %16 = vector.load %arg5[%c0_9, %c0_10] : memref<1x512xf32, #tpu.memory_space<vmem>>, vector<1x512xf32>
    %17 = vector.broadcast %16 : vector<1x512xf32> to vector<16x512xf32>
    %18 = arith.addf %15, %17 : vector<16x512xf32>
    %19 = arith.negf %18 : vector<16x512xf32>
    %20 = math.exp %19 : vector<16x512xf32>
    %cst_11 = arith.constant 1.000000e+00 : f32
    %21 = vector.broadcast %cst_11 : f32 to vector<16x512xf32>
    %22 = arith.addf %21, %20 : vector<16x512xf32>
    %23 = arith.divf %21, %22 : vector<16x512xf32>
    %24 = arith.mulf %18, %23 : vector<16x512xf32>
    %25 = arith.truncf %24 : vector<16x512xf32> to vector<16x512xbf16>
    %c0_12 = arith.constant 0 : index
    %c0_13 = arith.constant 0 : index
    %26 = vector.load %arg6[%c0_12, %c0_13] : memref<512x512xbf16, #tpu.memory_space<vmem>>, vector<512x512xbf16>
    %cst_14 = arith.constant dense<0.000000e+00> : vector<16x512xf32>
    %27 = tpu.matmul %25, %26, %cst_14 {dimension_numbers = #tpu.dot_dimension_numbers<[1], [0], [0], [1], [0, 0, 1, 1], [], []>} : vector<16x512xbf16>, vector<512x512xbf16>, vector<16x512xf32> -> vector<16x512xf32>
    %c0_15 = arith.constant 0 : index
    %c0_16 = arith.constant 0 : index
    %28 = vector.load %arg7[%c0_15, %c0_16] : memref<1x512xf32, #tpu.memory_space<vmem>>, vector<1x512xf32>
    %29 = vector.broadcast %28 : vector<1x512xf32> to vector<16x512xf32>
    %30 = arith.addf %27, %29 : vector<16x512xf32>
    %31 = arith.negf %30 : vector<16x512xf32>
    %32 = math.exp %31 : vector<16x512xf32>
    %cst_17 = arith.constant 1.000000e+00 : f32
    %33 = vector.broadcast %cst_17 : f32 to vector<16x512xf32>
    %34 = arith.addf %33, %32 : vector<16x512xf32>
    %35 = arith.divf %33, %34 : vector<16x512xf32>
    %36 = arith.mulf %30, %35 : vector<16x512xf32>
    %37 = arith.truncf %36 : vector<16x512xf32> to vector<16x512xbf16>
    %c0_18 = arith.constant 0 : index
    %c0_19 = arith.constant 0 : index
    %38 = vector.load %arg8[%c0_18, %c0_19] : memref<512x784xbf16, #tpu.memory_space<vmem>>, vector<512x784xbf16>
    %cst_20 = arith.constant dense<0.000000e+00> : vector<16x784xf32>
    %39 = tpu.matmul %37, %38, %cst_20 {dimension_numbers = #tpu.dot_dimension_numbers<[1], [0], [0], [1], [0, 0, 1, 1], [], []>} : vector<16x512xbf16>, vector<512x784xbf16>, vector<16x784xf32> -> vector<16x784xf32>
    %c0_21 = arith.constant 0 : index
    %c0_22 = arith.constant 0 : index
    %40 = vector.load %arg9[%c0_21, %c0_22] : memref<1x784xf32, #tpu.memory_space<vmem>>, vector<1x784xf32>
    %41 = vector.broadcast %40 : vector<1x784xf32> to vector<16x784xf32>
    %42 = arith.addf %39, %41 : vector<16x784xf32>
    %43 = arith.truncf %42 : vector<16x784xf32> to vector<16x784xbf16>
    %c0_23 = arith.constant 0 : index
    %c0_24 = arith.constant 0 : index
    %44 = vector.load %arg10[%c0_23, %c0_24] : memref<16x784xbf16, #tpu.memory_space<vmem>>, vector<16x784xbf16>
    tpu.vector_store %arg10[%c0_23, %c0_24], %43 {strides = array<i32>} : memref<16x784xbf16, #tpu.memory_space<vmem>>, vector<16x784xbf16>,
    return
  }
  func.func @transform_0(%arg0: i32) -> (i32, i32) {
    %c0_i32 = arith.constant 0 : i32
    %c0_i32_0 = arith.constant 0 : i32
    return %arg0, %c0_i32 : i32, i32
  }
  func.func @transform_1(%arg0: i32) -> (i32, i32) {
    %c0_i32 = arith.constant 0 : i32
    %c0_i32_0 = arith.constant 0 : i32
    %c0_i32_1 = arith.constant 0 : i32
    return %c0_i32, %c0_i32_0 : i32, i32
  }
  func.func @transform_2(%arg0: i32) -> (i32, i32) {
    %c0_i32 = arith.constant 0 : i32
    %c0_i32_0 = arith.constant 0 : i32
    %c0_i32_1 = arith.constant 0 : i32
    return %c0_i32, %c0_i32_0 : i32, i32
  }
  func.func @transform_3(%arg0: i32) -> (i32, i32) {
    %c0_i32 = arith.constant 0 : i32
    %c0_i32_0 = arith.constant 0 : i32
    %c0_i32_1 = arith.constant 0 : i32
    return %c0_i32, %c0_i32_0 : i32, i32
  }
  func.func @transform_4(%arg0: i32) -> (i32, i32) {
    %c0_i32 = arith.constant 0 : i32
    %c0_i32_0 = arith.constant 0 : i32
    %c0_i32_1 = arith.constant 0 : i32
    return %c0_i32, %c0_i32_0 : i32, i32
  }
  func.func @transform_5(%arg0: i32) -> (i32, i32) {
    %c0_i32 = arith.constant 0 : i32
    %c0_i32_0 = arith.constant 0 : i32
    %c0_i32_1 = arith.constant 0 : i32
    return %c0_i32, %c0_i32_0 : i32, i32
  }
  func.func @transform_6(%arg0: i32) -> (i32, i32) {
    %c0_i32 = arith.constant 0 : i32
    %c0_i32_0 = arith.constant 0 : i32
    %c0_i32_1 = arith.constant 0 : i32
    return %c0_i32, %c0_i32_0 : i32, i32
  }
  func.func @transform_7(%arg0: i32) -> (i32, i32) {
    %c0_i32 = arith.constant 0 : i32
    %c0_i32_0 = arith.constant 0 : i32
    %c0_i32_1 = arith.constant 0 : i32
    return %c0_i32, %c0_i32_0 : i32, i32
  }
  func.func @transform_8(%arg0: i32) -> (i32, i32) {
    %c0_i32 = arith.constant 0 : i32
    %c0_i32_0 = arith.constant 0 : i32
    %c0_i32_1 = arith.constant 0 : i32
    return %c0_i32, %c0_i32_0 : i32, i32
  }
  func.func @transform_9(%arg0: i32) -> (i32, i32) {
    %c0_i32 = arith.constant 0 : i32
    %c0_i32_0 = arith.constant 0 : i32
    return %arg0, %c0_i32 : i32, i32
  }
}

</mosaic_0001>

<llo_original>
// kernel: tpu_custom_call.1
$region0: #{tpu_custom_call.1}
  #allocation0 [shape = 'u32[]', space=smem, size = 0x4, offset = 0x4, fixed_abs, tag = 'smem constant byte address 0x4 - core index']
  #allocation1 [shape = 'u32[144,128]{1,0:T(1,128)}', space=vmem, size = 0x12000, scoped, tag = 'internal scratch']
  %s0 = inlined_call_operand.vmem [shape: f32[16,16], index: 0, kind: input, shape index: {}]
  %s1 = inlined_call_operand.vmem [shape: bf16[16,512], index: 1, kind: input, shape index: {}]
  %s2 = inlined_call_operand.vmem [shape: f32[1,512], index: 2, kind: input, shape index: {}]
  %s3 = inlined_call_operand.vmem [shape: bf16[512,512], index: 3, kind: input, shape index: {}]
  %s4 = inlined_call_operand.vmem [shape: f32[1,512], index: 4, kind: input, shape index: {}]
  %s5 = inlined_call_operand.vmem [shape: bf16[512,512], index: 5, kind: input, shape index: {}]
  %s6 = inlined_call_operand.vmem [shape: f32[1,512], index: 6, kind: input, shape index: {}]
  %s7 = inlined_call_operand.vmem [shape: bf16[512,784], index: 7, kind: input, shape index: {}]
  %s8 = inlined_call_operand.vmem [shape: f32[1,784], index: 8, kind: input, shape index: {}]
  %s9 = inlined_call_operand.hbm [shape: bf16[16,784], index: 9, kind: output, shape index: {}]
  %s10 = sld [smem:[#allocation0]]
  $region46: #{tpu_custom_call.1} parent=0
    _
  %s12 = ssub.s32 1, %s10
  %s13 = scalar_select 0, %s12, %s10
  $region1: #{tpu_custom_call.1} parent=0
    #allocation2 [shape = 'u8[28672]{0}', space=vmem, size = 0x7000, scoped, tag = 'output window, operand 0, single buffered']
    #allocation3 [shape = 's32[1]{0}', space=sflag, size = 0x4, scoped, tag = 'scoped memory for tpu_custom_call.1']
    %14 = vsyncpa [#allocation3], 0
    // Predicated region
    $region2: #{tpu_custom_call.1} parent=1 // pred_check
      _
    $region3: #{tpu_custom_call.1} parent=1 // pred_check_branch
      %16 = sbr.rel (0) target = $region5
    $region4: #{tpu_custom_call.1} parent=1 // pred_region
      _
    $region5: #{tpu_custom_call.1} parent=1 // pred_fallthru
      _
    // Predicated region
    $region6: #{tpu_custom_call.1} parent=1 // pred_check
      _
    $region7: #{tpu_custom_call.1} parent=1 // pred_check_branch
      %18 = sbr.rel (0) target = $region9
    $region8: #{tpu_custom_call.1} parent=1 // pred_region
      _
    $region9: #{tpu_custom_call.1} parent=1 // pred_fallthru
      _
    // Predicated region
    $region10: #{tpu_custom_call.1} parent=1 // pred_check
      _
    $region11: #{tpu_custom_call.1} parent=1 // pred_check_branch
      %20 = sbr.rel (0) target = $region13
    $region12: #{tpu_custom_call.1} parent=1 // pred_region
      _
    $region13: #{tpu_custom_call.1} parent=1 // pred_fallthru
      _
    // Predicated region
    $region14: #{tpu_custom_call.1} parent=1 // pred_check
      _
    $region15: #{tpu_custom_call.1} parent=1 // pred_check_branch
      %22 = sbr.rel (0) target = $region17
    $region16: #{tpu_custom_call.1} parent=1 // pred_region
      _
    $region17: #{tpu_custom_call.1} parent=1 // pred_fallthru
      _
    // Predicated region
    $region18: #{tpu_custom_call.1} parent=1 // pred_check
      _
    $region19: #{tpu_custom_call.1} parent=1 // pred_check_branch
      %24 = sbr.rel (0) target = $region21
    $region20: #{tpu_custom_call.1} parent=1 // pred_region
      _
    $region21: #{tpu_custom_call.1} parent=1 // pred_fallthru
      _
    // Predicated region
    $region22: #{tpu_custom_call.1} parent=1 // pred_check
      _
    $region23: #{tpu_custom_call.1} parent=1 // pred_check_branch
      %26 = sbr.rel (0) target = $region25
    $region24: #{tpu_custom_call.1} parent=1 // pred_region
      _
    $region25: #{tpu_custom_call.1} parent=1 // pred_fallthru
      _
    // Predicated region
    $region26: #{tpu_custom_call.1} parent=1 // pred_check
      _
    $region27: #{tpu_custom_call.1} parent=1 // pred_check_branch
      %28 = sbr.rel (0) target = $region29
    $region28: #{tpu_custom_call.1} parent=1 // pred_region
      _
    $region29: #{tpu_custom_call.1} parent=1 // pred_fallthru
      _
    // Predicated region
    $region30: #{tpu_custom_call.1} parent=1 // pred_check
      _
    $region31: #{tpu_custom_call.1} parent=1 // pred_check_branch
      %30 = sbr.rel (0) target = $region33
    $region32: #{tpu_custom_call.1} parent=1 // pred_region
      _
    $region33: #{tpu_custom_call.1} parent=1 // pred_fallthru
      _
    // Predicated region
    $region34: #{tpu_custom_call.1} parent=1 // pred_check
      _
    $region35: #{tpu_custom_call.1} parent=1 // pred_check_branch
      %32 = sbr.rel (0) target = $region37
    $region36: #{tpu_custom_call.1} parent=1 // pred_region
      _
    $region37: #{tpu_custom_call.1} parent=1 // pred_fallthru
      _
    %v34 = vld [vmem:[%s0] sm:$0xff]
    %v35 = vld [vmem:[%s0 + $0x8] sm:$0xff]
    %v36 = vpack.c.bf16 %v35, %v34
    %v37 = vld [vmem:[%s1] sm:$0xff]
    %v38 = vld [vmem:[%s1 + $0x8] sm:$0xff]
    %v39 = vld [vmem:[%s1 + $0x10] sm:$0xff]
    %v40 = vld [vmem:[%s1 + $0x18] sm:$0xff]
    %v41 = vld [vmem:[%s2] sm:$0xf]
    %v43 = vlaneseq
    %v44 = vshrl.u32 %v43, 7
    %v45 = vsub.s32 0, %v44
    %v46 = vrot.slane %v41, %v45
    %v47 = vlaneseq
    %v48 = vshrl.u32 %v47, 7
    %v49 = vsub.s32 1, %v48
    %v50 = vrot.slane %v41, %v49
    %v51 = vlaneseq
    %v52 = vshrl.u32 %v51, 7
    %v53 = vsub.s32 2, %v52
    %v54 = vrot.slane %v41, %v53
    %v55 = vlaneseq
    %v56 = vshrl.u32 %v55, 7
    %v57 = vsub.s32 3, %v56
    %v58 = vrot.slane %v41, %v57
    %v67 = vunpack.c.l.b16 %v37
    %v68 = vunpack.c.h.b16 %v37
    %v69 = vunpack.c.l.b16 %v38
    %v70 = vunpack.c.h.b16 %v38
    %v71 = vunpack.c.l.b16 %v39
    %v72 = vunpack.c.h.b16 %v39
    %v73 = vunpack.c.l.b16 %v40
    %v74 = vunpack.c.h.b16 %v40
    %v75 = vpack.c.b16 %v71, %v67
    %v76 = vpack.c.b16 %v72, %v68
    %v77 = vpack.c.b16 %v73, %v69
    %v78 = vpack.c.b16 %v74, %v70
    %vm83 = vcmask 130048
    %v85 = vsel %vm83, %v36, 0
    %87 = vmatprep.subr.bf16.mxu0 %v76
    %88 = vmatpush1.bf16.msra.mxu0 %v75
    %89 = vmatprep.subr.bf16.mxu0 0
    %90 = vmatpush1.bf16.msra.mxu0 0
    %91 = vmatprep.subr.bf16.mxu0 0
    %92 = vmatpush1.bf16.msra.mxu0 0
    %93 = vmatprep.subr.bf16.mxu0 0
    %94 = vmatpush1.bf16.msra.mxu0 0
    %95 = vmatprep.subr.bf16.mxu0 0
    %96 = vmatpush1.bf16.msra.mxu0 0
    %97 = vmatprep.subr.bf16.mxu0 0
    %98 = vmatpush1.bf16.msra.mxu0 0
    %99 = vmatprep.subr.bf16.mxu0 0
    %100 = vmatpush1.bf16.msra.mxu0 0
    %101 = vmatprep.subr.bf16.mxu0 0
    %102 = vmatpush1.bf16.msra.mxu0 0
    %103 = vmatprep.subr.bf16.mxu0 0
    %104 = vmatpush1.bf16.msra.mxu0 0
    %105 = vmatprep.subr.bf16.mxu0 0
    %106 = vmatpush1.bf16.msra.mxu0 0
    %107 = vmatprep.subr.bf16.mxu0 0
    %108 = vmatpush1.bf16.msra.mxu0 0
    %109 = vmatprep.subr.bf16.mxu0 0
    %110 = vmatpush1.bf16.msra.mxu0 0
    %111 = vmatprep.subr.bf16.mxu0 0
    %112 = vmatpush1.bf16.msra.mxu0 0
    %113 = vmatprep.subr.bf16.mxu0 0
    %114 = vmatpush1.bf16.msra.mxu0 0
    %115 = vmatprep.subr.bf16.mxu0 0
    %116 = vmatpush1.bf16.msra.mxu0 0
    %117 = vmatprep.subr.bf16.mxu0 0
    %118 = vmatpush1.bf16.msra.mxu0 0
    %119 = vmatprep.mubr.bf16.mxu0 0
    %120 = vmatmul.mubr.bf16.gmra.mrb[0].mxu0 %v85
    %v121 = vpop.f32.mrb[0].mxu0
    %v122 = vadd.f32 %v46, %v121
    %v123 = vpop.f32.mrb[0].mxu0
    %v124 = vadd.f32 %v50, %v123
    %v125 = vpop.f32.mrb[0].mxu0
    %v126 = vadd.f32 %v46, %v125
    %v127 = vpop.f32.mrb[0].mxu0
    %v128 = vadd.f32 %v50, %v127
    %129 = vdwg.mxu0
    %130 = vmatprep.subr.bf16.mxu0 %v78
    %131 = vmatpush1.bf16.msra.mxu0 %v77
    %132 = vmatprep.subr.bf16.mxu0 0
    %133 = vmatpush1.bf16.msra.mxu0 0
    %134 = vmatprep.subr.bf16.mxu0 0
    %135 = vmatpush1.bf16.msra.mxu0 0
    %136 = vmatprep.subr.bf16.mxu0 0
    %137 = vmatpush1.bf16.msra.mxu0 0
    %138 = vmatprep.subr.bf16.mxu0 0
    %139 = vmatpush1.bf16.msra.mxu0 0
    %140 = vmatprep.subr.bf16.mxu0 0
    %141 = vmatpush1.bf16.msra.mxu0 0
    %142 = vmatprep.subr.bf16.mxu0 0
    %143 = vmatpush1.bf16.msra.mxu0 0
    %144 = vmatprep.subr.bf16.mxu0 0
    %145 = vmatpush1.bf16.msra.mxu0 0
    %146 = vmatprep.subr.bf16.mxu0 0
    %147 = vmatpush1.bf16.msra.mxu0 0
    %148 = vmatprep.subr.bf16.mxu0 0
    %149 = vmatpush1.bf16.msra.mxu0 0
    %150 = vmatprep.subr.bf16.mxu0 0
    %151 = vmatpush1.bf16.msra.mxu0 0
    %152 = vmatprep.subr.bf16.mxu0 0
    %153 = vmatpush1.bf16.msra.mxu0 0
    %154 = vmatprep.subr.bf16.mxu0 0
    %155 = vmatpush1.bf16.msra.mxu0 0
    %156 = vmatprep.subr.bf16.mxu0 0
    %157 = vmatpush1.bf16.msra.mxu0 0
    %158 = vmatprep.subr.bf16.mxu0 0
    %159 = vmatpush1.bf16.msra.mxu0 0
    %160 = vmatprep.subr.bf16.mxu0 0
    %161 = vmatpush1.bf16.msra.mxu0 0
    %162 = vmatprep.mubr.bf16.mxu0 0
    %163 = vmatmul.mubr.bf16.gmra.mrb[0].mxu0 %v85
    %v164 = vpop.f32.mrb[0].mxu0
    %v165 = vadd.f32 %v54, %v164
    %v166 = vpop.f32.mrb[0].mxu0
    %v167 = vadd.f32 %v58, %v166
    %v168 = vpop.f32.mrb[0].mxu0
    %v169 = vadd.f32 %v54, %v168
    %v170 = vpop.f32.mrb[0].mxu0
    %v171 = vadd.f32 %v58, %v170
    %172 = vdwg.mxu0
    %v173 = vxor.u32 %v122, 2147483648
    %v174 = vxor.u32 %v124, 2147483648
    %v175 = vxor.u32 %v165, 2147483648
    %v176 = vxor.u32 %v167, 2147483648
    %v177 = vxor.u32 %v126, 2147483648
    %v178 = vxor.u32 %v128, 2147483648
    %v179 = vxor.u32 %v169, 2147483648
    %v180 = vxor.u32 %v171, 2147483648
    %v181 = vmul.f32 %v173, 1.442695
    %v182 = vpow.pop %v181
    %v183 = vmul.f32 %v174, 1.442695
    %v184 = vpow.pop %v183
    %v185 = vmul.f32 %v175, 1.442695
    %v186 = vpow.pop %v185
    %v187 = vmul.f32 %v176, 1.442695
    %v188 = vpow.pop %v187
    %v189 = vmul.f32 %v177, 1.442695
    %v190 = vpow.pop %v189
    %v191 = vmul.f32 %v178, 1.442695
    %v192 = vpow.pop %v191
    %v193 = vmul.f32 %v179, 1.442695
    %v194 = vpow.pop %v193
    %v195 = vmul.f32 %v180, 1.442695
    %v196 = vpow.pop %v195
    %v197 = vadd.f32 %v182, 1.0
    %v198 = vadd.f32 %v184, 1.0
    %v199 = vadd.f32 %v186, 1.0
    %v200 = vadd.f32 %v188, 1.0
    %v201 = vadd.f32 %v190, 1.0
    %v202 = vadd.f32 %v192, 1.0
    %v203 = vadd.f32 %v194, 1.0
    %v204 = vadd.f32 %v196, 1.0
    %v205 = vrcp.pop %v197
    %v206 = vmul.f32 1.0, %v205
    %v207 = vrcp.pop %v198
    %v208 = vmul.f32 1.0, %v207
    %v209 = vrcp.pop %v199
    %v210 = vmul.f32 1.0, %v209
    %v211 = vrcp.pop %v200
    %v212 = vmul.f32 1.0, %v211
    %v213 = vrcp.pop %v201
    %v214 = vmul.f32 1.0, %v213
    %v215 = vrcp.pop %v202
    %v216 = vmul.f32 1.0, %v215
    %v217 = vrcp.pop %v203
    %v218 = vmul.f32 1.0, %v217
    %v219 = vrcp.pop %v204
    %v220 = vmul.f32 1.0, %v219
    %v221 = vmul.f32 %v122, %v206
    %v222 = vmul.f32 %v124, %v208
    %v223 = vmul.f32 %v165, %v210
    %v224 = vmul.f32 %v167, %v212
    %v225 = vmul.f32 %v126, %v214
    %v226 = vmul.f32 %v128, %v216
    %v227 = vmul.f32 %v169, %v218
    %v228 = vmul.f32 %v171, %v220
    %v229 = vpack.c.bf16 %v225, %v221
    %v230 = vpack.c.bf16 %v226, %v222
    %v231 = vpack.c.bf16 %v227, %v223
    %v232 = vpack.c.bf16 %v228, %v224
    %v233 = vld [vmem:[%s3] sm:$0xff]
    %v234 = vld [vmem:[%s3 + $0x8] sm:$0xff]
    %v235 = vld [vmem:[%s3 + $0x10] sm:$0xff]
    %v236 = vld [vmem:[%s3 + $0x18] sm:$0xff]
    %v237 = vld [vmem:[%s3 + $0x20] sm:$0xff]
    %v238 = vld [vmem:[%s3 + $0x28] sm:$0xff]
    %v239 = vld [vmem:[%s3 + $0x30] sm:$0xff]
    %v240 = vld [vmem:[%s3 + $0x38] sm:$0xff]
    %v241 = vld [vmem:[%s3 + $0x40] sm:$0xff]
    %v242 = vld [vmem:[%s3 + $0x48] sm:$0xff]
    %v243 = vld [vmem:[%s3 + $0x50] sm:$0xff]
    %v244 = vld [vmem:[%s3 + $0x58] sm:$0xff]
    %v245 = vld [vmem:[%s3 + $0x60] sm:$0xff]
    %v246 = vld [vmem:[%s3 + $0x68] sm:$0xff]
    %v247 = vld [vmem:[%s3 + $0x70] sm:$0xff]
    %v248 = vld [vmem:[%s3 + $0x78] sm:$0xff]
    %v249 = vld [vmem:[%s3 + $0x80] sm:$0xff]
    %v250 = vld [vmem:[%s3 + $0x88] sm:$0xff]
    %v251 = vld [vmem:[%s3 + $0x90] sm:$0xff]
    %v252 = vld [vmem:[%s3 + $0x98] sm:$0xff]
    %v253 = vld [vmem:[%s3 + $0xa0] sm:$0xff]
    %v254 = vld [vmem:[%s3 + $0xa8] sm:$0xff]
    %v255 = vld [vmem:[%s3 + $0xb0] sm:$0xff]
    %v256 = vld [vmem:[%s3 + $0xb8] sm:$0xff]
    %v257 = vld [vmem:[%s3 + $0xc0] sm:$0xff]
    %v258 = vld [vmem:[%s3 + $0xc8] sm:$0xff]
    %v259 = vld [vmem:[%s3 + $0xd0] sm:$0xff]
    %v260 = vld [vmem:[%s3 + $0xd8] sm:$0xff]
    %v261 = vld [vmem:[%s3 + $0xe0] sm:$0xff]
    %v262 = vld [vmem:[%s3 + $0xe8] sm:$0xff]
    %v263 = vld [vmem:[%s3 + $0xf0] sm:$0xff]
    %v264 = vld [vmem:[%s3 + $0xf8] sm:$0xff]
    %v265 = vld [vmem:[%s3 + $0x100] sm:$0xff]
    %v266 = vld [vmem:[%s3 + $0x108] sm:$0xff]
    %v267 = vld [vmem:[%s3 + $0x110] sm:$0xff]
    %v268 = vld [vmem:[%s3 + $0x118] sm:$0xff]
    %v269 = vld [vmem:[%s3 + $0x120] sm:$0xff]
    %v270 = vld [vmem:[%s3 + $0x128] sm:$0xff]
    %v271 = vld [vmem:[%s3 + $0x130] sm:$0xff]
    %v272 = vld [vmem:[%s3 + $0x138] sm:$0xff]
    %v273 = vld [vmem:[%s3 + $0x140] sm:$0xff]
    %v274 = vld [vmem:[%s3 + $0x148] sm:$0xff]
    %v275 = vld [vmem:[%s3 + $0x150] sm:$0xff]
    %v276 = vld [vmem:[%s3 + $0x158] sm:$0xff]
    %v277 = vld [vmem:[%s3 + $0x160] sm:$0xff]
    %v278 = vld [vmem:[%s3 + $0x168] sm:$0xff]
    %v279 = vld [vmem:[%s3 + $0x170] sm:$0xff]
    %v280 = vld [vmem:[%s3 + $0x178] sm:$0xff]
    %v281 = vld [vmem:[%s3 + $0x180] sm:$0xff]
    %v282 = vld [vmem:[%s3 + $0x188] sm:$0xff]
    %v283 = vld [vmem:[%s3 + $0x190] sm:$0xff]
    %v284 = vld [vmem:[%s3 + $0x198] sm:$0xff]
    %v285 = vld [vmem:[%s3 + $0x1a0] sm:$0xff]
    %v286 = vld [vmem:[%s3 + $0x1a8] sm:$0xff]
    %v287 = vld [vmem:[%s3 + $0x1b0] sm:$0xff]
    %v288 = vld [vmem:[%s3 + $0x1b8] sm:$0xff]
    %v289 = vld [vmem:[%s3 + $0x1c0] sm:$0xff]
    %v290 = vld [vmem:[%s3 + $0x1c8] sm:$0xff]
    %v291 = vld [vmem:[%s3 + $0x1d0] sm:$0xff]
    %v292 = vld [vmem:[%s3 + $0x1d8] sm:$0xff]
    %v293 = vld [vmem:[%s3 + $0x1e0] sm:$0xff]
    %v294 = vld [vmem:[%s3 + $0x1e8] sm:$0xff]
    %v295 = vld [vmem:[%s3 + $0x1f0] sm:$0xff]
    %v296 = vld [vmem:[%s3 + $0x1f8] sm:$0xff]
    %v297 = vld [vmem:[%s3 + $0x200] sm:$0xff]
    %v298 = vld [vmem:[%s3 + $0x208] sm:$0xff]
    %v299 = vld [vmem:[%s3 + $0x210] sm:$0xff]
    %v300 = vld [vmem:[%s3 + $0x218] sm:$0xff]
    %v301 = vld [vmem:[%s3 + $0x220] sm:$0xff]
    %v302 = vld [vmem:[%s3 + $0x228] sm:$0xff]
    %v303 = vld [vmem:[%s3 + $0x230] sm:$0xff]
    %v304 = vld [vmem:[%s3 + $0x238] sm:$0xff]
    %v305 = vld [vmem:[%s3 + $0x240] sm:$0xff]
    %v306 = vld [vmem:[%s3 + $0x248] sm:$0xff]
    %v307 = vld [vmem:[%s3 + $0x250] sm:$0xff]
    %v308 = vld [vmem:[%s3 + $0x258] sm:$0xff]
    %v309 = vld [vmem:[%s3 + $0x260] sm:$0xff]
    %v310 = vld [vmem:[%s3 + $0x268] sm:$0xff]
    %v311 = vld [vmem:[%s3 + $0x270] sm:$0xff]
    %v312 = vld [vmem:[%s3 + $0x278] sm:$0xff]
    %v313 = vld [vmem:[%s3 + $0x280] sm:$0xff]
    %v314 = vld [vmem:[%s3 + $0x288] sm:$0xff]
    %v315 = vld [vmem:[%s3 + $0x290] sm:$0xff]
    %v316 = vld [vmem:[%s3 + $0x298] sm:$0xff]
    %v317 = vld [vmem:[%s3 + $0x2a0] sm:$0xff]
    %v318 = vld [vmem:[%s3 + $0x2a8] sm:$0xff]
    %v319 = vld [vmem:[%s3 + $0x2b0] sm:$0xff]
    %v320 = vld [vmem:[%s3 + $0x2b8] sm:$0xff]
    %v321 = vld [vmem:[%s3 + $0x2c0] sm:$0xff]
    %v322 = vld [vmem:[%s3 + $0x2c8] sm:$0xff]
    %v323 = vld [vmem:[%s3 + $0x2d0] sm:$0xff]
    %v324 = vld [vmem:[%s3 + $0x2d8] sm:$0xff]
    %v325 = vld [vmem:[%s3 + $0x2e0] sm:$0xff]
    %v326 = vld [vmem:[%s3 + $0x2e8] sm:$0xff]
    %v327 = vld [vmem:[%s3 + $0x2f0] sm:$0xff]
    %v328 = vld [vmem:[%s3 + $0x2f8] sm:$0xff]
    %v329 = vld [vmem:[%s3 + $0x300] sm:$0xff]
    %v330 = vld [vmem:[%s3 + $0x308] sm:$0xff]
    %v331 = vld [vmem:[%s3 + $0x310] sm:$0xff]
    %v332 = vld [vmem:[%s3 + $0x318] sm:$0xff]
    %v333 = vld [vmem:[%s3 + $0x320] sm:$0xff]
    %v334 = vld [vmem:[%s3 + $0x328] sm:$0xff]
    %v335 = vld [vmem:[%s3 + $0x330] sm:$0xff]
    %v336 = vld [vmem:[%s3 + $0x338] sm:$0xff]
    %v337 = vld [vmem:[%s3 + $0x340] sm:$0xff]
    %v338 = vld [vmem:[%s3 + $0x348] sm:$0xff]
    %v339 = vld [vmem:[%s3 + $0x350] sm:$0xff]
    %v340 = vld [vmem:[%s3 + $0x358] sm:$0xff]
    %v341 = vld [vmem:[%s3 + $0x360] sm:$0xff]
    %v342 = vld [vmem:[%s3 + $0x368] sm:$0xff]
    %v343 = vld [vmem:[%s3 + $0x370] sm:$0xff]
    %v344 = vld [vmem:[%s3 + $0x378] sm:$0xff]
    %v345 = vld [vmem:[%s3 + $0x380] sm:$0xff]
    %v346 = vld [vmem:[%s3 + $0x388] sm:$0xff]
    %v347 = vld [vmem:[%s3 + $0x390] sm:$0xff]
    %v348 = vld [vmem:[%s3 + $0x398] sm:$0xff]
    %v349 = vld [vmem:[%s3 + $0x3a0] sm:$0xff]
    %v350 = vld [vmem:[%s3 + $0x3a8] sm:$0xff]
    %v351 = vld [vmem:[%s3 + $0x3b0] sm:$0xff]
    %v352 = vld [vmem:[%s3 + $0x3b8] sm:$0xff]
    %v353 = vld [vmem:[%s3 + $0x3c0] sm:$0xff]
    %v354 = vld [vmem:[%s3 + $0x3c8] sm:$0xff]
    %v355 = vld [vmem:[%s3 + $0x3d0] sm:$0xff]
    %v356 = vld [vmem:[%s3 + $0x3d8] sm:$0xff]
    %v357 = vld [vmem:[%s3 + $0x3e0] sm:$0xff]
    %v358 = vld [vmem:[%s3 + $0x3e8] sm:$0xff]
    %v359 = vld [vmem:[%s3 + $0x3f0] sm:$0xff]
    %v360 = vld [vmem:[%s3 + $0x3f8] sm:$0xff]
    %v361 = vld [vmem:[%s4] sm:$0xf]
    %v363 = vlaneseq
    %v364 = vshrl.u32 %v363, 7
    %v365 = vsub.s32 0, %v364
    %v366 = vrot.slane %v361, %v365
    %v367 = vlaneseq
    %v368 = vshrl.u32 %v367, 7
    %v369 = vsub.s32 1, %v368
    %v370 = vrot.slane %v361, %v369
    %v371 = vlaneseq
    %v372 = vshrl.u32 %v371, 7
    %v373 = vsub.s32 2, %v372
    %v374 = vrot.slane %v361, %v373
    %v375 = vlaneseq
    %v376 = vshrl.u32 %v375, 7
    %v377 = vsub.s32 3, %v376
    %v378 = vrot.slane %v361, %v377
    %v511 = vunpack.c.l.b16 %v233
    %v512 = vunpack.c.h.b16 %v233
    %v513 = vunpack.c.l.b16 %v234
    %v514 = vunpack.c.h.b16 %v234
    %v515 = vunpack.c.l.b16 %v235
    %v516 = vunpack.c.h.b16 %v235
    %v517 = vunpack.c.l.b16 %v236
    %v518 = vunpack.c.h.b16 %v236
    %v519 = vunpack.c.l.b16 %v237
    %v520 = vunpack.c.h.b16 %v237
    %v521 = vunpack.c.l.b16 %v238
    %v522 = vunpack.c.h.b16 %v238
    %v523 = vunpack.c.l.b16 %v239
    %v524 = vunpack.c.h.b16 %v239
    %v525 = vunpack.c.l.b16 %v240
    %v526 = vunpack.c.h.b16 %v240
    %v527 = vunpack.c.l.b16 %v241
    %v528 = vunpack.c.h.b16 %v241
    %v529 = vunpack.c.l.b16 %v242
    %v530 = vunpack.c.h.b16 %v242
    %v531 = vunpack.c.l.b16 %v243
    %v532 = vunpack.c.h.b16 %v243
    %v533 = vunpack.c.l.b16 %v244
    %v534 = vunpack.c.h.b16 %v244
    %v535 = vunpack.c.l.b16 %v245
    %v536 = vunpack.c.h.b16 %v245
    %v537 = vunpack.c.l.b16 %v246
    %v538 = vunpack.c.h.b16 %v246
    %v539 = vunpack.c.l.b16 %v247
    %v540 = vunpack.c.h.b16 %v247
    %v541 = vunpack.c.l.b16 %v248
    %v542 = vunpack.c.h.b16 %v248
    %v543 = vunpack.c.l.b16 %v249
    %v544 = vunpack.c.h.b16 %v249
    %v545 = vunpack.c.l.b16 %v250
    %v546 = vunpack.c.h.b16 %v250
    %v547 = vunpack.c.l.b16 %v251
    %v548 = vunpack.c.h.b16 %v251
    %v549 = vunpack.c.l.b16 %v252
    %v550 = vunpack.c.h.b16 %v252
    %v551 = vunpack.c.l.b16 %v253
    %v552 = vunpack.c.h.b16 %v253
    %v553 = vunpack.c.l.b16 %v254
    %v554 = vunpack.c.h.b16 %v254
    %v555 = vunpack.c.l.b16 %v255
    %v556 = vunpack.c.h.b16 %v255
    %v557 = vunpack.c.l.b16 %v256
    %v558 = vunpack.c.h.b16 %v256
    %v559 = vunpack.c.l.b16 %v257
    %v560 = vunpack.c.h.b16 %v257
    %v561 = vunpack.c.l.b16 %v258
    %v562 = vunpack.c.h.b16 %v258
    %v563 = vunpack.c.l.b16 %v259
    %v564 = vunpack.c.h.b16 %v259
    %v565 = vunpack.c.l.b16 %v260
    %v566 = vunpack.c.h.b16 %v260
    %v567 = vunpack.c.l.b16 %v261
    %v568 = vunpack.c.h.b16 %v261
    %v569 = vunpack.c.l.b16 %v262
    %v570 = vunpack.c.h.b16 %v262
    %v571 = vunpack.c.l.b16 %v263
    %v572 = vunpack.c.h.b16 %v263
    %v573 = vunpack.c.l.b16 %v264
    %v574 = vunpack.c.h.b16 %v264
    %v575 = vunpack.c.l.b16 %v265
    %v576 = vunpack.c.h.b16 %v265
    %v577 = vunpack.c.l.b16 %v266
    %v578 = vunpack.c.h.b16 %v266
    %v579 = vunpack.c.l.b16 %v267
    %v580 = vunpack.c.h.b16 %v267
    %v581 = vunpack.c.l.b16 %v268
    %v582 = vunpack.c.h.b16 %v268
    %v583 = vunpack.c.l.b16 %v269
    %v584 = vunpack.c.h.b16 %v269
    %v585 = vunpack.c.l.b16 %v270
    %v586 = vunpack.c.h.b16 %v270
    %v587 = vunpack.c.l.b16 %v271
    %v588 = vunpack.c.h.b16 %v271
    %v589 = vunpack.c.l.b16 %v272
    %v590 = vunpack.c.h.b16 %v272
    %v591 = vunpack.c.l.b16 %v273
    %v592 = vunpack.c.h.b16 %v273
    %v593 = vunpack.c.l.b16 %v274
    %v594 = vunpack.c.h.b16 %v274
    %v595 = vunpack.c.l.b16 %v275
    %v596 = vunpack.c.h.b16 %v275
    %v597 = vunpack.c.l.b16 %v276
    %v598 = vunpack.c.h.b16 %v276
    %v599 = vunpack.c.l.b16 %v277
    %v600 = vunpack.c.h.b16 %v277
    %v601 = vunpack.c.l.b16 %v278
    %v602 = vunpack.c.h.b16 %v278
    %v603 = vunpack.c.l.b16 %v279
    %v604 = vunpack.c.h.b16 %v279
    %v605 = vunpack.c.l.b16 %v280
    %v606 = vunpack.c.h.b16 %v280
    %v607 = vunpack.c.l.b16 %v281
    %v608 = vunpack.c.h.b16 %v281
    %v609 = vunpack.c.l.b16 %v282
    %v610 = vunpack.c.h.b16 %v282
    %v611 = vunpack.c.l.b16 %v283
    %v612 = vunpack.c.h.b16 %v283
    %v613 = vunpack.c.l.b16 %v284
    %v614 = vunpack.c.h.b16 %v284
    %v615 = vunpack.c.l.b16 %v285
    %v616 = vunpack.c.h.b16 %v285
    %v617 = vunpack.c.l.b16 %v286
    %v618 = vunpack.c.h.b16 %v286
    %v619 = vunpack.c.l.b16 %v287
    %v620 = vunpack.c.h.b16 %v287
    %v621 = vunpack.c.l.b16 %v288
    %v622 = vunpack.c.h.b16 %v288
    %v623 = vunpack.c.l.b16 %v289
    %v624 = vunpack.c.h.b16 %v289
    %v625 = vunpack.c.l.b16 %v290
    %v626 = vunpack.c.h.b16 %v290
    %v627 = vunpack.c.l.b16 %v291
    %v628 = vunpack.c.h.b16 %v291
    %v629 = vunpack.c.l.b16 %v292
    %v630 = vunpack.c.h.b16 %v292
    %v631 = vunpack.c.l.b16 %v293
    %v632 = vunpack.c.h.b16 %v293
    %v633 = vunpack.c.l.b16 %v294
    %v634 = vunpack.c.h.b16 %v294
    %v635 = vunpack.c.l.b16 %v295
    %v636 = vunpack.c.h.b16 %v295
    %v637 = vunpack.c.l.b16 %v296
    %v638 = vunpack.c.h.b16 %v296
    %v639 = vunpack.c.l.b16 %v297
    %v640 = vunpack.c.h.b16 %v297
    %v641 = vunpack.c.l.b16 %v298
    %v642 = vunpack.c.h.b16 %v298
    %v643 = vunpack.c.l.b16 %v299
    %v644 = vunpack.c.h.b16 %v299
    %v645 = vunpack.c.l.b16 %v300
    %v646 = vunpack.c.h.b16 %v300
    %v647 = vunpack.c.l.b16 %v301
    %v648 = vunpack.c.h.b16 %v301
    %v649 = vunpack.c.l.b16 %v302
    %v650 = vunpack.c.h.b16 %v302
    %v651 = vunpack.c.l.b16 %v303
    %v652 = vunpack.c.h.b16 %v303
    %v653 = vunpack.c.l.b16 %v304
    %v654 = vunpack.c.h.b16 %v304
    %v655 = vunpack.c.l.b16 %v305
    %v656 = vunpack.c.h.b16 %v305
    %v657 = vunpack.c.l.b16 %v306
    %v658 = vunpack.c.h.b16 %v306
    %v659 = vunpack.c.l.b16 %v307
    %v660 = vunpack.c.h.b16 %v307
    %v661 = vunpack.c.l.b16 %v308
    %v662 = vunpack.c.h.b16 %v308
    %v663 = vunpack.c.l.b16 %v309
    %v664 = vunpack.c.h.b16 %v309
    %v665 = vunpack.c.l.b16 %v310
    %v666 = vunpack.c.h.b16 %v310
    %v667 = vunpack.c.l.b16 %v311
    %v668 = vunpack.c.h.b16 %v311
    %v669 = vunpack.c.l.b16 %v312
    %v670 = vunpack.c.h.b16 %v312
    %v671 = vunpack.c.l.b16 %v313
    %v672 = vunpack.c.h.b16 %v313
    %v673 = vunpack.c.l.b16 %v314
    %v674 = vunpack.c.h.b16 %v314
    %v675 = vunpack.c.l.b16 %v315
    %v676 = vunpack.c.h.b16 %v315
    %v677 = vunpack.c.l.b16 %v316
    %v678 = vunpack.c.h.b16 %v316
    %v679 = vunpack.c.l.b16 %v317
    %v680 = vunpack.c.h.b16 %v317
    %v681 = vunpack.c.l.b16 %v318
    %v682 = vunpack.c.h.b16 %v318
    %v683 = vunpack.c.l.b16 %v319
    %v684 = vunpack.c.h.b16 %v319
    %v685 = vunpack.c.l.b16 %v320
    %v686 = vunpack.c.h.b16 %v320
    %v687 = vunpack.c.l.b16 %v321
    %v688 = vunpack.c.h.b16 %v321
    %v689 = vunpack.c.l.b16 %v322
    %v690 = vunpack.c.h.b16 %v322
    %v691 = vunpack.c.l.b16 %v323
    %v692 = vunpack.c.h.b16 %v323
    %v693 = vunpack.c.l.b16 %v324
    %v694 = vunpack.c.h.b16 %v324
    %v695 = vunpack.c.l.b16 %v325
    %v696 = vunpack.c.h.b16 %v325
    %v697 = vunpack.c.l.b16 %v326
    %v698 = vunpack.c.h.b16 %v326
    %v699 = vunpack.c.l.b16 %v327
    %v700 = vunpack.c.h.b16 %v327
    %v701 = vunpack.c.l.b16 %v328
    %v702 = vunpack.c.h.b16 %v328
    %v703 = vunpack.c.l.b16 %v329
    %v704 = vunpack.c.h.b16 %v329
    %v705 = vunpack.c.l.b16 %v330
    %v706 = vunpack.c.h.b16 %v330
    %v707 = vunpack.c.l.b16 %v331
    %v708 = vunpack.c.h.b16 %v331
    %v709 = vunpack.c.l.b16 %v332
    %v710 = vunpack.c.h.b16 %v332
    %v711 = vunpack.c.l.b16 %v333
    %v712 = vunpack.c.h.b16 %v333
    %v713 = vunpack.c.l.b16 %v334
    %v714 = vunpack.c.h.b16 %v334
    %v715 = vunpack.c.l.b16 %v335
    %v716 = vunpack.c.h.b16 %v335
    %v717 = vunpack.c.l.b16 %v336
    %v718 = vunpack.c.h.b16 %v336
    %v719 = vunpack.c.l.b16 %v337
    %v720 = vunpack.c.h.b16 %v337
    %v721 = vunpack.c.l.b16 %v338
    %v722 = vunpack.c.h.b16 %v338
    %v723 = vunpack.c.l.b16 %v339
    %v724 = vunpack.c.h.b16 %v339
    %v725 = vunpack.c.l.b16 %v340
    %v726 = vunpack.c.h.b16 %v340
    %v727 = vunpack.c.l.b16 %v341
    %v728 = vunpack.c.h.b16 %v341
    %v729 = vunpack.c.l.b16 %v342
    %v730 = vunpack.c.h.b16 %v342
    %v731 = vunpack.c.l.b16 %v343
    %v732 = vunpack.c.h.b16 %v343
    %v733 = vunpack.c.l.b16 %v344
    %v734 = vunpack.c.h.b16 %v344
    %v735 = vunpack.c.l.b16 %v345
    %v736 = vunpack.c.h.b16 %v345
    %v737 = vunpack.c.l.b16 %v346
    %v738 = vunpack.c.h.b16 %v346
    %v739 = vunpack.c.l.b16 %v347
    %v740 = vunpack.c.h.b16 %v347
    %v741 = vunpack.c.l.b16 %v348
    %v742 = vunpack.c.h.b16 %v348
    %v743 = vunpack.c.l.b16 %v349
    %v744 = vunpack.c.h.b16 %v349
    %v745 = vunpack.c.l.b16 %v350
    %v746 = vunpack.c.h.b16 %v350
    %v747 = vunpack.c.l.b16 %v351
    %v748 = vunpack.c.h.b16 %v351
    %v749 = vunpack.c.l.b16 %v352
    %v750 = vunpack.c.h.b16 %v352
    %v751 = vunpack.c.l.b16 %v353
    %v752 = vunpack.c.h.b16 %v353
    %v753 = vunpack.c.l.b16 %v354
    %v754 = vunpack.c.h.b16 %v354
    %v755 = vunpack.c.l.b16 %v355
    %v756 = vunpack.c.h.b16 %v355
    %v757 = vunpack.c.l.b16 %v356
    %v758 = vunpack.c.h.b16 %v356
    %v759 = vunpack.c.l.b16 %v357
    %v760 = vunpack.c.h.b16 %v357
    %v761 = vunpack.c.l.b16 %v358
    %v762 = vunpack.c.h.b16 %v358
    %v763 = vunpack.c.l.b16 %v359
    %v764 = vunpack.c.h.b16 %v359
    %v765 = vunpack.c.l.b16 %v360
    %v766 = vunpack.c.h.b16 %v360
    %v767 = vpack.c.b16 %v515, %v511
    %v768 = vpack.c.b16 %v516, %v512
    %v769 = vpack.c.b16 %v517, %v513
    %v770 = vpack.c.b16 %v518, %v514
    %v771 = vpack.c.b16 %v523, %v519
    %v772 = vpack.c.b16 %v524, %v520
    %v773 = vpack.c.b16 %v525, %v521
    %v774 = vpack.c.b16 %v526, %v522
    %v775 = vpack.c.b16 %v531, %v527
    %v776 = vpack.c.b16 %v532, %v528
    %v777 = vpack.c.b16 %v533, %v529
    %v778 = vpack.c.b16 %v534, %v530
    %v779 = vpack.c.b16 %v539, %v535
    %v780 = vpack.c.b16 %v540, %v536
    %v781 = vpack.c.b16 %v541, %v537
    %v782 = vpack.c.b16 %v542, %v538
    %v783 = vpack.c.b16 %v547, %v543
    %v784 = vpack.c.b16 %v548, %v544
    %v785 = vpack.c.b16 %v549, %v545
    %v786 = vpack.c.b16 %v550, %v546
    %v787 = vpack.c.b16 %v555, %v551
    %v788 = vpack.c.b16 %v556, %v552
    %v789 = vpack.c.b16 %v557, %v553
    %v790 = vpack.c.b16 %v558, %v554
    %v791 = vpack.c.b16 %v563, %v559
    %v792 = vpack.c.b16 %v564, %v560
    %v793 = vpack.c.b16 %v565, %v561
    %v794 = vpack.c.b16 %v566, %v562
    %v795 = vpack.c.b16 %v571, %v567
    %v796 = vpack.c.b16 %v572, %v568
    %v797 = vpack.c.b16 %v573, %v569
    %v798 = vpack.c.b16 %v574, %v570
    %v799 = vpack.c.b16 %v579, %v575
    %v800 = vpack.c.b16 %v580, %v576
    %v801 = vpack.c.b16 %v581, %v577
    %v802 = vpack.c.b16 %v582, %v578
    %v803 = vpack.c.b16 %v587, %v583
    %v804 = vpack.c.b16 %v588, %v584
    %v805 = vpack.c.b16 %v589, %v585
    %v806 = vpack.c.b16 %v590, %v586
    %v807 = vpack.c.b16 %v595, %v591
    %v808 = vpack.c.b16 %v596, %v592
    %v809 = vpack.c.b16 %v597, %v593
    %v810 = vpack.c.b16 %v598, %v594
    %v811 = vpack.c.b16 %v603, %v599
    %v812 = vpack.c.b16 %v604, %v600
    %v813 = vpack.c.b16 %v605, %v601
    %v814 = vpack.c.b16 %v606, %v602
    %v815 = vpack.c.b16 %v611, %v607
    %v816 = vpack.c.b16 %v612, %v608
    %v817 = vpack.c.b16 %v613, %v609
    %v818 = vpack.c.b16 %v614, %v610
    %v819 = vpack.c.b16 %v619, %v615
    %v820 = vpack.c.b16 %v620, %v616
    %v821 = vpack.c.b16 %v621, %v617
    %v822 = vpack.c.b16 %v622, %v618
    %v823 = vpack.c.b16 %v627, %v623
    %v824 = vpack.c.b16 %v628, %v624
    %v825 = vpack.c.b16 %v629, %v625
    %v826 = vpack.c.b16 %v630, %v626
    %v827 = vpack.c.b16 %v635, %v631
    %v828 = vpack.c.b16 %v636, %v632
    %v829 = vpack.c.b16 %v637, %v633
    %v830 = vpack.c.b16 %v638, %v634
    %v831 = vpack.c.b16 %v643, %v639
    %v832 = vpack.c.b16 %v644, %v640
    %v833 = vpack.c.b16 %v645, %v641
    %v834 = vpack.c.b16 %v646, %v642
    %v835 = vpack.c.b16 %v651, %v647
    %v836 = vpack.c.b16 %v652, %v648
    %v837 = vpack.c.b16 %v653, %v649
    %v838 = vpack.c.b16 %v654, %v650
    %v839 = vpack.c.b16 %v659, %v655
    %v840 = vpack.c.b16 %v660, %v656
    %v841 = vpack.c.b16 %v661, %v657
    %v842 = vpack.c.b16 %v662, %v658
    %v843 = vpack.c.b16 %v667, %v663
    %v844 = vpack.c.b16 %v668, %v664
    %v845 = vpack.c.b16 %v669, %v665
    %v846 = vpack.c.b16 %v670, %v666
    %v847 = vpack.c.b16 %v675, %v671
    %v848 = vpack.c.b16 %v676, %v672
    %v849 = vpack.c.b16 %v677, %v673
    %v850 = vpack.c.b16 %v678, %v674
    %v851 = vpack.c.b16 %v683, %v679
    %v852 = vpack.c.b16 %v684, %v680
    %v853 = vpack.c.b16 %v685, %v681
    %v854 = vpack.c.b16 %v686, %v682
    %v855 = vpack.c.b16 %v691, %v687
    %v856 = vpack.c.b16 %v692, %v688
    %v857 = vpack.c.b16 %v693, %v689
    %v858 = vpack.c.b16 %v694, %v690
    %v859 = vpack.c.b16 %v699, %v695
    %v860 = vpack.c.b16 %v700, %v696
    %v861 = vpack.c.b16 %v701, %v697
    %v862 = vpack.c.b16 %v702, %v698
    %v863 = vpack.c.b16 %v707, %v703
    %v864 = vpack.c.b16 %v708, %v704
    %v865 = vpack.c.b16 %v709, %v705
    %v866 = vpack.c.b16 %v710, %v706
    %v867 = vpack.c.b16 %v715, %v711
    %v868 = vpack.c.b16 %v716, %v712
    %v869 = vpack.c.b16 %v717, %v713
    %v870 = vpack.c.b16 %v718, %v714
    %v871 = vpack.c.b16 %v723, %v719
    %v872 = vpack.c.b16 %v724, %v720
    %v873 = vpack.c.b16 %v725, %v721
    %v874 = vpack.c.b16 %v726, %v722
    %v875 = vpack.c.b16 %v731, %v727
    %v876 = vpack.c.b16 %v732, %v728
    %v877 = vpack.c.b16 %v733, %v729
    %v878 = vpack.c.b16 %v734, %v730
    %v879 = vpack.c.b16 %v739, %v735
    %v880 = vpack.c.b16 %v740, %v736
    %v881 = vpack.c.b16 %v741, %v737
    %v882 = vpack.c.b16 %v742, %v738
    %v883 = vpack.c.b16 %v747, %v743
    %v884 = vpack.c.b16 %v748, %v744
    %v885 = vpack.c.b16 %v749, %v745
    %v886 = vpack.c.b16 %v750, %v746
    %v887 = vpack.c.b16 %v755, %v751
    %v888 = vpack.c.b16 %v756, %v752
    %v889 = vpack.c.b16 %v757, %v753
    %v890 = vpack.c.b16 %v758, %v754
    %v891 = vpack.c.b16 %v763, %v759
    %v892 = vpack.c.b16 %v764, %v760
    %v893 = vpack.c.b16 %v765, %v761
    %v894 = vpack.c.b16 %v766, %v762
    %1023 = vmatprep.subr.bf16.mxu0 %v768
    %1024 = vmatpush1.bf16.msra.mxu0 %v767
    %1025 = vmatprep.subr.bf16.mxu0 %v772
    %1026 = vmatpush1.bf16.msra.mxu0 %v771
    %1027 = vmatprep.subr.bf16.mxu0 %v776
    %1028 = vmatpush1.bf16.msra.mxu0 %v775
    %1029 = vmatprep.subr.bf16.mxu0 %v780
    %1030 = vmatpush1.bf16.msra.mxu0 %v779
    %1031 = vmatprep.subr.bf16.mxu0 %v784
    %1032 = vmatpush1.bf16.msra.mxu0 %v783
    %1033 = vmatprep.subr.bf16.mxu0 %v788
    %1034 = vmatpush1.bf16.msra.mxu0 %v787
    %1035 = vmatprep.subr.bf16.mxu0 %v792
    %1036 = vmatpush1.bf16.msra.mxu0 %v791
    %1037 = vmatprep.subr.bf16.mxu0 %v796
    %1038 = vmatpush1.bf16.msra.mxu0 %v795
    %1039 = vmatprep.subr.bf16.mxu0 %v800
    %1040 = vmatpush1.bf16.msra.mxu0 %v799
    %1041 = vmatprep.subr.bf16.mxu0 %v804
    %1042 = vmatpush1.bf16.msra.mxu0 %v803
    %1043 = vmatprep.subr.bf16.mxu0 %v808
    %1044 = vmatpush1.bf16.msra.mxu0 %v807
    %1045 = vmatprep.subr.bf16.mxu0 %v812
    %1046 = vmatpush1.bf16.msra.mxu0 %v811
    %1047 = vmatprep.subr.bf16.mxu0 %v816
    %1048 = vmatpush1.bf16.msra.mxu0 %v815
    %1049 = vmatprep.subr.bf16.mxu0 %v820
    %1050 = vmatpush1.bf16.msra.mxu0 %v819
    %1051 = vmatprep.subr.bf16.mxu0 %v824
    %1052 = vmatpush1.bf16.msra.mxu0 %v823
    %1053 = vmatprep.subr.bf16.mxu0 %v828
    %1054 = vmatpush1.bf16.msra.mxu0 %v827
    %1055 = vmatprep.mubr.bf16.mxu0 %v230
    %1056 = vmatmul.mubr.bf16.gmra.mrb[0].mxu0 %v229
    %v1057 = vpop.f32.mrb[0].mxu0
    %v1058 = vadd.f32 %v366, %v1057
    %v1059 = vpop.f32.mrb[0].mxu0
    %v1060 = vadd.f32 %v370, %v1059
    %v1061 = vpop.f32.mrb[0].mxu0
    %v1062 = vadd.f32 %v366, %v1061
    %v1063 = vpop.f32.mrb[0].mxu0
    %v1064 = vadd.f32 %v370, %v1063
    %1065 = vdwg.mxu0
    %1066 = vmatprep.subr.bf16.mxu0 %v832
    %1067 = vmatpush1.bf16.msra.mxu0 %v831
    %1068 = vmatprep.subr.bf16.mxu0 %v836
    %1069 = vmatpush1.bf16.msra.mxu0 %v835
    %1070 = vmatprep.subr.bf16.mxu0 %v840
    %1071 = vmatpush1.bf16.msra.mxu0 %v839
    %1072 = vmatprep.subr.bf16.mxu0 %v844
    %1073 = vmatpush1.bf16.msra.mxu0 %v843
    %1074 = vmatprep.subr.bf16.mxu0 %v848
    %1075 = vmatpush1.bf16.msra.mxu0 %v847
    %1076 = vmatprep.subr.bf16.mxu0 %v852
    %1077 = vmatpush1.bf16.msra.mxu0 %v851
    %1078 = vmatprep.subr.bf16.mxu0 %v856
    %1079 = vmatpush1.bf16.msra.mxu0 %v855
    %1080 = vmatprep.subr.bf16.mxu0 %v860
    %1081 = vmatpush1.bf16.msra.mxu0 %v859
    %1082 = vmatprep.subr.bf16.mxu0 %v864
    %1083 = vmatpush1.bf16.msra.mxu0 %v863
    %1084 = vmatprep.subr.bf16.mxu0 %v868
    %1085 = vmatpush1.bf16.msra.mxu0 %v867
    %1086 = vmatprep.subr.bf16.mxu0 %v872
    %1087 = vmatpush1.bf16.msra.mxu0 %v871
    %1088 = vmatprep.subr.bf16.mxu0 %v876
    %1089 = vmatpush1.bf16.msra.mxu0 %v875
    %1090 = vmatprep.subr.bf16.mxu0 %v880
    %1091 = vmatpush1.bf16.msra.mxu0 %v879
    %1092 = vmatprep.subr.bf16.mxu0 %v884
    %1093 = vmatpush1.bf16.msra.mxu0 %v883
    %1094 = vmatprep.subr.bf16.mxu0 %v888
    %1095 = vmatpush1.bf16.msra.mxu0 %v887
    %1096 = vmatprep.subr.bf16.mxu0 %v892
    %1097 = vmatpush1.bf16.msra.mxu0 %v891
    %1098 = vmatprep.mubr.bf16.mxu0 %v232
    %1099 = vmatmul.mubr.bf16.gmra.mrb[0].mxu0 %v231
    %v1100 = vpop.f32.mrb[0].mxu0
    %v1101 = vadd.f32 %v1058, %v1100
    %v1102 = vpop.f32.mrb[0].mxu0
    %v1103 = vadd.f32 %v1060, %v1102
    %v1104 = vpop.f32.mrb[0].mxu0
    %v1105 = vadd.f32 %v1062, %v1104
    %v1106 = vpop.f32.mrb[0].mxu0
    %v1107 = vadd.f32 %v1064, %v1106
    %1108 = vdwg.mxu0
    %1109 = vmatprep.subr.bf16.mxu0 %v770
    %1110 = vmatpush1.bf16.msra.mxu0 %v769
    %1111 = vmatprep.subr.bf16.mxu0 %v774
    %1112 = vmatpush1.bf16.msra.mxu0 %v773
    %1113 = vmatprep.subr.bf16.mxu0 %v778
    %1114 = vmatpush1.bf16.msra.mxu0 %v777
    %1115 = vmatprep.subr.bf16.mxu0 %v782
    %1116 = vmatpush1.bf16.msra.mxu0 %v781
    %1117 = vmatprep.subr.bf16.mxu0 %v786
    %1118 = vmatpush1.bf16.msra.mxu0 %v785
    %1119 = vmatprep.subr.bf16.mxu0 %v790
    %1120 = vmatpush1.bf16.msra.mxu0 %v789
    %1121 = vmatprep.subr.bf16.mxu0 %v794
    %1122 = vmatpush1.bf16.msra.mxu0 %v793
    %1123 = vmatprep.subr.bf16.mxu0 %v798
    %1124 = vmatpush1.bf16.msra.mxu0 %v797
    %1125 = vmatprep.subr.bf16.mxu0 %v802
    %1126 = vmatpush1.bf16.msra.mxu0 %v801
    %1127 = vmatprep.subr.bf16.mxu0 %v806
    %1128 = vmatpush1.bf16.msra.mxu0 %v805
    %1129 = vmatprep.subr.bf16.mxu0 %v810
    %1130 = vmatpush1.bf16.msra.mxu0 %v809
    %1131 = vmatprep.subr.bf16.mxu0 %v814
    %1132 = vmatpush1.bf16.msra.mxu0 %v813
    %1133 = vmatprep.subr.bf16.mxu0 %v818
    %1134 = vmatpush1.bf16.msra.mxu0 %v817
    %1135 = vmatprep.subr.bf16.mxu0 %v822
    %1136 = vmatpush1.bf16.msra.mxu0 %v821
    %1137 = vmatprep.subr.bf16.mxu0 %v826
    %1138 = vmatpush1.bf16.msra.mxu0 %v825
    %1139 = vmatprep.subr.bf16.mxu0 %v830
    %1140 = vmatpush1.bf16.msra.mxu0 %v829
    %1141 = vmatprep.mubr.bf16.mxu0 %v230
    %1142 = vmatmul.mubr.bf16.gmra.mrb[0].mxu0 %v229
    %v1143 = vpop.f32.mrb[0].mxu0
    %v1144 = vadd.f32 %v374, %v1143
    %v1145 = vpop.f32.mrb[0].mxu0
    %v1146 = vadd.f32 %v378, %v1145
    %v1147 = vpop.f32.mrb[0].mxu0
    %v1148 = vadd.f32 %v374, %v1147
    %v1149 = vpop.f32.mrb[0].mxu0
    %v1150 = vadd.f32 %v378, %v1149
    %1151 = vdwg.mxu0
    %1152 = vmatprep.subr.bf16.mxu0 %v834
    %1153 = vmatpush1.bf16.msra.mxu0 %v833
    %1154 = vmatprep.subr.bf16.mxu0 %v838
    %1155 = vmatpush1.bf16.msra.mxu0 %v837
    %1156 = vmatprep.subr.bf16.mxu0 %v842
    %1157 = vmatpush1.bf16.msra.mxu0 %v841
    %1158 = vmatprep.subr.bf16.mxu0 %v846
    %1159 = vmatpush1.bf16.msra.mxu0 %v845
    %1160 = vmatprep.subr.bf16.mxu0 %v850
    %1161 = vmatpush1.bf16.msra.mxu0 %v849
    %1162 = vmatprep.subr.bf16.mxu0 %v854
    %1163 = vmatpush1.bf16.msra.mxu0 %v853
    %1164 = vmatprep.subr.bf16.mxu0 %v858
    %1165 = vmatpush1.bf16.msra.mxu0 %v857
    %1166 = vmatprep.subr.bf16.mxu0 %v862
    %1167 = vmatpush1.bf16.msra.mxu0 %v861
    %1168 = vmatprep.subr.bf16.mxu0 %v866
    %1169 = vmatpush1.bf16.msra.mxu0 %v865
    %1170 = vmatprep.subr.bf16.mxu0 %v870
    %1171 = vmatpush1.bf16.msra.mxu0 %v869
    %1172 = vmatprep.subr.bf16.mxu0 %v874
    %1173 = vmatpush1.bf16.msra.mxu0 %v873
    %1174 = vmatprep.subr.bf16.mxu0 %v878
    %1175 = vmatpush1.bf16.msra.mxu0 %v877
    %1176 = vmatprep.subr.bf16.mxu0 %v882
    %1177 = vmatpush1.bf16.msra.mxu0 %v881
    %1178 = vmatprep.subr.bf16.mxu0 %v886
    %1179 = vmatpush1.bf16.msra.mxu0 %v885
    %1180 = vmatprep.subr.bf16.mxu0 %v890
    %1181 = vmatpush1.bf16.msra.mxu0 %v889
    %1182 = vmatprep.subr.bf16.mxu0 %v894
    %1183 = vmatpush1.bf16.msra.mxu0 %v893
    %1184 = vmatprep.mubr.bf16.mxu0 %v232
    %1185 = vmatmul.mubr.bf16.gmra.mrb[0].mxu0 %v231
    %v1186 = vpop.f32.mrb[0].mxu0
    %v1187 = vadd.f32 %v1144, %v1186
    %v1188 = vpop.f32.mrb[0].mxu0
    %v1189 = vadd.f32 %v1146, %v1188
    %v1190 = vpop.f32.mrb[0].mxu0
    %v1191 = vadd.f32 %v1148, %v1190
    %v1192 = vpop.f32.mrb[0].mxu0
    %v1193 = vadd.f32 %v1150, %v1192
    %1194 = vdwg.mxu0
    %v1195 = vxor.u32 %v1101, 2147483648
    %v1196 = vxor.u32 %v1103, 2147483648
    %v1197 = vxor.u32 %v1187, 2147483648
    %v1198 = vxor.u32 %v1189, 2147483648
    %v1199 = vxor.u32 %v1105, 2147483648
    %v1200 = vxor.u32 %v1107, 2147483648
    %v1201 = vxor.u32 %v1191, 2147483648
    %v1202 = vxor.u32 %v1193, 2147483648
    %v1203 = vmul.f32 %v1195, 1.442695
    %v1204 = vpow.pop %v1203
    %v1205 = vmul.f32 %v1196, 1.442695
    %v1206 = vpow.pop %v1205
    %v1207 = vmul.f32 %v1197, 1.442695
    %v1208 = vpow.pop %v1207
    %v1209 = vmul.f32 %v1198, 1.442695
    %v1210 = vpow.pop %v1209
    %v1211 = vmul.f32 %v1199, 1.442695
    %v1212 = vpow.pop %v1211
    %v1213 = vmul.f32 %v1200, 1.442695
    %v1214 = vpow.pop %v1213
    %v1215 = vmul.f32 %v1201, 1.442695
    %v1216 = vpow.pop %v1215
    %v1217 = vmul.f32 %v1202, 1.442695
    %v1218 = vpow.pop %v1217
    %v1219 = vadd.f32 %v1204, 1.0
    %v1220 = vadd.f32 %v1206, 1.0
    %v1221 = vadd.f32 %v1208, 1.0
    %v1222 = vadd.f32 %v1210, 1.0
    %v1223 = vadd.f32 %v1212, 1.0
    %v1224 = vadd.f32 %v1214, 1.0
    %v1225 = vadd.f32 %v1216, 1.0
    %v1226 = vadd.f32 %v1218, 1.0
    %v1227 = vrcp.pop %v1219
    %v1228 = vmul.f32 1.0, %v1227
    %v1229 = vrcp.pop %v1220
    %v1230 = vmul.f32 1.0, %v1229
    %v1231 = vrcp.pop %v1221
    %v1232 = vmul.f32 1.0, %v1231
    %v1233 = vrcp.pop %v1222
    %v1234 = vmul.f32 1.0, %v1233
    %v1235 = vrcp.pop %v1223
    %v1236 = vmul.f32 1.0, %v1235
    %v1237 = vrcp.pop %v1224
    %v1238 = vmul.f32 1.0, %v1237
    %v1239 = vrcp.pop %v1225
    %v1240 = vmul.f32 1.0, %v1239
    %v1241 = vrcp.pop %v1226
    %v1242 = vmul.f32 1.0, %v1241
    %v1243 = vmul.f32 %v1101, %v1228
    %v1244 = vmul.f32 %v1103, %v1230
    %v1245 = vmul.f32 %v1187, %v1232
    %v1246 = vmul.f32 %v1189, %v1234
    %v1247 = vmul.f32 %v1105, %v1236
    %v1248 = vmul.f32 %v1107, %v1238
    %v1249 = vmul.f32 %v1191, %v1240
    %v1250 = vmul.f32 %v1193, %v1242
    %v1251 = vpack.c.bf16 %v1247, %v1243
    %v1252 = vpack.c.bf16 %v1248, %v1244
    %v1253 = vpack.c.bf16 %v1249, %v1245
    %v1254 = vpack.c.bf16 %v1250, %v1246
    %v1255 = vld [vmem:[%s5] sm:$0xff]
    %v1256 = vld [vmem:[%s5 + $0x8] sm:$0xff]
    %v1257 = vld [vmem:[%s5 + $0x10] sm:$0xff]
    %v1258 = vld [vmem:[%s5 + $0x18] sm:$0xff]
    %v1259 = vld [vmem:[%s5 + $0x20] sm:$0xff]
    %v1260 = vld [vmem:[%s5 + $0x28] sm:$0xff]
    %v1261 = vld [vmem:[%s5 + $0x30] sm:$0xff]
    %v1262 = vld [vmem:[%s5 + $0x38] sm:$0xff]
    %v1263 = vld [vmem:[%s5 + $0x40] sm:$0xff]
    %v1264 = vld [vmem:[%s5 + $0x48] sm:$0xff]
    %v1265 = vld [vmem:[%s5 + $0x50] sm:$0xff]
    %v1266 = vld [vmem:[%s5 + $0x58] sm:$0xff]
    %v1267 = vld [vmem:[%s5 + $0x60] sm:$0xff]
    %v1268 = vld [vmem:[%s5 + $0x68] sm:$0xff]
    %v1269 = vld [vmem:[%s5 + $0x70] sm:$0xff]
    %v1270 = vld [vmem:[%s5 + $0x78] sm:$0xff]
    %v1271 = vld [vmem:[%s5 + $0x80] sm:$0xff]
    %v1272 = vld [vmem:[%s5 + $0x88] sm:$0xff]
    %v1273 = vld [vmem:[%s5 + $0x90] sm:$0xff]
    %v1274 = vld [vmem:[%s5 + $0x98] sm:$0xff]
    %v1275 = vld [vmem:[%s5 + $0xa0] sm:$0xff]
    %v1276 = vld [vmem:[%s5 + $0xa8] sm:$0xff]
    %v1277 = vld [vmem:[%s5 + $0xb0] sm:$0xff]
    %v1278 = vld [vmem:[%s5 + $0xb8] sm:$0xff]
    %v1279 = vld [vmem:[%s5 + $0xc0] sm:$0xff]
    %v1280 = vld [vmem:[%s5 + $0xc8] sm:$0xff]
    %v1281 = vld [vmem:[%s5 + $0xd0] sm:$0xff]
    %v1282 = vld [vmem:[%s5 + $0xd8] sm:$0xff]
    %v1283 = vld [vmem:[%s5 + $0xe0] sm:$0xff]
    %v1284 = vld [vmem:[%s5 + $0xe8] sm:$0xff]
    %v1285 = vld [vmem:[%s5 + $0xf0] sm:$0xff]
    %v1286 = vld [vmem:[%s5 + $0xf8] sm:$0xff]
    %v1287 = vld [vmem:[%s5 + $0x100] sm:$0xff]
    %v1288 = vld [vmem:[%s5 + $0x108] sm:$0xff]
    %v1289 = vld [vmem:[%s5 + $0x110] sm:$0xff]
    %v1290 = vld [vmem:[%s5 + $0x118] sm:$0xff]
    %v1291 = vld [vmem:[%s5 + $0x120] sm:$0xff]
    %v1292 = vld [vmem:[%s5 + $0x128] sm:$0xff]
    %v1293 = vld [vmem:[%s5 + $0x130] sm:$0xff]
    %v1294 = vld [vmem:[%s5 + $0x138] sm:$0xff]
    %v1295 = vld [vmem:[%s5 + $0x140] sm:$0xff]
    %v1296 = vld [vmem:[%s5 + $0x148] sm:$0xff]
    %v1297 = vld [vmem:[%s5 + $0x150] sm:$0xff]
    %v1298 = vld [vmem:[%s5 + $0x158] sm:$0xff]
    %v1299 = vld [vmem:[%s5 + $0x160] sm:$0xff]
    %v1300 = vld [vmem:[%s5 + $0x168] sm:$0xff]
    %v1301 = vld [vmem:[%s5 + $0x170] sm:$0xff]
    %v1302 = vld [vmem:[%s5 + $0x178] sm:$0xff]
    %v1303 = vld [vmem:[%s5 + $0x180] sm:$0xff]
    %v1304 = vld [vmem:[%s5 + $0x188] sm:$0xff]
    %v1305 = vld [vmem:[%s5 + $0x190] sm:$0xff]
    %v1306 = vld [vmem:[%s5 + $0x198] sm:$0xff]
    %v1307 = vld [vmem:[%s5 + $0x1a0] sm:$0xff]
    %v1308 = vld [vmem:[%s5 + $0x1a8] sm:$0xff]
    %v1309 = vld [vmem:[%s5 + $0x1b0] sm:$0xff]
    %v1310 = vld [vmem:[%s5 + $0x1b8] sm:$0xff]
    %v1311 = vld [vmem:[%s5 + $0x1c0] sm:$0xff]
    %v1312 = vld [vmem:[%s5 + $0x1c8] sm:$0xff]
    %v1313 = vld [vmem:[%s5 + $0x1d0] sm:$0xff]
    %v1314 = vld [vmem:[%s5 + $0x1d8] sm:$0xff]
    %v1315 = vld [vmem:[%s5 + $0x1e0] sm:$0xff]
    %v1316 = vld [vmem:[%s5 + $0x1e8] sm:$0xff]
    %v1317 = vld [vmem:[%s5 + $0x1f0] sm:$0xff]
    %v1318 = vld [vmem:[%s5 + $0x1f8] sm:$0xff]
    %v1319 = vld [vmem:[%s5 + $0x200] sm:$0xff]
    %v1320 = vld [vmem:[%s5 + $0x208] sm:$0xff]
    %v1321 = vld [vmem:[%s5 + $0x210] sm:$0xff]
    %v1322 = vld [vmem:[%s5 + $0x218] sm:$0xff]
    %v1323 = vld [vmem:[%s5 + $0x220] sm:$0xff]
    %v1324 = vld [vmem:[%s5 + $0x228] sm:$0xff]
    %v1325 = vld [vmem:[%s5 + $0x230] sm:$0xff]
    %v1326 = vld [vmem:[%s5 + $0x238] sm:$0xff]
    %v1327 = vld [vmem:[%s5 + $0x240] sm:$0xff]
    %v1328 = vld [vmem:[%s5 + $0x248] sm:$0xff]
    %v1329 = vld [vmem:[%s5 + $0x250] sm:$0xff]
    %v1330 = vld [vmem:[%s5 + $0x258] sm:$0xff]
    %v1331 = vld [vmem:[%s5 + $0x260] sm:$0xff]
    %v1332 = vld [vmem:[%s5 + $0x268] sm:$0xff]
    %v1333 = vld [vmem:[%s5 + $0x270] sm:$0xff]
    %v1334 = vld [vmem:[%s5 + $0x278] sm:$0xff]
    %v1335 = vld [vmem:[%s5 + $0x280] sm:$0xff]
    %v1336 = vld [vmem:[%s5 + $0x288] sm:$0xff]
    %v1337 = vld [vmem:[%s5 + $0x290] sm:$0xff]
    %v1338 = vld [vmem:[%s5 + $0x298] sm:$0xff]
    %v1339 = vld [vmem:[%s5 + $0x2a0] sm:$0xff]
    %v1340 = vld [vmem:[%s5 + $0x2a8] sm:$0xff]
    %v1341 = vld [vmem:[%s5 + $0x2b0] sm:$0xff]
    %v1342 = vld [vmem:[%s5 + $0x2b8] sm:$0xff]
    %v1343 = vld [vmem:[%s5 + $0x2c0] sm:$0xff]
    %v1344 = vld [vmem:[%s5 + $0x2c8] sm:$0xff]
    %v1345 = vld [vmem:[%s5 + $0x2d0] sm:$0xff]
    %v1346 = vld [vmem:[%s5 + $0x2d8] sm:$0xff]
    %v1347 = vld [vmem:[%s5 + $0x2e0] sm:$0xff]
    %v1348 = vld [vmem:[%s5 + $0x2e8] sm:$0xff]
    %v1349 = vld [vmem:[%s5 + $0x2f0] sm:$0xff]
    %v1350 = vld [vmem:[%s5 + $0x2f8] sm:$0xff]
    %v1351 = vld [vmem:[%s5 + $0x300] sm:$0xff]
    %v1352 = vld [vmem:[%s5 + $0x308] sm:$0xff]
    %v1353 = vld [vmem:[%s5 + $0x310] sm:$0xff]
    %v1354 = vld [vmem:[%s5 + $0x318] sm:$0xff]
    %v1355 = vld [vmem:[%s5 + $0x320] sm:$0xff]
    %v1356 = vld [vmem:[%s5 + $0x328] sm:$0xff]
    %v1357 = vld [vmem:[%s5 + $0x330] sm:$0xff]
    %v1358 = vld [vmem:[%s5 + $0x338] sm:$0xff]
    %v1359 = vld [vmem:[%s5 + $0x340] sm:$0xff]
    %v1360 = vld [vmem:[%s5 + $0x348] sm:$0xff]
    %v1361 = vld [vmem:[%s5 + $0x350] sm:$0xff]
    %v1362 = vld [vmem:[%s5 + $0x358] sm:$0xff]
    %v1363 = vld [vmem:[%s5 + $0x360] sm:$0xff]
    %v1364 = vld [vmem:[%s5 + $0x368] sm:$0xff]
    %v1365 = vld [vmem:[%s5 + $0x370] sm:$0xff]
    %v1366 = vld [vmem:[%s5 + $0x378] sm:$0xff]
    %v1367 = vld [vmem:[%s5 + $0x380] sm:$0xff]
    %v1368 = vld [vmem:[%s5 + $0x388] sm:$0xff]
    %v1369 = vld [vmem:[%s5 + $0x390] sm:$0xff]
    %v1370 = vld [vmem:[%s5 + $0x398] sm:$0xff]
    %v1371 = vld [vmem:[%s5 + $0x3a0] sm:$0xff]
    %v1372 = vld [vmem:[%s5 + $0x3a8] sm:$0xff]
    %v1373 = vld [vmem:[%s5 + $0x3b0] sm:$0xff]
    %v1374 = vld [vmem:[%s5 + $0x3b8] sm:$0xff]
    %v1375 = vld [vmem:[%s5 + $0x3c0] sm:$0xff]
    %v1376 = vld [vmem:[%s5 + $0x3c8] sm:$0xff]
    %v1377 = vld [vmem:[%s5 + $0x3d0] sm:$0xff]
    %v1378 = vld [vmem:[%s5 + $0x3d8] sm:$0xff]
    %v1379 = vld [vmem:[%s5 + $0x3e0] sm:$0xff]
    %v1380 = vld [vmem:[%s5 + $0x3e8] sm:$0xff]
    %v1381 = vld [vmem:[%s5 + $0x3f0] sm:$0xff]
    %v1382 = vld [vmem:[%s5 + $0x3f8] sm:$0xff]
    %v1383 = vld [vmem:[%s6] sm:$0xf]
    %v1385 = vlaneseq
    %v1386 = vshrl.u32 %v1385, 7
    %v1387 = vsub.s32 0, %v1386
    %v1388 = vrot.slane %v1383, %v1387
    %v1389 = vlaneseq
    %v1390 = vshrl.u32 %v1389, 7
    %v1391 = vsub.s32 1, %v1390
    %v1392 = vrot.slane %v1383, %v1391
    %v1393 = vlaneseq
    %v1394 = vshrl.u32 %v1393, 7
    %v1395 = vsub.s32 2, %v1394
    %v1396 = vrot.slane %v1383, %v1395
    %v1397 = vlaneseq
    %v1398 = vshrl.u32 %v1397, 7
    %v1399 = vsub.s32 3, %v1398
    %v1400 = vrot.slane %v1383, %v1399
    %v1533 = vunpack.c.l.b16 %v1255
    %v1534 = vunpack.c.h.b16 %v1255
    %v1535 = vunpack.c.l.b16 %v1256
    %v1536 = vunpack.c.h.b16 %v1256
    %v1537 = vunpack.c.l.b16 %v1257
    %v1538 = vunpack.c.h.b16 %v1257
    %v1539 = vunpack.c.l.b16 %v1258
    %v1540 = vunpack.c.h.b16 %v1258
    %v1541 = vunpack.c.l.b16 %v1259
    %v1542 = vunpack.c.h.b16 %v1259
    %v1543 = vunpack.c.l.b16 %v1260
    %v1544 = vunpack.c.h.b16 %v1260
    %v1545 = vunpack.c.l.b16 %v1261
    %v1546 = vunpack.c.h.b16 %v1261
    %v1547 = vunpack.c.l.b16 %v1262
    %v1548 = vunpack.c.h.b16 %v1262
    %v1549 = vunpack.c.l.b16 %v1263
    %v1550 = vunpack.c.h.b16 %v1263
    %v1551 = vunpack.c.l.b16 %v1264
    %v1552 = vunpack.c.h.b16 %v1264
    %v1553 = vunpack.c.l.b16 %v1265
    %v1554 = vunpack.c.h.b16 %v1265
    %v1555 = vunpack.c.l.b16 %v1266
    %v1556 = vunpack.c.h.b16 %v1266
    %v1557 = vunpack.c.l.b16 %v1267
    %v1558 = vunpack.c.h.b16 %v1267
    %v1559 = vunpack.c.l.b16 %v1268
    %v1560 = vunpack.c.h.b16 %v1268
    %v1561 = vunpack.c.l.b16 %v1269
    %v1562 = vunpack.c.h.b16 %v1269
    %v1563 = vunpack.c.l.b16 %v1270
    %v1564 = vunpack.c.h.b16 %v1270
    %v1565 = vunpack.c.l.b16 %v1271
    %v1566 = vunpack.c.h.b16 %v1271
    %v1567 = vunpack.c.l.b16 %v1272
    %v1568 = vunpack.c.h.b16 %v1272
    %v1569 = vunpack.c.l.b16 %v1273
    %v1570 = vunpack.c.h.b16 %v1273
    %v1571 = vunpack.c.l.b16 %v1274
    %v1572 = vunpack.c.h.b16 %v1274
    %v1573 = vunpack.c.l.b16 %v1275
    %v1574 = vunpack.c.h.b16 %v1275
    %v1575 = vunpack.c.l.b16 %v1276
    %v1576 = vunpack.c.h.b16 %v1276
    %v1577 = vunpack.c.l.b16 %v1277
    %v1578 = vunpack.c.h.b16 %v1277
    %v1579 = vunpack.c.l.b16 %v1278
    %v1580 = vunpack.c.h.b16 %v1278
    %v1581 = vunpack.c.l.b16 %v1279
    %v1582 = vunpack.c.h.b16 %v1279
    %v1583 = vunpack.c.l.b16 %v1280
    %v1584 = vunpack.c.h.b16 %v1280
    %v1585 = vunpack.c.l.b16 %v1281
    %v1586 = vunpack.c.h.b16 %v1281
    %v1587 = vunpack.c.l.b16 %v1282
    %v1588 = vunpack.c.h.b16 %v1282
    %v1589 = vunpack.c.l.b16 %v1283
    %v1590 = vunpack.c.h.b16 %v1283
    %v1591 = vunpack.c.l.b16 %v1284
    %v1592 = vunpack.c.h.b16 %v1284
    %v1593 = vunpack.c.l.b16 %v1285
    %v1594 = vunpack.c.h.b16 %v1285
    %v1595 = vunpack.c.l.b16 %v1286
    %v1596 = vunpack.c.h.b16 %v1286
    %v1597 = vunpack.c.l.b16 %v1287
    %v1598 = vunpack.c.h.b16 %v1287
    %v1599 = vunpack.c.l.b16 %v1288
    %v1600 = vunpack.c.h.b16 %v1288
    %v1601 = vunpack.c.l.b16 %v1289
    %v1602 = vunpack.c.h.b16 %v1289
    %v1603 = vunpack.c.l.b16 %v1290
    %v1604 = vunpack.c.h.b16 %v1290
    %v1605 = vunpack.c.l.b16 %v1291
    %v1606 = vunpack.c.h.b16 %v1291
    %v1607 = vunpack.c.l.b16 %v1292
    %v1608 = vunpack.c.h.b16 %v1292
    %v1609 = vunpack.c.l.b16 %v1293
    %v1610 = vunpack.c.h.b16 %v1293
    %v1611 = vunpack.c.l.b16 %v1294
    %v1612 = vunpack.c.h.b16 %v1294
    %v1613 = vunpack.c.l.b16 %v1295
    %v1614 = vunpack.c.h.b16 %v1295
    %v1615 = vunpack.c.l.b16 %v1296
    %v1616 = vunpack.c.h.b16 %v1296
    %v1617 = vunpack.c.l.b16 %v1297
    %v1618 = vunpack.c.h.b16 %v1297
    %v1619 = vunpack.c.l.b16 %v1298
    %v1620 = vunpack.c.h.b16 %v1298
    %v1621 = vunpack.c.l.b16 %v1299
    %v1622 = vunpack.c.h.b16 %v1299
    %v1623 = vunpack.c.l.b16 %v1300
    %v1624 = vunpack.c.h.b16 %v1300
    %v1625 = vunpack.c.l.b16 %v1301
    %v1626 = vunpack.c.h.b16 %v1301
    %v1627 = vunpack.c.l.b16 %v1302
    %v1628 = vunpack.c.h.b16 %v1302
    %v1629 = vunpack.c.l.b16 %v1303
    %v1630 = vunpack.c.h.b16 %v1303
    %v1631 = vunpack.c.l.b16 %v1304
    %v1632 = vunpack.c.h.b16 %v1304
    %v1633 = vunpack.c.l.b16 %v1305
    %v1634 = vunpack.c.h.b16 %v1305
    %v1635 = vunpack.c.l.b16 %v1306
    %v1636 = vunpack.c.h.b16 %v1306
    %v1637 = vunpack.c.l.b16 %v1307
    %v1638 = vunpack.c.h.b16 %v1307
    %v1639 = vunpack.c.l.b16 %v1308
    %v1640 = vunpack.c.h.b16 %v1308
    %v1641 = vunpack.c.l.b16 %v1309
    %v1642 = vunpack.c.h.b16 %v1309
    %v1643 = vunpack.c.l.b16 %v1310
    %v1644 = vunpack.c.h.b16 %v1310
    %v1645 = vunpack.c.l.b16 %v1311
    %v1646 = vunpack.c.h.b16 %v1311
    %v1647 = vunpack.c.l.b16 %v1312
    %v1648 = vunpack.c.h.b16 %v1312
    %v1649 = vunpack.c.l.b16 %v1313
    %v1650 = vunpack.c.h.b16 %v1313
    %v1651 = vunpack.c.l.b16 %v1314
    %v1652 = vunpack.c.h.b16 %v1314
    %v1653 = vunpack.c.l.b16 %v1315
    %v1654 = vunpack.c.h.b16 %v1315
    %v1655 = vunpack.c.l.b16 %v1316
    %v1656 = vunpack.c.h.b16 %v1316
    %v1657 = vunpack.c.l.b16 %v1317
    %v1658 = vunpack.c.h.b16 %v1317
    %v1659 = vunpack.c.l.b16 %v1318
    %v1660 = vunpack.c.h.b16 %v1318
    %v1661 = vunpack.c.l.b16 %v1319
    %v1662 = vunpack.c.h.b16 %v1319
    %v1663 = vunpack.c.l.b16 %v1320
    %v1664 = vunpack.c.h.b16 %v1320
    %v1665 = vunpack.c.l.b16 %v1321
    %v1666 = vunpack.c.h.b16 %v1321
    %v1667 = vunpack.c.l.b16 %v1322
    %v1668 = vunpack.c.h.b16 %v1322
    %v1669 = vunpack.c.l.b16 %v1323
    %v1670 = vunpack.c.h.b16 %v1323
    %v1671 = vunpack.c.l.b16 %v1324
    %v1672 = vunpack.c.h.b16 %v1324
    %v1673 = vunpack.c.l.b16 %v1325
    %v1674 = vunpack.c.h.b16 %v1325
    %v1675 = vunpack.c.l.b16 %v1326
    %v1676 = vunpack.c.h.b16 %v1326
    %v1677 = vunpack.c.l.b16 %v1327
    %v1678 = vunpack.c.h.b16 %v1327
    %v1679 = vunpack.c.l.b16 %v1328
    %v1680 = vunpack.c.h.b16 %v1328
    %v1681 = vunpack.c.l.b16 %v1329
    %v1682 = vunpack.c.h.b16 %v1329
    %v1683 = vunpack.c.l.b16 %v1330
    %v1684 = vunpack.c.h.b16 %v1330
    %v1685 = vunpack.c.l.b16 %v1331
    %v1686 = vunpack.c.h.b16 %v1331
    %v1687 = vunpack.c.l.b16 %v1332
    %v1688 = vunpack.c.h.b16 %v1332
    %v1689 = vunpack.c.l.b16 %v1333
    %v1690 = vunpack.c.h.b16 %v1333
    %v1691 = vunpack.c.l.b16 %v1334
    %v1692 = vunpack.c.h.b16 %v1334
    %v1693 = vunpack.c.l.b16 %v1335
    %v1694 = vunpack.c.h.b16 %v1335
    %v1695 = vunpack.c.l.b16 %v1336
    %v1696 = vunpack.c.h.b16 %v1336
    %v1697 = vunpack.c.l.b16 %v1337
    %v1698 = vunpack.c.h.b16 %v1337
    %v1699 = vunpack.c.l.b16 %v1338
    %v1700 = vunpack.c.h.b16 %v1338
    %v1701 = vunpack.c.l.b16 %v1339
    %v1702 = vunpack.c.h.b16 %v1339
    %v1703 = vunpack.c.l.b16 %v1340
    %v1704 = vunpack.c.h.b16 %v1340
    %v1705 = vunpack.c.l.b16 %v1341
    %v1706 = vunpack.c.h.b16 %v1341
    %v1707 = vunpack.c.l.b16 %v1342
    %v1708 = vunpack.c.h.b16 %v1342
    %v1709 = vunpack.c.l.b16 %v1343
    %v1710 = vunpack.c.h.b16 %v1343
    %v1711 = vunpack.c.l.b16 %v1344
    %v1712 = vunpack.c.h.b16 %v1344
    %v1713 = vunpack.c.l.b16 %v1345
    %v1714 = vunpack.c.h.b16 %v1345
    %v1715 = vunpack.c.l.b16 %v1346
    %v1716 = vunpack.c.h.b16 %v1346
    %v1717 = vunpack.c.l.b16 %v1347
    %v1718 = vunpack.c.h.b16 %v1347
    %v1719 = vunpack.c.l.b16 %v1348
    %v1720 = vunpack.c.h.b16 %v1348
    %v1721 = vunpack.c.l.b16 %v1349
    %v1722 = vunpack.c.h.b16 %v1349
    %v1723 = vunpack.c.l.b16 %v1350
    %v1724 = vunpack.c.h.b16 %v1350
    %v1725 = vunpack.c.l.b16 %v1351
    %v1726 = vunpack.c.h.b16 %v1351
    %v1727 = vunpack.c.l.b16 %v1352
    %v1728 = vunpack.c.h.b16 %v1352
    %v1729 = vunpack.c.l.b16 %v1353
    %v1730 = vunpack.c.h.b16 %v1353
    %v1731 = vunpack.c.l.b16 %v1354
    %v1732 = vunpack.c.h.b16 %v1354
    %v1733 = vunpack.c.l.b16 %v1355
    %v1734 = vunpack.c.h.b16 %v1355
    %v1735 = vunpack.c.l.b16 %v1356
    %v1736 = vunpack.c.h.b16 %v1356
    %v1737 = vunpack.c.l.b16 %v1357
    %v1738 = vunpack.c.h.b16 %v1357
    %v1739 = vunpack.c.l.b16 %v1358
    %v1740 = vunpack.c.h.b16 %v1358
    %v1741 = vunpack.c.l.b16 %v1359
    %v1742 = vunpack.c.h.b16 %v1359
    %v1743 = vunpack.c.l.b16 %v1360
    %v1744 = vunpack.c.h.b16 %v1360
    %v1745 = vunpack.c.l.b16 %v1361
    %v1746 = vunpack.c.h.b16 %v1361
    %v1747 = vunpack.c.l.b16 %v1362
    %v1748 = vunpack.c.h.b16 %v1362
    %v1749 = vunpack.c.l.b16 %v1363
    %v1750 = vunpack.c.h.b16 %v1363
    %v1751 = vunpack.c.l.b16 %v1364
    %v1752 = vunpack.c.h.b16 %v1364
    %v1753 = vunpack.c.l.b16 %v1365
    %v1754 = vunpack.c.h.b16 %v1365
    %v1755 = vunpack.c.l.b16 %v1366
    %v1756 = vunpack.c.h.b16 %v1366
    %v1757 = vunpack.c.l.b16 %v1367
    %v1758 = vunpack.c.h.b16 %v1367
    %v1759 = vunpack.c.l.b16 %v1368
    %v1760 = vunpack.c.h.b16 %v1368
    %v1761 = vunpack.c.l.b16 %v1369
    %v1762 = vunpack.c.h.b16 %v1369
    %v1763 = vunpack.c.l.b16 %v1370
    %v1764 = vunpack.c.h.b16 %v1370
    %v1765 = vunpack.c.l.b16 %v1371
    %v1766 = vunpack.c.h.b16 %v1371
    %v1767 = vunpack.c.l.b16 %v1372
    %v1768 = vunpack.c.h.b16 %v1372
    %v1769 = vunpack.c.l.b16 %v1373
    %v1770 = vunpack.c.h.b16 %v1373
    %v1771 = vunpack.c.l.b16 %v1374
    %v1772 = vunpack.c.h.b16 %v1374
    %v1773 = vunpack.c.l.b16 %v1375
    %v1774 = vunpack.c.h.b16 %v1375
    %v1775 = vunpack.c.l.b16 %v1376
    %v1776 = vunpack.c.h.b16 %v1376
    %v1777 = vunpack.c.l.b16 %v1377
    %v1778 = vunpack.c.h.b16 %v1377
    %v1779 = vunpack.c.l.b16 %v1378
    %v1780 = vunpack.c.h.b16 %v1378
    %v1781 = vunpack.c.l.b16 %v1379
    %v1782 = vunpack.c.h.b16 %v1379
    %v1783 = vunpack.c.l.b16 %v1380
    %v1784 = vunpack.c.h.b16 %v1380
    %v1785 = vunpack.c.l.b16 %v1381
    %v1786 = vunpack.c.h.b16 %v1381
    %v1787 = vunpack.c.l.b16 %v1382
    %v1788 = vunpack.c.h.b16 %v1382
    %v1789 = vpack.c.b16 %v1537, %v1533
    %v1790 = vpack.c.b16 %v1538, %v1534
    %v1791 = vpack.c.b16 %v1539, %v1535
    %v1792 = vpack.c.b16 %v1540, %v1536
    %v1793 = vpack.c.b16 %v1545, %v1541
    %v1794 = vpack.c.b16 %v1546, %v1542
    %v1795 = vpack.c.b16 %v1547, %v1543
    %v1796 = vpack.c.b16 %v1548, %v1544
    %v1797 = vpack.c.b16 %v1553, %v1549
    %v1798 = vpack.c.b16 %v1554, %v1550
    %v1799 = vpack.c.b16 %v1555, %v1551
    %v1800 = vpack.c.b16 %v1556, %v1552
    %v1801 = vpack.c.b16 %v1561, %v1557
    %v1802 = vpack.c.b16 %v1562, %v1558
    %v1803 = vpack.c.b16 %v1563, %v1559
    %v1804 = vpack.c.b16 %v1564, %v1560
    %v1805 = vpack.c.b16 %v1569, %v1565
    %v1806 = vpack.c.b16 %v1570, %v1566
    %v1807 = vpack.c.b16 %v1571, %v1567
    %v1808 = vpack.c.b16 %v1572, %v1568
    %v1809 = vpack.c.b16 %v1577, %v1573
    %v1810 = vpack.c.b16 %v1578, %v1574
    %v1811 = vpack.c.b16 %v1579, %v1575
    %v1812 = vpack.c.b16 %v1580, %v1576
    %v1813 = vpack.c.b16 %v1585, %v1581
    %v1814 = vpack.c.b16 %v1586, %v1582
    %v1815 = vpack.c.b16 %v1587, %v1583
    %v1816 = vpack.c.b16 %v1588, %v1584
    %v1817 = vpack.c.b16 %v1593, %v1589
    %v1818 = vpack.c.b16 %v1594, %v1590
    %v1819 = vpack.c.b16 %v1595, %v1591
    %v1820 = vpack.c.b16 %v1596, %v1592
    %v1821 = vpack.c.b16 %v1601, %v1597
    %v1822 = vpack.c.b16 %v1602, %v1598
    %v1823 = vpack.c.b16 %v1603, %v1599
    %v1824 = vpack.c.b16 %v1604, %v1600
    %v1825 = vpack.c.b16 %v1609, %v1605
    %v1826 = vpack.c.b16 %v1610, %v1606
    %v1827 = vpack.c.b16 %v1611, %v1607
    %v1828 = vpack.c.b16 %v1612, %v1608
    %v1829 = vpack.c.b16 %v1617, %v1613
    %v1830 = vpack.c.b16 %v1618, %v1614
    %v1831 = vpack.c.b16 %v1619, %v1615
    %v1832 = vpack.c.b16 %v1620, %v1616
    %v1833 = vpack.c.b16 %v1625, %v1621
    %v1834 = vpack.c.b16 %v1626, %v1622
    %v1835 = vpack.c.b16 %v1627, %v1623
    %v1836 = vpack.c.b16 %v1628, %v1624
    %v1837 = vpack.c.b16 %v1633, %v1629
    %v1838 = vpack.c.b16 %v1634, %v1630
    %v1839 = vpack.c.b16 %v1635, %v1631
    %v1840 = vpack.c.b16 %v1636, %v1632
    %v1841 = vpack.c.b16 %v1641, %v1637
    %v1842 = vpack.c.b16 %v1642, %v1638
    %v1843 = vpack.c.b16 %v1643, %v1639
    %v1844 = vpack.c.b16 %v1644, %v1640
    %v1845 = vpack.c.b16 %v1649, %v1645
    %v1846 = vpack.c.b16 %v1650, %v1646
    %v1847 = vpack.c.b16 %v1651, %v1647
    %v1848 = vpack.c.b16 %v1652, %v1648
    %v1849 = vpack.c.b16 %v1657, %v1653
    %v1850 = vpack.c.b16 %v1658, %v1654
    %v1851 = vpack.c.b16 %v1659, %v1655
    %v1852 = vpack.c.b16 %v1660, %v1656
    %v1853 = vpack.c.b16 %v1665, %v1661
    %v1854 = vpack.c.b16 %v1666, %v1662
    %v1855 = vpack.c.b16 %v1667, %v1663
    %v1856 = vpack.c.b16 %v1668, %v1664
    %v1857 = vpack.c.b16 %v1673, %v1669
    %v1858 = vpack.c.b16 %v1674, %v1670
    %v1859 = vpack.c.b16 %v1675, %v1671
    %v1860 = vpack.c.b16 %v1676, %v1672
    %v1861 = vpack.c.b16 %v1681, %v1677
    %v1862 = vpack.c.b16 %v1682, %v1678
    %v1863 = vpack.c.b16 %v1683, %v1679
    %v1864 = vpack.c.b16 %v1684, %v1680
    %v1865 = vpack.c.b16 %v1689, %v1685
    %v1866 = vpack.c.b16 %v1690, %v1686
    %v1867 = vpack.c.b16 %v1691, %v1687
    %v1868 = vpack.c.b16 %v1692, %v1688
    %v1869 = vpack.c.b16 %v1697, %v1693
    %v1870 = vpack.c.b16 %v1698, %v1694
    %v1871 = vpack.c.b16 %v1699, %v1695
    %v1872 = vpack.c.b16 %v1700, %v1696
    %v1873 = vpack.c.b16 %v1705, %v1701
    %v1874 = vpack.c.b16 %v1706, %v1702
    %v1875 = vpack.c.b16 %v1707, %v1703
    %v1876 = vpack.c.b16 %v1708, %v1704
    %v1877 = vpack.c.b16 %v1713, %v1709
    %v1878 = vpack.c.b16 %v1714, %v1710
    %v1879 = vpack.c.b16 %v1715, %v1711
    %v1880 = vpack.c.b16 %v1716, %v1712
    %v1881 = vpack.c.b16 %v1721, %v1717
    %v1882 = vpack.c.b16 %v1722, %v1718
    %v1883 = vpack.c.b16 %v1723, %v1719
    %v1884 = vpack.c.b16 %v1724, %v1720
    %v1885 = vpack.c.b16 %v1729, %v1725
    %v1886 = vpack.c.b16 %v1730, %v1726
    %v1887 = vpack.c.b16 %v1731, %v1727
    %v1888 = vpack.c.b16 %v1732, %v1728
    %v1889 = vpack.c.b16 %v1737, %v1733
    %v1890 = vpack.c.b16 %v1738, %v1734
    %v1891 = vpack.c.b16 %v1739, %v1735
    %v1892 = vpack.c.b16 %v1740, %v1736
    %v1893 = vpack.c.b16 %v1745, %v1741
    %v1894 = vpack.c.b16 %v1746, %v1742
    %v1895 = vpack.c.b16 %v1747, %v1743
    %v1896 = vpack.c.b16 %v1748, %v1744
    %v1897 = vpack.c.b16 %v1753, %v1749
    %v1898 = vpack.c.b16 %v1754, %v1750
    %v1899 = vpack.c.b16 %v1755, %v1751
    %v1900 = vpack.c.b16 %v1756, %v1752
    %v1901 = vpack.c.b16 %v1761, %v1757
    %v1902 = vpack.c.b16 %v1762, %v1758
    %v1903 = vpack.c.b16 %v1763, %v1759
    %v1904 = vpack.c.b16 %v1764, %v1760
    %v1905 = vpack.c.b16 %v1769, %v1765
    %v1906 = vpack.c.b16 %v1770, %v1766
    %v1907 = vpack.c.b16 %v1771, %v1767
    %v1908 = vpack.c.b16 %v1772, %v1768
    %v1909 = vpack.c.b16 %v1777, %v1773
    %v1910 = vpack.c.b16 %v1778, %v1774
    %v1911 = vpack.c.b16 %v1779, %v1775
    %v1912 = vpack.c.b16 %v1780, %v1776
    %v1913 = vpack.c.b16 %v1785, %v1781
    %v1914 = vpack.c.b16 %v1786, %v1782
    %v1915 = vpack.c.b16 %v1787, %v1783
    %v1916 = vpack.c.b16 %v1788, %v1784
    %2045 = vmatprep.subr.bf16.mxu0 %v1790
    %2046 = vmatpush1.bf16.msra.mxu0 %v1789
    %2047 = vmatprep.subr.bf16.mxu0 %v1794
    %2048 = vmatpush1.bf16.msra.mxu0 %v1793
    %2049 = vmatprep.subr.bf16.mxu0 %v1798
    %2050 = vmatpush1.bf16.msra.mxu0 %v1797
    %2051 = vmatprep.subr.bf16.mxu0 %v1802
    %2052 = vmatpush1.bf16.msra.mxu0 %v1801
    %2053 = vmatprep.subr.bf16.mxu0 %v1806
    %2054 = vmatpush1.bf16.msra.mxu0 %v1805
    %2055 = vmatprep.subr.bf16.mxu0 %v1810
    %2056 = vmatpush1.bf16.msra.mxu0 %v1809
    %2057 = vmatprep.subr.bf16.mxu0 %v1814
    %2058 = vmatpush1.bf16.msra.mxu0 %v1813
    %2059 = vmatprep.subr.bf16.mxu0 %v1818
    %2060 = vmatpush1.bf16.msra.mxu0 %v1817
    %2061 = vmatprep.subr.bf16.mxu0 %v1822
    %2062 = vmatpush1.bf16.msra.mxu0 %v1821
    %2063 = vmatprep.subr.bf16.mxu0 %v1826
    %2064 = vmatpush1.bf16.msra.mxu0 %v1825
    %2065 = vmatprep.subr.bf16.mxu0 %v1830
    %2066 = vmatpush1.bf16.msra.mxu0 %v1829
    %2067 = vmatprep.subr.bf16.mxu0 %v1834
    %2068 = vmatpush1.bf16.msra.mxu0 %v1833
    %2069 = vmatprep.subr.bf16.mxu0 %v1838
    %2070 = vmatpush1.bf16.msra.mxu0 %v1837
    %2071 = vmatprep.subr.bf16.mxu0 %v1842
    %2072 = vmatpush1.bf16.msra.mxu0 %v1841
    %2073 = vmatprep.subr.bf16.mxu0 %v1846
    %2074 = vmatpush1.bf16.msra.mxu0 %v1845
    %2075 = vmatprep.subr.bf16.mxu0 %v1850
    %2076 = vmatpush1.bf16.msra.mxu0 %v1849
    %2077 = vmatprep.mubr.bf16.mxu0 %v1252
    %2078 = vmatmul.mubr.bf16.gmra.mrb[0].mxu0 %v1251
    %v2079 = vpop.f32.mrb[0].mxu0
    %v2080 = vadd.f32 %v1388, %v2079
    %v2081 = vpop.f32.mrb[0].mxu0
    %v2082 = vadd.f32 %v1392, %v2081
    %v2083 = vpop.f32.mrb[0].mxu0
    %v2084 = vadd.f32 %v1388, %v2083
    %v2085 = vpop.f32.mrb[0].mxu0
    %v2086 = vadd.f32 %v1392, %v2085
    %2087 = vdwg.mxu0
    %2088 = vmatprep.subr.bf16.mxu0 %v1854
    %2089 = vmatpush1.bf16.msra.mxu0 %v1853
    %2090 = vmatprep.subr.bf16.mxu0 %v1858
    %2091 = vmatpush1.bf16.msra.mxu0 %v1857
    %2092 = vmatprep.subr.bf16.mxu0 %v1862
    %2093 = vmatpush1.bf16.msra.mxu0 %v1861
    %2094 = vmatprep.subr.bf16.mxu0 %v1866
    %2095 = vmatpush1.bf16.msra.mxu0 %v1865
    %2096 = vmatprep.subr.bf16.mxu0 %v1870
    %2097 = vmatpush1.bf16.msra.mxu0 %v1869
    %2098 = vmatprep.subr.bf16.mxu0 %v1874
    %2099 = vmatpush1.bf16.msra.mxu0 %v1873
    %2100 = vmatprep.subr.bf16.mxu0 %v1878
    %2101 = vmatpush1.bf16.msra.mxu0 %v1877
    %2102 = vmatprep.subr.bf16.mxu0 %v1882
    %2103 = vmatpush1.bf16.msra.mxu0 %v1881
    %2104 = vmatprep.subr.bf16.mxu0 %v1886
    %2105 = vmatpush1.bf16.msra.mxu0 %v1885
    %2106 = vmatprep.subr.bf16.mxu0 %v1890
    %2107 = vmatpush1.bf16.msra.mxu0 %v1889
    %2108 = vmatprep.subr.bf16.mxu0 %v1894
    %2109 = vmatpush1.bf16.msra.mxu0 %v1893
    %2110 = vmatprep.subr.bf16.mxu0 %v1898
    %2111 = vmatpush1.bf16.msra.mxu0 %v1897
    %2112 = vmatprep.subr.bf16.mxu0 %v1902
    %2113 = vmatpush1.bf16.msra.mxu0 %v1901
    %2114 = vmatprep.subr.bf16.mxu0 %v1906
    %2115 = vmatpush1.bf16.msra.mxu0 %v1905
    %2116 = vmatprep.subr.bf16.mxu0 %v1910
    %2117 = vmatpush1.bf16.msra.mxu0 %v1909
    %2118 = vmatprep.subr.bf16.mxu0 %v1914
    %2119 = vmatpush1.bf16.msra.mxu0 %v1913
    %2120 = vmatprep.mubr.bf16.mxu0 %v1254
    %2121 = vmatmul.mubr.bf16.gmra.mrb[0].mxu0 %v1253
    %v2122 = vpop.f32.mrb[0].mxu0
    %v2123 = vadd.f32 %v2080, %v2122
    %v2124 = vpop.f32.mrb[0].mxu0
    %v2125 = vadd.f32 %v2082, %v2124
    %v2126 = vpop.f32.mrb[0].mxu0
    %v2127 = vadd.f32 %v2084, %v2126
    %v2128 = vpop.f32.mrb[0].mxu0
    %v2129 = vadd.f32 %v2086, %v2128
    %2130 = vdwg.mxu0
    %2131 = vmatprep.subr.bf16.mxu0 %v1792
    %2132 = vmatpush1.bf16.msra.mxu0 %v1791
    %2133 = vmatprep.subr.bf16.mxu0 %v1796
    %2134 = vmatpush1.bf16.msra.mxu0 %v1795
    %2135 = vmatprep.subr.bf16.mxu0 %v1800
    %2136 = vmatpush1.bf16.msra.mxu0 %v1799
    %2137 = vmatprep.subr.bf16.mxu0 %v1804
    %2138 = vmatpush1.bf16.msra.mxu0 %v1803
    %2139 = vmatprep.subr.bf16.mxu0 %v1808
    %2140 = vmatpush1.bf16.msra.mxu0 %v1807
    %2141 = vmatprep.subr.bf16.mxu0 %v1812
    %2142 = vmatpush1.bf16.msra.mxu0 %v1811
    %2143 = vmatprep.subr.bf16.mxu0 %v1816
    %2144 = vmatpush1.bf16.msra.mxu0 %v1815
    %2145 = vmatprep.subr.bf16.mxu0 %v1820
    %2146 = vmatpush1.bf16.msra.mxu0 %v1819
    %2147 = vmatprep.subr.bf16.mxu0 %v1824
    %2148 = vmatpush1.bf16.msra.mxu0 %v1823
    %2149 = vmatprep.subr.bf16.mxu0 %v1828
    %2150 = vmatpush1.bf16.msra.mxu0 %v1827
    %2151 = vmatprep.subr.bf16.mxu0 %v1832
    %2152 = vmatpush1.bf16.msra.mxu0 %v1831
    %2153 = vmatprep.subr.bf16.mxu0 %v1836
    %2154 = vmatpush1.bf16.msra.mxu0 %v1835
    %2155 = vmatprep.subr.bf16.mxu0 %v1840
    %2156 = vmatpush1.bf16.msra.mxu0 %v1839
    %2157 = vmatprep.subr.bf16.mxu0 %v1844
    %2158 = vmatpush1.bf16.msra.mxu0 %v1843
    %2159 = vmatprep.subr.bf16.mxu0 %v1848
    %2160 = vmatpush1.bf16.msra.mxu0 %v1847
    %2161 = vmatprep.subr.bf16.mxu0 %v1852
    %2162 = vmatpush1.bf16.msra.mxu0 %v1851
    %2163 = vmatprep.mubr.bf16.mxu0 %v1252
    %2164 = vmatmul.mubr.bf16.gmra.mrb[0].mxu0 %v1251
    %v2165 = vpop.f32.mrb[0].mxu0
    %v2166 = vadd.f32 %v1396, %v2165
    %v2167 = vpop.f32.mrb[0].mxu0
    %v2168 = vadd.f32 %v1400, %v2167
    %v2169 = vpop.f32.mrb[0].mxu0
    %v2170 = vadd.f32 %v1396, %v2169
    %v2171 = vpop.f32.mrb[0].mxu0
    %v2172 = vadd.f32 %v1400, %v2171
    %2173 = vdwg.mxu0
    %2174 = vmatprep.subr.bf16.mxu0 %v1856
    %2175 = vmatpush1.bf16.msra.mxu0 %v1855
    %2176 = vmatprep.subr.bf16.mxu0 %v1860
    %2177 = vmatpush1.bf16.msra.mxu0 %v1859
    %2178 = vmatprep.subr.bf16.mxu0 %v1864
    %2179 = vmatpush1.bf16.msra.mxu0 %v1863
    %2180 = vmatprep.subr.bf16.mxu0 %v1868
    %2181 = vmatpush1.bf16.msra.mxu0 %v1867
    %2182 = vmatprep.subr.bf16.mxu0 %v1872
    %2183 = vmatpush1.bf16.msra.mxu0 %v1871
    %2184 = vmatprep.subr.bf16.mxu0 %v1876
    %2185 = vmatpush1.bf16.msra.mxu0 %v1875
    %2186 = vmatprep.subr.bf16.mxu0 %v1880
    %2187 = vmatpush1.bf16.msra.mxu0 %v1879
    %2188 = vmatprep.subr.bf16.mxu0 %v1884
    %2189 = vmatpush1.bf16.msra.mxu0 %v1883
    %2190 = vmatprep.subr.bf16.mxu0 %v1888
    %2191 = vmatpush1.bf16.msra.mxu0 %v1887
    %2192 = vmatprep.subr.bf16.mxu0 %v1892
    %2193 = vmatpush1.bf16.msra.mxu0 %v1891
    %2194 = vmatprep.subr.bf16.mxu0 %v1896
    %2195 = vmatpush1.bf16.msra.mxu0 %v1895
    %2196 = vmatprep.subr.bf16.mxu0 %v1900
    %2197 = vmatpush1.bf16.msra.mxu0 %v1899
    %2198 = vmatprep.subr.bf16.mxu0 %v1904
    %2199 = vmatpush1.bf16.msra.mxu0 %v1903
    %2200 = vmatprep.subr.bf16.mxu0 %v1908
    %2201 = vmatpush1.bf16.msra.mxu0 %v1907
    %2202 = vmatprep.subr.bf16.mxu0 %v1912
    %2203 = vmatpush1.bf16.msra.mxu0 %v1911
    %2204 = vmatprep.subr.bf16.mxu0 %v1916
    %2205 = vmatpush1.bf16.msra.mxu0 %v1915
    %2206 = vmatprep.mubr.bf16.mxu0 %v1254
    %2207 = vmatmul.mubr.bf16.gmra.mrb[0].mxu0 %v1253
    %v2208 = vpop.f32.mrb[0].mxu0
    %v2209 = vadd.f32 %v2166, %v2208
    %v2210 = vpop.f32.mrb[0].mxu0
    %v2211 = vadd.f32 %v2168, %v2210
    %v2212 = vpop.f32.mrb[0].mxu0
    %v2213 = vadd.f32 %v2170, %v2212
    %v2214 = vpop.f32.mrb[0].mxu0
    %v2215 = vadd.f32 %v2172, %v2214
    %2216 = vdwg.mxu0
    %v2217 = vxor.u32 %v2123, 2147483648
    %v2218 = vxor.u32 %v2125, 2147483648
    %v2219 = vxor.u32 %v2209, 2147483648
    %v2220 = vxor.u32 %v2211, 2147483648
    %v2221 = vxor.u32 %v2127, 2147483648
    %v2222 = vxor.u32 %v2129, 2147483648
    %v2223 = vxor.u32 %v2213, 2147483648
    %v2224 = vxor.u32 %v2215, 2147483648
    %v2225 = vmul.f32 %v2217, 1.442695
    %v2226 = vpow.pop %v2225
    %v2227 = vmul.f32 %v2218, 1.442695
    %v2228 = vpow.pop %v2227
    %v2229 = vmul.f32 %v2219, 1.442695
    %v2230 = vpow.pop %v2229
    %v2231 = vmul.f32 %v2220, 1.442695
    %v2232 = vpow.pop %v2231
    %v2233 = vmul.f32 %v2221, 1.442695
    %v2234 = vpow.pop %v2233
    %v2235 = vmul.f32 %v2222, 1.442695
    %v2236 = vpow.pop %v2235
    %v2237 = vmul.f32 %v2223, 1.442695
    %v2238 = vpow.pop %v2237
    %v2239 = vmul.f32 %v2224, 1.442695
    %v2240 = vpow.pop %v2239
    %v2241 = vadd.f32 %v2226, 1.0
    %v2242 = vadd.f32 %v2228, 1.0
    %v2243 = vadd.f32 %v2230, 1.0
    %v2244 = vadd.f32 %v2232, 1.0
    %v2245 = vadd.f32 %v2234, 1.0
    %v2246 = vadd.f32 %v2236, 1.0
    %v2247 = vadd.f32 %v2238, 1.0
    %v2248 = vadd.f32 %v2240, 1.0
    %v2249 = vrcp.pop %v2241
    %v2250 = vmul.f32 1.0, %v2249
    %v2251 = vrcp.pop %v2242
    %v2252 = vmul.f32 1.0, %v2251
    %v2253 = vrcp.pop %v2243
    %v2254 = vmul.f32 1.0, %v2253
    %v2255 = vrcp.pop %v2244
    %v2256 = vmul.f32 1.0, %v2255
    %v2257 = vrcp.pop %v2245
    %v2258 = vmul.f32 1.0, %v2257
    %v2259 = vrcp.pop %v2246
    %v2260 = vmul.f32 1.0, %v2259
    %v2261 = vrcp.pop %v2247
    %v2262 = vmul.f32 1.0, %v2261
    %v2263 = vrcp.pop %v2248
    %v2264 = vmul.f32 1.0, %v2263
    %v2265 = vmul.f32 %v2123, %v2250
    %v2266 = vmul.f32 %v2125, %v2252
    %v2267 = vmul.f32 %v2209, %v2254
    %v2268 = vmul.f32 %v2211, %v2256
    %v2269 = vmul.f32 %v2127, %v2258
    %v2270 = vmul.f32 %v2129, %v2260
    %v2271 = vmul.f32 %v2213, %v2262
    %v2272 = vmul.f32 %v2215, %v2264
    %v2273 = vpack.c.bf16 %v2269, %v2265
    %v2274 = vpack.c.bf16 %v2270, %v2266
    %v2275 = vpack.c.bf16 %v2271, %v2267
    %v2276 = vpack.c.bf16 %v2272, %v2268
    %v2277 = vld [vmem:[%s7] sm:$0xff]
    %v2278 = vld [vmem:[%s7 + $0x8] sm:$0xff]
    %v2279 = vld [vmem:[%s7 + $0x10] sm:$0xff]
    %v2280 = vld [vmem:[%s7 + $0x18] sm:$0xf]
    %v2281 = vld [vmem:[%s7 + $0x1c] sm:$0xff]
    %v2282 = vld [vmem:[%s7 + $0x24] sm:$0xff]
    %v2283 = vld [vmem:[%s7 + $0x2c] sm:$0xff]
    %v2284 = vld [vmem:[%s7 + $0x34] sm:$0xf]
    %v2285 = vld [vmem:[%s7 + $0x38] sm:$0xff]
    %v2286 = vld [vmem:[%s7 + $0x40] sm:$0xff]
    %v2287 = vld [vmem:[%s7 + $0x48] sm:$0xff]
    %v2288 = vld [vmem:[%s7 + $0x50] sm:$0xf]
    %v2289 = vld [vmem:[%s7 + $0x54] sm:$0xff]
    %v2290 = vld [vmem:[%s7 + $0x5c] sm:$0xff]
    %v2291 = vld [vmem:[%s7 + $0x64] sm:$0xff]
    %v2292 = vld [vmem:[%s7 + $0x6c] sm:$0xf]
    %v2293 = vld [vmem:[%s7 + $0x70] sm:$0xff]
    %v2294 = vld [vmem:[%s7 + $0x78] sm:$0xff]
    %v2295 = vld [vmem:[%s7 + $0x80] sm:$0xff]
    %v2296 = vld [vmem:[%s7 + $0x88] sm:$0xf]
    %v2297 = vld [vmem:[%s7 + $0x8c] sm:$0xff]
    %v2298 = vld [vmem:[%s7 + $0x94] sm:$0xff]
    %v2299 = vld [vmem:[%s7 + $0x9c] sm:$0xff]
    %v2300 = vld [vmem:[%s7 + $0xa4] sm:$0xf]
    %v2301 = vld [vmem:[%s7 + $0xa8] sm:$0xff]
    %v2302 = vld [vmem:[%s7 + $0xb0] sm:$0xff]
    %v2303 = vld [vmem:[%s7 + $0xb8] sm:$0xff]
    %v2304 = vld [vmem:[%s7 + $0xc0] sm:$0xf]
    %v2305 = vld [vmem:[%s7 + $0xc4] sm:$0xff]
    %v2306 = vld [vmem:[%s7 + $0xcc] sm:$0xff]
    %v2307 = vld [vmem:[%s7 + $0xd4] sm:$0xff]
    %v2308 = vld [vmem:[%s7 + $0xdc] sm:$0xf]
    %v2309 = vld [vmem:[%s7 + $0xe0] sm:$0xff]
    %v2310 = vld [vmem:[%s7 + $0xe8] sm:$0xff]
    %v2311 = vld [vmem:[%s7 + $0xf0] sm:$0xff]
    %v2312 = vld [vmem:[%s7 + $0xf8] sm:$0xf]
    %v2313 = vld [vmem:[%s7 + $0xfc] sm:$0xff]
    %v2314 = vld [vmem:[%s7 + $0x104] sm:$0xff]
    %v2315 = vld [vmem:[%s7 + $0x10c] sm:$0xff]
    %v2316 = vld [vmem:[%s7 + $0x114] sm:$0xf]
    %v2317 = vld [vmem:[%s7 + $0x118] sm:$0xff]
    %v2318 = vld [vmem:[%s7 + $0x120] sm:$0xff]
    %v2319 = vld [vmem:[%s7 + $0x128] sm:$0xff]
    %v2320 = vld [vmem:[%s7 + $0x130] sm:$0xf]
    %v2321 = vld [vmem:[%s7 + $0x134] sm:$0xff]
    %v2322 = vld [vmem:[%s7 + $0x13c] sm:$0xff]
    %v2323 = vld [vmem:[%s7 + $0x144] sm:$0xff]
    %v2324 = vld [vmem:[%s7 + $0x14c] sm:$0xf]
    %v2325 = vld [vmem:[%s7 + $0x150] sm:$0xff]
    %v2326 = vld [vmem:[%s7 + $0x158] sm:$0xff]
    %v2327 = vld [vmem:[%s7 + $0x160] sm:$0xff]
    %v2328 = vld [vmem:[%s7 + $0x168] sm:$0xf]
    %v2329 = vld [vmem:[%s7 + $0x16c] sm:$0xff]
    %v2330 = vld [vmem:[%s7 + $0x174] sm:$0xff]
    %v2331 = vld [vmem:[%s7 + $0x17c] sm:$0xff]
    %v2332 = vld [vmem:[%s7 + $0x184] sm:$0xf]
    %v2333 = vld [vmem:[%s7 + $0x188] sm:$0xff]
    %v2334 = vld [vmem:[%s7 + $0x190] sm:$0xff]
    %v2335 = vld [vmem:[%s7 + $0x198] sm:$0xff]
    %v2336 = vld [vmem:[%s7 + $0x1a0] sm:$0xf]
    %v2337 = vld [vmem:[%s7 + $0x1a4] sm:$0xff]
    %v2338 = vld [vmem:[%s7 + $0x1ac] sm:$0xff]
    %v2339 = vld [vmem:[%s7 + $0x1b4] sm:$0xff]
    %v2340 = vld [vmem:[%s7 + $0x1bc] sm:$0xf]
    %v2341 = vld [vmem:[%s7 + $0x1c0] sm:$0xff]
    %v2342 = vld [vmem:[%s7 + $0x1c8] sm:$0xff]
    %v2343 = vld [vmem:[%s7 + $0x1d0] sm:$0xff]
    %v2344 = vld [vmem:[%s7 + $0x1d8] sm:$0xf]
    %v2345 = vld [vmem:[%s7 + $0x1dc] sm:$0xff]
    %v2346 = vld [vmem:[%s7 + $0x1e4] sm:$0xff]
    %v2347 = vld [vmem:[%s7 + $0x1ec] sm:$0xff]
    %v2348 = vld [vmem:[%s7 + $0x1f4] sm:$0xf]
    %v2349 = vld [vmem:[%s7 + $0x1f8] sm:$0xff]
    %v2350 = vld [vmem:[%s7 + $0x200] sm:$0xff]
    %v2351 = vld [vmem:[%s7 + $0x208] sm:$0xff]
    %v2352 = vld [vmem:[%s7 + $0x210] sm:$0xf]
    %v2353 = vld [vmem:[%s7 + $0x214] sm:$0xff]
    %v2354 = vld [vmem:[%s7 + $0x21c] sm:$0xff]
    %v2355 = vld [vmem:[%s7 + $0x224] sm:$0xff]
    %v2356 = vld [vmem:[%s7 + $0x22c] sm:$0xf]
    %v2357 = vld [vmem:[%s7 + $0x230] sm:$0xff]
    %v2358 = vld [vmem:[%s7 + $0x238] sm:$0xff]
    %v2359 = vld [vmem:[%s7 + $0x240] sm:$0xff]
    %v2360 = vld [vmem:[%s7 + $0x248] sm:$0xf]
    %v2361 = vld [vmem:[%s7 + $0x24c] sm:$0xff]
    %v2362 = vld [vmem:[%s7 + $0x254] sm:$0xff]
    %v2363 = vld [vmem:[%s7 + $0x25c] sm:$0xff]
    %v2364 = vld [vmem:[%s7 + $0x264] sm:$0xf]
    %v2365 = vld [vmem:[%s7 + $0x268] sm:$0xff]
    %v2366 = vld [vmem:[%s7 + $0x270] sm:$0xff]
    %v2367 = vld [vmem:[%s7 + $0x278] sm:$0xff]
    %v2368 = vld [vmem:[%s7 + $0x280] sm:$0xf]
    %v2369 = vld [vmem:[%s7 + $0x284] sm:$0xff]
    %v2370 = vld [vmem:[%s7 + $0x28c] sm:$0xff]
    %v2371 = vld [vmem:[%s7 + $0x294] sm:$0xff]
    %v2372 = vld [vmem:[%s7 + $0x29c] sm:$0xf]
    %v2373 = vld [vmem:[%s7 + $0x2a0] sm:$0xff]
    %v2374 = vld [vmem:[%s7 + $0x2a8] sm:$0xff]
    %v2375 = vld [vmem:[%s7 + $0x2b0] sm:$0xff]
    %v2376 = vld [vmem:[%s7 + $0x2b8] sm:$0xf]
    %v2377 = vld [vmem:[%s7 + $0x2bc] sm:$0xff]
    %v2378 = vld [vmem:[%s7 + $0x2c4] sm:$0xff]
    %v2379 = vld [vmem:[%s7 + $0x2cc] sm:$0xff]
    %v2380 = vld [vmem:[%s7 + $0x2d4] sm:$0xf]
    %v2381 = vld [vmem:[%s7 + $0x2d8] sm:$0xff]
    %v2382 = vld [vmem:[%s7 + $0x2e0] sm:$0xff]
    %v2383 = vld [vmem:[%s7 + $0x2e8] sm:$0xff]
    %v2384 = vld [vmem:[%s7 + $0x2f0] sm:$0xf]
    %v2385 = vld [vmem:[%s7 + $0x2f4] sm:$0xff]
    %v2386 = vld [vmem:[%s7 + $0x2fc] sm:$0xff]
    %v2387 = vld [vmem:[%s7 + $0x304] sm:$0xff]
    %v2388 = vld [vmem:[%s7 + $0x30c] sm:$0xf]
    %v2389 = vld [vmem:[%s7 + $0x310] sm:$0xff]
    %v2390 = vld [vmem:[%s7 + $0x318] sm:$0xff]
    %v2391 = vld [vmem:[%s7 + $0x320] sm:$0xff]
    %v2392 = vld [vmem:[%s7 + $0x328] sm:$0xf]
    %v2393 = vld [vmem:[%s7 + $0x32c] sm:$0xff]
    %v2394 = vld [vmem:[%s7 + $0x334] sm:$0xff]
    %v2395 = vld [vmem:[%s7 + $0x33c] sm:$0xff]
    %v2396 = vld [vmem:[%s7 + $0x344] sm:$0xf]
    %v2397 = vld [vmem:[%s7 + $0x348] sm:$0xff]
    %v2398 = vld [vmem:[%s7 + $0x350] sm:$0xff]
    %v2399 = vld [vmem:[%s7 + $0x358] sm:$0xff]
    %v2400 = vld [vmem:[%s7 + $0x360] sm:$0xf]
    %v2401 = vld [vmem:[%s7 + $0x364] sm:$0xff]
    %v2402 = vld [vmem:[%s7 + $0x36c] sm:$0xff]
    %v2403 = vld [vmem:[%s7 + $0x374] sm:$0xff]
    %v2404 = vld [vmem:[%s7 + $0x37c] sm:$0xf]
    %v2405 = vld [vmem:[%s7 + $0x380] sm:$0xff]
    %v2406 = vld [vmem:[%s7 + $0x388] sm:$0xff]
    %v2407 = vld [vmem:[%s7 + $0x390] sm:$0xff]
    %v2408 = vld [vmem:[%s7 + $0x398] sm:$0xf]
    %v2409 = vld [vmem:[%s7 + $0x39c] sm:$0xff]
    %v2410 = vld [vmem:[%s7 + $0x3a4] sm:$0xff]
    %v2411 = vld [vmem:[%s7 + $0x3ac] sm:$0xff]
    %v2412 = vld [vmem:[%s7 + $0x3b4] sm:$0xf]
    %v2413 = vld [vmem:[%s7 + $0x3b8] sm:$0xff]
    %v2414 = vld [vmem:[%s7 + $0x3c0] sm:$0xff]
    %v2415 = vld [vmem:[%s7 + $0x3c8] sm:$0xff]
    %v2416 = vld [vmem:[%s7 + $0x3d0] sm:$0xf]
    %v2417 = vld [vmem:[%s7 + $0x3d4] sm:$0xff]
    %v2418 = vld [vmem:[%s7 + $0x3dc] sm:$0xff]
    %v2419 = vld [vmem:[%s7 + $0x3e4] sm:$0xff]
    %v2420 = vld [vmem:[%s7 + $0x3ec] sm:$0xf]
    %v2421 = vld [vmem:[%s7 + $0x3f0] sm:$0xff]
    %v2422 = vld [vmem:[%s7 + $0x3f8] sm:$0xff]
    %v2423 = vld [vmem:[%s7 + $0x400] sm:$0xff]
    %v2424 = vld [vmem:[%s7 + $0x408] sm:$0xf]
    %v2425 = vld [vmem:[%s7 + $0x40c] sm:$0xff]
    %v2426 = vld [vmem:[%s7 + $0x414] sm:$0xff]
    %v2427 = vld [vmem:[%s7 + $0x41c] sm:$0xff]
    %v2428 = vld [vmem:[%s7 + $0x424] sm:$0xf]
    %v2429 = vld [vmem:[%s7 + $0x428] sm:$0xff]
    %v2430 = vld [vmem:[%s7 + $0x430] sm:$0xff]
    %v2431 = vld [vmem:[%s7 + $0x438] sm:$0xff]
    %v2432 = vld [vmem:[%s7 + $0x440] sm:$0xf]
    %v2433 = vld [vmem:[%s7 + $0x444] sm:$0xff]
    %v2434 = vld [vmem:[%s7 + $0x44c] sm:$0xff]
    %v2435 = vld [vmem:[%s7 + $0x454] sm:$0xff]
    %v2436 = vld [vmem:[%s7 + $0x45c] sm:$0xf]
    %v2437 = vld [vmem:[%s7 + $0x460] sm:$0xff]
    %v2438 = vld [vmem:[%s7 + $0x468] sm:$0xff]
    %v2439 = vld [vmem:[%s7 + $0x470] sm:$0xff]
    %v2440 = vld [vmem:[%s7 + $0x478] sm:$0xf]
    %v2441 = vld [vmem:[%s7 + $0x47c] sm:$0xff]
    %v2442 = vld [vmem:[%s7 + $0x484] sm:$0xff]
    %v2443 = vld [vmem:[%s7 + $0x48c] sm:$0xff]
    %v2444 = vld [vmem:[%s7 + $0x494] sm:$0xf]
    %v2445 = vld [vmem:[%s7 + $0x498] sm:$0xff]
    %v2446 = vld [vmem:[%s7 + $0x4a0] sm:$0xff]
    %v2447 = vld [vmem:[%s7 + $0x4a8] sm:$0xff]
    %v2448 = vld [vmem:[%s7 + $0x4b0] sm:$0xf]
    %v2449 = vld [vmem:[%s7 + $0x4b4] sm:$0xff]
    %v2450 = vld [vmem:[%s7 + $0x4bc] sm:$0xff]
    %v2451 = vld [vmem:[%s7 + $0x4c4] sm:$0xff]
    %v2452 = vld [vmem:[%s7 + $0x4cc] sm:$0xf]
    %v2453 = vld [vmem:[%s7 + $0x4d0] sm:$0xff]
    %v2454 = vld [vmem:[%s7 + $0x4d8] sm:$0xff]
    %v2455 = vld [vmem:[%s7 + $0x4e0] sm:$0xff]
    %v2456 = vld [vmem:[%s7 + $0x4e8] sm:$0xf]
    %v2457 = vld [vmem:[%s7 + $0x4ec] sm:$0xff]
    %v2458 = vld [vmem:[%s7 + $0x4f4] sm:$0xff]
    %v2459 = vld [vmem:[%s7 + $0x4fc] sm:$0xff]
    %v2460 = vld [vmem:[%s7 + $0x504] sm:$0xf]
    %v2461 = vld [vmem:[%s7 + $0x508] sm:$0xff]
    %v2462 = vld [vmem:[%s7 + $0x510] sm:$0xff]
    %v2463 = vld [vmem:[%s7 + $0x518] sm:$0xff]
    %v2464 = vld [vmem:[%s7 + $0x520] sm:$0xf]
    %v2465 = vld [vmem:[%s7 + $0x524] sm:$0xff]
    %v2466 = vld [vmem:[%s7 + $0x52c] sm:$0xff]
    %v2467 = vld [vmem:[%s7 + $0x534] sm:$0xff]
    %v2468 = vld [vmem:[%s7 + $0x53c] sm:$0xf]
    %v2469 = vld [vmem:[%s7 + $0x540] sm:$0xff]
    %v2470 = vld [vmem:[%s7 + $0x548] sm:$0xff]
    %v2471 = vld [vmem:[%s7 + $0x550] sm:$0xff]
    %v2472 = vld [vmem:[%s7 + $0x558] sm:$0xf]
    %v2473 = vld [vmem:[%s7 + $0x55c] sm:$0xff]
    %v2474 = vld [vmem:[%s7 + $0x564] sm:$0xff]
    %v2475 = vld [vmem:[%s7 + $0x56c] sm:$0xff]
    %v2476 = vld [vmem:[%s7 + $0x574] sm:$0xf]
    %v2477 = vld [vmem:[%s7 + $0x578] sm:$0xff]
    %v2478 = vld [vmem:[%s7 + $0x580] sm:$0xff]
    %v2479 = vld [vmem:[%s7 + $0x588] sm:$0xff]
    %v2480 = vld [vmem:[%s7 + $0x590] sm:$0xf]
    %v2481 = vld [vmem:[%s7 + $0x594] sm:$0xff]
    %v2482 = vld [vmem:[%s7 + $0x59c] sm:$0xff]
    %v2483 = vld [vmem:[%s7 + $0x5a4] sm:$0xff]
    %v2484 = vld [vmem:[%s7 + $0x5ac] sm:$0xf]
    %v2485 = vld [vmem:[%s7 + $0x5b0] sm:$0xff]
    %v2486 = vld [vmem:[%s7 + $0x5b8] sm:$0xff]
    %v2487 = vld [vmem:[%s7 + $0x5c0] sm:$0xff]
    %v2488 = vld [vmem:[%s7 + $0x5c8] sm:$0xf]
    %v2489 = vld [vmem:[%s7 + $0x5cc] sm:$0xff]
    %v2490 = vld [vmem:[%s7 + $0x5d4] sm:$0xff]
    %v2491 = vld [vmem:[%s7 + $0x5dc] sm:$0xff]
    %v2492 = vld [vmem:[%s7 + $0x5e4] sm:$0xf]
    %v2493 = vld [vmem:[%s7 + $0x5e8] sm:$0xff]
    %v2494 = vld [vmem:[%s7 + $0x5f0] sm:$0xff]
    %v2495 = vld [vmem:[%s7 + $0x5f8] sm:$0xff]
    %v2496 = vld [vmem:[%s7 + $0x600] sm:$0xf]
    %v2497 = vld [vmem:[%s7 + $0x604] sm:$0xff]
    %v2498 = vld [vmem:[%s7 + $0x60c] sm:$0xff]
    %v2499 = vld [vmem:[%s7 + $0x614] sm:$0xff]
    %v2500 = vld [vmem:[%s7 + $0x61c] sm:$0xf]
    %v2501 = vld [vmem:[%s7 + $0x620] sm:$0xff]
    %v2502 = vld [vmem:[%s7 + $0x628] sm:$0xff]
    %v2503 = vld [vmem:[%s7 + $0x630] sm:$0xff]
    %v2504 = vld [vmem:[%s7 + $0x638] sm:$0xf]
    %v2505 = vld [vmem:[%s7 + $0x63c] sm:$0xff]
    %v2506 = vld [vmem:[%s7 + $0x644] sm:$0xff]
    %v2507 = vld [vmem:[%s7 + $0x64c] sm:$0xff]
    %v2508 = vld [vmem:[%s7 + $0x654] sm:$0xf]
    %v2509 = vld [vmem:[%s7 + $0x658] sm:$0xff]
    %v2510 = vld [vmem:[%s7 + $0x660] sm:$0xff]
    %v2511 = vld [vmem:[%s7 + $0x668] sm:$0xff]
    %v2512 = vld [vmem:[%s7 + $0x670] sm:$0xf]
    %v2513 = vld [vmem:[%s7 + $0x674] sm:$0xff]
    %v2514 = vld [vmem:[%s7 + $0x67c] sm:$0xff]
    %v2515 = vld [vmem:[%s7 + $0x684] sm:$0xff]
    %v2516 = vld [vmem:[%s7 + $0x68c] sm:$0xf]
    %v2517 = vld [vmem:[%s7 + $0x690] sm:$0xff]
    %v2518 = vld [vmem:[%s7 + $0x698] sm:$0xff]
    %v2519 = vld [vmem:[%s7 + $0x6a0] sm:$0xff]
    %v2520 = vld [vmem:[%s7 + $0x6a8] sm:$0xf]
    %v2521 = vld [vmem:[%s7 + $0x6ac] sm:$0xff]
    %v2522 = vld [vmem:[%s7 + $0x6b4] sm:$0xff]
    %v2523 = vld [vmem:[%s7 + $0x6bc] sm:$0xff]
    %v2524 = vld [vmem:[%s7 + $0x6c4] sm:$0xf]
    %v2525 = vld [vmem:[%s7 + $0x6c8] sm:$0xff]
    %v2526 = vld [vmem:[%s7 + $0x6d0] sm:$0xff]
    %v2527 = vld [vmem:[%s7 + $0x6d8] sm:$0xff]
    %v2528 = vld [vmem:[%s7 + $0x6e0] sm:$0xf]
    %v2529 = vld [vmem:[%s7 + $0x6e4] sm:$0xff]
    %v2530 = vld [vmem:[%s7 + $0x6ec] sm:$0xff]
    %v2531 = vld [vmem:[%s7 + $0x6f4] sm:$0xff]
    %v2532 = vld [vmem:[%s7 + $0x6fc] sm:$0xf]
    %v2533 = vld [vmem:[%s8] sm:$0x7f]
    %v2535 = vlaneseq
    %v2536 = vshrl.u32 %v2535, 7
    %v2537 = vsub.s32 0, %v2536
    %v2538 = vrot.slane %v2533, %v2537
    %v2539 = vlaneseq
    %v2540 = vshrl.u32 %v2539, 7
    %v2541 = vsub.s32 1, %v2540
    %v2542 = vrot.slane %v2533, %v2541
    %v2543 = vlaneseq
    %v2544 = vshrl.u32 %v2543, 7
    %v2545 = vsub.s32 2, %v2544
    %v2546 = vrot.slane %v2533, %v2545
    %v2547 = vlaneseq
    %v2548 = vshrl.u32 %v2547, 7
    %v2549 = vsub.s32 3, %v2548
    %v2550 = vrot.slane %v2533, %v2549
    %v2551 = vlaneseq
    %v2552 = vshrl.u32 %v2551, 7
    %v2553 = vsub.s32 4, %v2552
    %v2554 = vrot.slane %v2533, %v2553
    %v2555 = vlaneseq
    %v2556 = vshrl.u32 %v2555, 7
    %v2557 = vsub.s32 5, %v2556
    %v2558 = vrot.slane %v2533, %v2557
    %v2559 = vlaneseq
    %v2560 = vshrl.u32 %v2559, 7
    %v2561 = vsub.s32 6, %v2560
    %v2562 = vrot.slane %v2533, %v2561
    %v2826 = vunpack.c.l.b16 %v2277
    %v2827 = vunpack.c.h.b16 %v2277
    %v2828 = vunpack.c.l.b16 %v2278
    %v2829 = vunpack.c.h.b16 %v2278
    %v2830 = vunpack.c.l.b16 %v2279
    %v2831 = vunpack.c.h.b16 %v2279
    %v2832 = vunpack.c.l.b16 %v2280
    %v2833 = vunpack.c.l.b16 %v2281
    %v2834 = vunpack.c.h.b16 %v2281
    %v2835 = vunpack.c.l.b16 %v2282
    %v2836 = vunpack.c.h.b16 %v2282
    %v2837 = vunpack.c.l.b16 %v2283
    %v2838 = vunpack.c.h.b16 %v2283
    %v2839 = vunpack.c.l.b16 %v2284
    %v2840 = vunpack.c.l.b16 %v2285
    %v2841 = vunpack.c.h.b16 %v2285
    %v2842 = vunpack.c.l.b16 %v2286
    %v2843 = vunpack.c.h.b16 %v2286
    %v2844 = vunpack.c.l.b16 %v2287
    %v2845 = vunpack.c.h.b16 %v2287
    %v2846 = vunpack.c.l.b16 %v2288
    %v2847 = vunpack.c.l.b16 %v2289
    %v2848 = vunpack.c.h.b16 %v2289
    %v2849 = vunpack.c.l.b16 %v2290
    %v2850 = vunpack.c.h.b16 %v2290
    %v2851 = vunpack.c.l.b16 %v2291
    %v2852 = vunpack.c.h.b16 %v2291
    %v2853 = vunpack.c.l.b16 %v2292
    %v2854 = vunpack.c.l.b16 %v2293
    %v2855 = vunpack.c.h.b16 %v2293
    %v2856 = vunpack.c.l.b16 %v2294
    %v2857 = vunpack.c.h.b16 %v2294
    %v2858 = vunpack.c.l.b16 %v2295
    %v2859 = vunpack.c.h.b16 %v2295
    %v2860 = vunpack.c.l.b16 %v2296
    %v2861 = vunpack.c.l.b16 %v2297
    %v2862 = vunpack.c.h.b16 %v2297
    %v2863 = vunpack.c.l.b16 %v2298
    %v2864 = vunpack.c.h.b16 %v2298
    %v2865 = vunpack.c.l.b16 %v2299
    %v2866 = vunpack.c.h.b16 %v2299
    %v2867 = vunpack.c.l.b16 %v2300
    %v2868 = vunpack.c.l.b16 %v2301
    %v2869 = vunpack.c.h.b16 %v2301
    %v2870 = vunpack.c.l.b16 %v2302
    %v2871 = vunpack.c.h.b16 %v2302
    %v2872 = vunpack.c.l.b16 %v2303
    %v2873 = vunpack.c.h.b16 %v2303
    %v2874 = vunpack.c.l.b16 %v2304
    %v2875 = vunpack.c.l.b16 %v2305
    %v2876 = vunpack.c.h.b16 %v2305
    %v2877 = vunpack.c.l.b16 %v2306
    %v2878 = vunpack.c.h.b16 %v2306
    %v2879 = vunpack.c.l.b16 %v2307
    %v2880 = vunpack.c.h.b16 %v2307
    %v2881 = vunpack.c.l.b16 %v2308
    %v2882 = vunpack.c.l.b16 %v2309
    %v2883 = vunpack.c.h.b16 %v2309
    %v2884 = vunpack.c.l.b16 %v2310
    %v2885 = vunpack.c.h.b16 %v2310
    %v2886 = vunpack.c.l.b16 %v2311
    %v2887 = vunpack.c.h.b16 %v2311
    %v2888 = vunpack.c.l.b16 %v2312
    %v2889 = vunpack.c.l.b16 %v2313
    %v2890 = vunpack.c.h.b16 %v2313
    %v2891 = vunpack.c.l.b16 %v2314
    %v2892 = vunpack.c.h.b16 %v2314
    %v2893 = vunpack.c.l.b16 %v2315
    %v2894 = vunpack.c.h.b16 %v2315
    %v2895 = vunpack.c.l.b16 %v2316
    %v2896 = vunpack.c.l.b16 %v2317
    %v2897 = vunpack.c.h.b16 %v2317
    %v2898 = vunpack.c.l.b16 %v2318
    %v2899 = vunpack.c.h.b16 %v2318
    %v2900 = vunpack.c.l.b16 %v2319
    %v2901 = vunpack.c.h.b16 %v2319
    %v2902 = vunpack.c.l.b16 %v2320
    %v2903 = vunpack.c.l.b16 %v2321
    %v2904 = vunpack.c.h.b16 %v2321
    %v2905 = vunpack.c.l.b16 %v2322
    %v2906 = vunpack.c.h.b16 %v2322
    %v2907 = vunpack.c.l.b16 %v2323
    %v2908 = vunpack.c.h.b16 %v2323
    %v2909 = vunpack.c.l.b16 %v2324
    %v2910 = vunpack.c.l.b16 %v2325
    %v2911 = vunpack.c.h.b16 %v2325
    %v2912 = vunpack.c.l.b16 %v2326
    %v2913 = vunpack.c.h.b16 %v2326
    %v2914 = vunpack.c.l.b16 %v2327
    %v2915 = vunpack.c.h.b16 %v2327
    %v2916 = vunpack.c.l.b16 %v2328
    %v2917 = vunpack.c.l.b16 %v2329
    %v2918 = vunpack.c.h.b16 %v2329
    %v2919 = vunpack.c.l.b16 %v2330
    %v2920 = vunpack.c.h.b16 %v2330
    %v2921 = vunpack.c.l.b16 %v2331
    %v2922 = vunpack.c.h.b16 %v2331
    %v2923 = vunpack.c.l.b16 %v2332
    %v2924 = vunpack.c.l.b16 %v2333
    %v2925 = vunpack.c.h.b16 %v2333
    %v2926 = vunpack.c.l.b16 %v2334
    %v2927 = vunpack.c.h.b16 %v2334
    %v2928 = vunpack.c.l.b16 %v2335
    %v2929 = vunpack.c.h.b16 %v2335
    %v2930 = vunpack.c.l.b16 %v2336
    %v2931 = vunpack.c.l.b16 %v2337
    %v2932 = vunpack.c.h.b16 %v2337
    %v2933 = vunpack.c.l.b16 %v2338
    %v2934 = vunpack.c.h.b16 %v2338
    %v2935 = vunpack.c.l.b16 %v2339
    %v2936 = vunpack.c.h.b16 %v2339
    %v2937 = vunpack.c.l.b16 %v2340
    %v2938 = vunpack.c.l.b16 %v2341
    %v2939 = vunpack.c.h.b16 %v2341
    %v2940 = vunpack.c.l.b16 %v2342
    %v2941 = vunpack.c.h.b16 %v2342
    %v2942 = vunpack.c.l.b16 %v2343
    %v2943 = vunpack.c.h.b16 %v2343
    %v2944 = vunpack.c.l.b16 %v2344
    %v2945 = vunpack.c.l.b16 %v2345
    %v2946 = vunpack.c.h.b16 %v2345
    %v2947 = vunpack.c.l.b16 %v2346
    %v2948 = vunpack.c.h.b16 %v2346
    %v2949 = vunpack.c.l.b16 %v2347
    %v2950 = vunpack.c.h.b16 %v2347
    %v2951 = vunpack.c.l.b16 %v2348
    %v2952 = vunpack.c.l.b16 %v2349
    %v2953 = vunpack.c.h.b16 %v2349
    %v2954 = vunpack.c.l.b16 %v2350
    %v2955 = vunpack.c.h.b16 %v2350
    %v2956 = vunpack.c.l.b16 %v2351
    %v2957 = vunpack.c.h.b16 %v2351
    %v2958 = vunpack.c.l.b16 %v2352
    %v2959 = vunpack.c.l.b16 %v2353
    %v2960 = vunpack.c.h.b16 %v2353
    %v2961 = vunpack.c.l.b16 %v2354
    %v2962 = vunpack.c.h.b16 %v2354
    %v2963 = vunpack.c.l.b16 %v2355
    %v2964 = vunpack.c.h.b16 %v2355
    %v2965 = vunpack.c.l.b16 %v2356
    %v2966 = vunpack.c.l.b16 %v2357
    %v2967 = vunpack.c.h.b16 %v2357
    %v2968 = vunpack.c.l.b16 %v2358
    %v2969 = vunpack.c.h.b16 %v2358
    %v2970 = vunpack.c.l.b16 %v2359
    %v2971 = vunpack.c.h.b16 %v2359
    %v2972 = vunpack.c.l.b16 %v2360
    %v2973 = vunpack.c.l.b16 %v2361
    %v2974 = vunpack.c.h.b16 %v2361
    %v2975 = vunpack.c.l.b16 %v2362
    %v2976 = vunpack.c.h.b16 %v2362
    %v2977 = vunpack.c.l.b16 %v2363
    %v2978 = vunpack.c.h.b16 %v2363
    %v2979 = vunpack.c.l.b16 %v2364
    %v2980 = vunpack.c.l.b16 %v2365
    %v2981 = vunpack.c.h.b16 %v2365
    %v2982 = vunpack.c.l.b16 %v2366
    %v2983 = vunpack.c.h.b16 %v2366
    %v2984 = vunpack.c.l.b16 %v2367
    %v2985 = vunpack.c.h.b16 %v2367
    %v2986 = vunpack.c.l.b16 %v2368
    %v2987 = vunpack.c.l.b16 %v2369
    %v2988 = vunpack.c.h.b16 %v2369
    %v2989 = vunpack.c.l.b16 %v2370
    %v2990 = vunpack.c.h.b16 %v2370
    %v2991 = vunpack.c.l.b16 %v2371
    %v2992 = vunpack.c.h.b16 %v2371
    %v2993 = vunpack.c.l.b16 %v2372
    %v2994 = vunpack.c.l.b16 %v2373
    %v2995 = vunpack.c.h.b16 %v2373
    %v2996 = vunpack.c.l.b16 %v2374
    %v2997 = vunpack.c.h.b16 %v2374
    %v2998 = vunpack.c.l.b16 %v2375
    %v2999 = vunpack.c.h.b16 %v2375
    %v3000 = vunpack.c.l.b16 %v2376
    %v3001 = vunpack.c.l.b16 %v2377
    %v3002 = vunpack.c.h.b16 %v2377
    %v3003 = vunpack.c.l.b16 %v2378
    %v3004 = vunpack.c.h.b16 %v2378
    %v3005 = vunpack.c.l.b16 %v2379
    %v3006 = vunpack.c.h.b16 %v2379
    %v3007 = vunpack.c.l.b16 %v2380
    %v3008 = vunpack.c.l.b16 %v2381
    %v3009 = vunpack.c.h.b16 %v2381
    %v3010 = vunpack.c.l.b16 %v2382
    %v3011 = vunpack.c.h.b16 %v2382
    %v3012 = vunpack.c.l.b16 %v2383
    %v3013 = vunpack.c.h.b16 %v2383
    %v3014 = vunpack.c.l.b16 %v2384
    %v3015 = vunpack.c.l.b16 %v2385
    %v3016 = vunpack.c.h.b16 %v2385
    %v3017 = vunpack.c.l.b16 %v2386
    %v3018 = vunpack.c.h.b16 %v2386
    %v3019 = vunpack.c.l.b16 %v2387
    %v3020 = vunpack.c.h.b16 %v2387
    %v3021 = vunpack.c.l.b16 %v2388
    %v3022 = vunpack.c.l.b16 %v2389
    %v3023 = vunpack.c.h.b16 %v2389
    %v3024 = vunpack.c.l.b16 %v2390
    %v3025 = vunpack.c.h.b16 %v2390
    %v3026 = vunpack.c.l.b16 %v2391
    %v3027 = vunpack.c.h.b16 %v2391
    %v3028 = vunpack.c.l.b16 %v2392
    %v3029 = vunpack.c.l.b16 %v2393
    %v3030 = vunpack.c.h.b16 %v2393
    %v3031 = vunpack.c.l.b16 %v2394
    %v3032 = vunpack.c.h.b16 %v2394
    %v3033 = vunpack.c.l.b16 %v2395
    %v3034 = vunpack.c.h.b16 %v2395
    %v3035 = vunpack.c.l.b16 %v2396
    %v3036 = vunpack.c.l.b16 %v2397
    %v3037 = vunpack.c.h.b16 %v2397
    %v3038 = vunpack.c.l.b16 %v2398
    %v3039 = vunpack.c.h.b16 %v2398
    %v3040 = vunpack.c.l.b16 %v2399
    %v3041 = vunpack.c.h.b16 %v2399
    %v3042 = vunpack.c.l.b16 %v2400
    %v3043 = vunpack.c.l.b16 %v2401
    %v3044 = vunpack.c.h.b16 %v2401
    %v3045 = vunpack.c.l.b16 %v2402
    %v3046 = vunpack.c.h.b16 %v2402
    %v3047 = vunpack.c.l.b16 %v2403
    %v3048 = vunpack.c.h.b16 %v2403
    %v3049 = vunpack.c.l.b16 %v2404
    %v3050 = vunpack.c.l.b16 %v2405
    %v3051 = vunpack.c.h.b16 %v2405
    %v3052 = vunpack.c.l.b16 %v2406
    %v3053 = vunpack.c.h.b16 %v2406
    %v3054 = vunpack.c.l.b16 %v2407
    %v3055 = vunpack.c.h.b16 %v2407
    %v3056 = vunpack.c.l.b16 %v2408
    %v3057 = vunpack.c.l.b16 %v2409
    %v3058 = vunpack.c.h.b16 %v2409
    %v3059 = vunpack.c.l.b16 %v2410
    %v3060 = vunpack.c.h.b16 %v2410
    %v3061 = vunpack.c.l.b16 %v2411
    %v3062 = vunpack.c.h.b16 %v2411
    %v3063 = vunpack.c.l.b16 %v2412
    %v3064 = vunpack.c.l.b16 %v2413
    %v3065 = vunpack.c.h.b16 %v2413
    %v3066 = vunpack.c.l.b16 %v2414
    %v3067 = vunpack.c.h.b16 %v2414
    %v3068 = vunpack.c.l.b16 %v2415
    %v3069 = vunpack.c.h.b16 %v2415
    %v3070 = vunpack.c.l.b16 %v2416
    %v3071 = vunpack.c.l.b16 %v2417
    %v3072 = vunpack.c.h.b16 %v2417
    %v3073 = vunpack.c.l.b16 %v2418
    %v3074 = vunpack.c.h.b16 %v2418
    %v3075 = vunpack.c.l.b16 %v2419
    %v3076 = vunpack.c.h.b16 %v2419
    %v3077 = vunpack.c.l.b16 %v2420
    %v3078 = vunpack.c.l.b16 %v2421
    %v3079 = vunpack.c.h.b16 %v2421
    %v3080 = vunpack.c.l.b16 %v2422
    %v3081 = vunpack.c.h.b16 %v2422
    %v3082 = vunpack.c.l.b16 %v2423
    %v3083 = vunpack.c.h.b16 %v2423
    %v3084 = vunpack.c.l.b16 %v2424
    %v3085 = vunpack.c.l.b16 %v2425
    %v3086 = vunpack.c.h.b16 %v2425
    %v3087 = vunpack.c.l.b16 %v2426
    %v3088 = vunpack.c.h.b16 %v2426
    %v3089 = vunpack.c.l.b16 %v2427
    %v3090 = vunpack.c.h.b16 %v2427
    %v3091 = vunpack.c.l.b16 %v2428
    %v3092 = vunpack.c.l.b16 %v2429
    %v3093 = vunpack.c.h.b16 %v2429
    %v3094 = vunpack.c.l.b16 %v2430
    %v3095 = vunpack.c.h.b16 %v2430
    %v3096 = vunpack.c.l.b16 %v2431
    %v3097 = vunpack.c.h.b16 %v2431
    %v3098 = vunpack.c.l.b16 %v2432
    %v3099 = vunpack.c.l.b16 %v2433
    %v3100 = vunpack.c.h.b16 %v2433
    %v3101 = vunpack.c.l.b16 %v2434
    %v3102 = vunpack.c.h.b16 %v2434
    %v3103 = vunpack.c.l.b16 %v2435
    %v3104 = vunpack.c.h.b16 %v2435
    %v3105 = vunpack.c.l.b16 %v2436
    %v3106 = vunpack.c.l.b16 %v2437
    %v3107 = vunpack.c.h.b16 %v2437
    %v3108 = vunpack.c.l.b16 %v2438
    %v3109 = vunpack.c.h.b16 %v2438
    %v3110 = vunpack.c.l.b16 %v2439
    %v3111 = vunpack.c.h.b16 %v2439
    %v3112 = vunpack.c.l.b16 %v2440
    %v3113 = vunpack.c.l.b16 %v2441
    %v3114 = vunpack.c.h.b16 %v2441
    %v3115 = vunpack.c.l.b16 %v2442
    %v3116 = vunpack.c.h.b16 %v2442
    %v3117 = vunpack.c.l.b16 %v2443
    %v3118 = vunpack.c.h.b16 %v2443
    %v3119 = vunpack.c.l.b16 %v2444
    %v3120 = vunpack.c.l.b16 %v2445
    %v3121 = vunpack.c.h.b16 %v2445
    %v3122 = vunpack.c.l.b16 %v2446
    %v3123 = vunpack.c.h.b16 %v2446
    %v3124 = vunpack.c.l.b16 %v2447
    %v3125 = vunpack.c.h.b16 %v2447
    %v3126 = vunpack.c.l.b16 %v2448
    %v3127 = vunpack.c.l.b16 %v2449
    %v3128 = vunpack.c.h.b16 %v2449
    %v3129 = vunpack.c.l.b16 %v2450
    %v3130 = vunpack.c.h.b16 %v2450
    %v3131 = vunpack.c.l.b16 %v2451
    %v3132 = vunpack.c.h.b16 %v2451
    %v3133 = vunpack.c.l.b16 %v2452
    %v3134 = vunpack.c.l.b16 %v2453
    %v3135 = vunpack.c.h.b16 %v2453
    %v3136 = vunpack.c.l.b16 %v2454
    %v3137 = vunpack.c.h.b16 %v2454
    %v3138 = vunpack.c.l.b16 %v2455
    %v3139 = vunpack.c.h.b16 %v2455
    %v3140 = vunpack.c.l.b16 %v2456
    %v3141 = vunpack.c.l.b16 %v2457
    %v3142 = vunpack.c.h.b16 %v2457
    %v3143 = vunpack.c.l.b16 %v2458
    %v3144 = vunpack.c.h.b16 %v2458
    %v3145 = vunpack.c.l.b16 %v2459
    %v3146 = vunpack.c.h.b16 %v2459
    %v3147 = vunpack.c.l.b16 %v2460
    %v3148 = vunpack.c.l.b16 %v2461
    %v3149 = vunpack.c.h.b16 %v2461
    %v3150 = vunpack.c.l.b16 %v2462
    %v3151 = vunpack.c.h.b16 %v2462
    %v3152 = vunpack.c.l.b16 %v2463
    %v3153 = vunpack.c.h.b16 %v2463
    %v3154 = vunpack.c.l.b16 %v2464
    %v3155 = vunpack.c.l.b16 %v2465
    %v3156 = vunpack.c.h.b16 %v2465
    %v3157 = vunpack.c.l.b16 %v2466
    %v3158 = vunpack.c.h.b16 %v2466
    %v3159 = vunpack.c.l.b16 %v2467
    %v3160 = vunpack.c.h.b16 %v2467
    %v3161 = vunpack.c.l.b16 %v2468
    %v3162 = vunpack.c.l.b16 %v2469
    %v3163 = vunpack.c.h.b16 %v2469
    %v3164 = vunpack.c.l.b16 %v2470
    %v3165 = vunpack.c.h.b16 %v2470
    %v3166 = vunpack.c.l.b16 %v2471
    %v3167 = vunpack.c.h.b16 %v2471
    %v3168 = vunpack.c.l.b16 %v2472
    %v3169 = vunpack.c.l.b16 %v2473
    %v3170 = vunpack.c.h.b16 %v2473
    %v3171 = vunpack.c.l.b16 %v2474
    %v3172 = vunpack.c.h.b16 %v2474
    %v3173 = vunpack.c.l.b16 %v2475
    %v3174 = vunpack.c.h.b16 %v2475
    %v3175 = vunpack.c.l.b16 %v2476
    %v3176 = vunpack.c.l.b16 %v2477
    %v3177 = vunpack.c.h.b16 %v2477
    %v3178 = vunpack.c.l.b16 %v2478
    %v3179 = vunpack.c.h.b16 %v2478
    %v3180 = vunpack.c.l.b16 %v2479
    %v3181 = vunpack.c.h.b16 %v2479
    %v3182 = vunpack.c.l.b16 %v2480
    %v3183 = vunpack.c.l.b16 %v2481
    %v3184 = vunpack.c.h.b16 %v2481
    %v3185 = vunpack.c.l.b16 %v2482
    %v3186 = vunpack.c.h.b16 %v2482
    %v3187 = vunpack.c.l.b16 %v2483
    %v3188 = vunpack.c.h.b16 %v2483
    %v3189 = vunpack.c.l.b16 %v2484
    %v3190 = vunpack.c.l.b16 %v2485
    %v3191 = vunpack.c.h.b16 %v2485
    %v3192 = vunpack.c.l.b16 %v2486
    %v3193 = vunpack.c.h.b16 %v2486
    %v3194 = vunpack.c.l.b16 %v2487
    %v3195 = vunpack.c.h.b16 %v2487
    %v3196 = vunpack.c.l.b16 %v2488
    %v3197 = vunpack.c.l.b16 %v2489
    %v3198 = vunpack.c.h.b16 %v2489
    %v3199 = vunpack.c.l.b16 %v2490
    %v3200 = vunpack.c.h.b16 %v2490
    %v3201 = vunpack.c.l.b16 %v2491
    %v3202 = vunpack.c.h.b16 %v2491
    %v3203 = vunpack.c.l.b16 %v2492
    %v3204 = vunpack.c.l.b16 %v2493
    %v3205 = vunpack.c.h.b16 %v2493
    %v3206 = vunpack.c.l.b16 %v2494
    %v3207 = vunpack.c.h.b16 %v2494
    %v3208 = vunpack.c.l.b16 %v2495
    %v3209 = vunpack.c.h.b16 %v2495
    %v3210 = vunpack.c.l.b16 %v2496
    %v3211 = vunpack.c.l.b16 %v2497
    %v3212 = vunpack.c.h.b16 %v2497
    %v3213 = vunpack.c.l.b16 %v2498
    %v3214 = vunpack.c.h.b16 %v2498
    %v3215 = vunpack.c.l.b16 %v2499
    %v3216 = vunpack.c.h.b16 %v2499
    %v3217 = vunpack.c.l.b16 %v2500
    %v3218 = vunpack.c.l.b16 %v2501
    %v3219 = vunpack.c.h.b16 %v2501
    %v3220 = vunpack.c.l.b16 %v2502
    %v3221 = vunpack.c.h.b16 %v2502
    %v3222 = vunpack.c.l.b16 %v2503
    %v3223 = vunpack.c.h.b16 %v2503
    %v3224 = vunpack.c.l.b16 %v2504
    %v3225 = vunpack.c.l.b16 %v2505
    %v3226 = vunpack.c.h.b16 %v2505
    %v3227 = vunpack.c.l.b16 %v2506
    %v3228 = vunpack.c.h.b16 %v2506
    %v3229 = vunpack.c.l.b16 %v2507
    %v3230 = vunpack.c.h.b16 %v2507
    %v3231 = vunpack.c.l.b16 %v2508
    %v3232 = vunpack.c.l.b16 %v2509
    %v3233 = vunpack.c.h.b16 %v2509
    %v3234 = vunpack.c.l.b16 %v2510
    %v3235 = vunpack.c.h.b16 %v2510
    %v3236 = vunpack.c.l.b16 %v2511
    %v3237 = vunpack.c.h.b16 %v2511
    %v3238 = vunpack.c.l.b16 %v2512
    %v3239 = vunpack.c.l.b16 %v2513
    %v3240 = vunpack.c.h.b16 %v2513
    %v3241 = vunpack.c.l.b16 %v2514
    %v3242 = vunpack.c.h.b16 %v2514
    %v3243 = vunpack.c.l.b16 %v2515
    %v3244 = vunpack.c.h.b16 %v2515
    %v3245 = vunpack.c.l.b16 %v2516
    %v3246 = vunpack.c.l.b16 %v2517
    %v3247 = vunpack.c.h.b16 %v2517
    %v3248 = vunpack.c.l.b16 %v2518
    %v3249 = vunpack.c.h.b16 %v2518
    %v3250 = vunpack.c.l.b16 %v2519
    %v3251 = vunpack.c.h.b16 %v2519
    %v3252 = vunpack.c.l.b16 %v2520
    %v3253 = vunpack.c.l.b16 %v2521
    %v3254 = vunpack.c.h.b16 %v2521
    %v3255 = vunpack.c.l.b16 %v2522
    %v3256 = vunpack.c.h.b16 %v2522
    %v3257 = vunpack.c.l.b16 %v2523
    %v3258 = vunpack.c.h.b16 %v2523
    %v3259 = vunpack.c.l.b16 %v2524
    %v3260 = vunpack.c.l.b16 %v2525
    %v3261 = vunpack.c.h.b16 %v2525
    %v3262 = vunpack.c.l.b16 %v2526
    %v3263 = vunpack.c.h.b16 %v2526
    %v3264 = vunpack.c.l.b16 %v2527
    %v3265 = vunpack.c.h.b16 %v2527
    %v3266 = vunpack.c.l.b16 %v2528
    %v3267 = vunpack.c.l.b16 %v2529
    %v3268 = vunpack.c.h.b16 %v2529
    %v3269 = vunpack.c.l.b16 %v2530
    %v3270 = vunpack.c.h.b16 %v2530
    %v3271 = vunpack.c.l.b16 %v2531
    %v3272 = vunpack.c.h.b16 %v2531
    %v3273 = vunpack.c.l.b16 %v2532
    %v3274 = vpack.c.b16 %v2833, %v2826
    %v3275 = vpack.c.b16 %v2834, %v2827
    %v3276 = vpack.c.b16 %v2835, %v2828
    %v3277 = vpack.c.b16 %v2836, %v2829
    %v3278 = vpack.c.b16 %v2837, %v2830
    %v3279 = vpack.c.b16 %v2838, %v2831
    %v3280 = vpack.c.b16 %v2839, %v2832
    %v3281 = vpack.c.b16 %v2847, %v2840
    %v3282 = vpack.c.b16 %v2848, %v2841
    %v3283 = vpack.c.b16 %v2849, %v2842
    %v3284 = vpack.c.b16 %v2850, %v2843
    %v3285 = vpack.c.b16 %v2851, %v2844
    %v3286 = vpack.c.b16 %v2852, %v2845
    %v3287 = vpack.c.b16 %v2853, %v2846
    %v3288 = vpack.c.b16 %v2861, %v2854
    %v3289 = vpack.c.b16 %v2862, %v2855
    %v3290 = vpack.c.b16 %v2863, %v2856
    %v3291 = vpack.c.b16 %v2864, %v2857
    %v3292 = vpack.c.b16 %v2865, %v2858
    %v3293 = vpack.c.b16 %v2866, %v2859
    %v3294 = vpack.c.b16 %v2867, %v2860
    %v3295 = vpack.c.b16 %v2875, %v2868
    %v3296 = vpack.c.b16 %v2876, %v2869
    %v3297 = vpack.c.b16 %v2877, %v2870
    %v3298 = vpack.c.b16 %v2878, %v2871
    %v3299 = vpack.c.b16 %v2879, %v2872
    %v3300 = vpack.c.b16 %v2880, %v2873
    %v3301 = vpack.c.b16 %v2881, %v2874
    %v3302 = vpack.c.b16 %v2889, %v2882
    %v3303 = vpack.c.b16 %v2890, %v2883
    %v3304 = vpack.c.b16 %v2891, %v2884
    %v3305 = vpack.c.b16 %v2892, %v2885
    %v3306 = vpack.c.b16 %v2893, %v2886
    %v3307 = vpack.c.b16 %v2894, %v2887
    %v3308 = vpack.c.b16 %v2895, %v2888
    %v3309 = vpack.c.b16 %v2903, %v2896
    %v3310 = vpack.c.b16 %v2904, %v2897
    %v3311 = vpack.c.b16 %v2905, %v2898
    %v3312 = vpack.c.b16 %v2906, %v2899
    %v3313 = vpack.c.b16 %v2907, %v2900
    %v3314 = vpack.c.b16 %v2908, %v2901
    %v3315 = vpack.c.b16 %v2909, %v2902
    %v3316 = vpack.c.b16 %v2917, %v2910
    %v3317 = vpack.c.b16 %v2918, %v2911
    %v3318 = vpack.c.b16 %v2919, %v2912
    %v3319 = vpack.c.b16 %v2920, %v2913
    %v3320 = vpack.c.b16 %v2921, %v2914
    %v3321 = vpack.c.b16 %v2922, %v2915
    %v3322 = vpack.c.b16 %v2923, %v2916
    %v3323 = vpack.c.b16 %v2931, %v2924
    %v3324 = vpack.c.b16 %v2932, %v2925
    %v3325 = vpack.c.b16 %v2933, %v2926
    %v3326 = vpack.c.b16 %v2934, %v2927
    %v3327 = vpack.c.b16 %v2935, %v2928
    %v3328 = vpack.c.b16 %v2936, %v2929
    %v3329 = vpack.c.b16 %v2937, %v2930
    %v3330 = vpack.c.b16 %v2945, %v2938
    %v3331 = vpack.c.b16 %v2946, %v2939
    %v3332 = vpack.c.b16 %v2947, %v2940
    %v3333 = vpack.c.b16 %v2948, %v2941
    %v3334 = vpack.c.b16 %v2949, %v2942
    %v3335 = vpack.c.b16 %v2950, %v2943
    %v3336 = vpack.c.b16 %v2951, %v2944
    %v3337 = vpack.c.b16 %v2959, %v2952
    %v3338 = vpack.c.b16 %v2960, %v2953
    %v3339 = vpack.c.b16 %v2961, %v2954
    %v3340 = vpack.c.b16 %v2962, %v2955
    %v3341 = vpack.c.b16 %v2963, %v2956
    %v3342 = vpack.c.b16 %v2964, %v2957
    %v3343 = vpack.c.b16 %v2965, %v2958
    %v3344 = vpack.c.b16 %v2973, %v2966
    %v3345 = vpack.c.b16 %v2974, %v2967
    %v3346 = vpack.c.b16 %v2975, %v2968
    %v3347 = vpack.c.b16 %v2976, %v2969
    %v3348 = vpack.c.b16 %v2977, %v2970
    %v3349 = vpack.c.b16 %v2978, %v2971
    %v3350 = vpack.c.b16 %v2979, %v2972
    %v3351 = vpack.c.b16 %v2987, %v2980
    %v3352 = vpack.c.b16 %v2988, %v2981
    %v3353 = vpack.c.b16 %v2989, %v2982
    %v3354 = vpack.c.b16 %v2990, %v2983
    %v3355 = vpack.c.b16 %v2991, %v2984
    %v3356 = vpack.c.b16 %v2992, %v2985
    %v3357 = vpack.c.b16 %v2993, %v2986
    %v3358 = vpack.c.b16 %v3001, %v2994
    %v3359 = vpack.c.b16 %v3002, %v2995
    %v3360 = vpack.c.b16 %v3003, %v2996
    %v3361 = vpack.c.b16 %v3004, %v2997
    %v3362 = vpack.c.b16 %v3005, %v2998
    %v3363 = vpack.c.b16 %v3006, %v2999
    %v3364 = vpack.c.b16 %v3007, %v3000
    %v3365 = vpack.c.b16 %v3015, %v3008
    %v3366 = vpack.c.b16 %v3016, %v3009
    %v3367 = vpack.c.b16 %v3017, %v3010
    %v3368 = vpack.c.b16 %v3018, %v3011
    %v3369 = vpack.c.b16 %v3019, %v3012
    %v3370 = vpack.c.b16 %v3020, %v3013
    %v3371 = vpack.c.b16 %v3021, %v3014
    %v3372 = vpack.c.b16 %v3029, %v3022
    %v3373 = vpack.c.b16 %v3030, %v3023
    %v3374 = vpack.c.b16 %v3031, %v3024
    %v3375 = vpack.c.b16 %v3032, %v3025
    %v3376 = vpack.c.b16 %v3033, %v3026
    %v3377 = vpack.c.b16 %v3034, %v3027
    %v3378 = vpack.c.b16 %v3035, %v3028
    %v3379 = vpack.c.b16 %v3043, %v3036
    %v3380 = vpack.c.b16 %v3044, %v3037
    %v3381 = vpack.c.b16 %v3045, %v3038
    %v3382 = vpack.c.b16 %v3046, %v3039
    %v3383 = vpack.c.b16 %v3047, %v3040
    %v3384 = vpack.c.b16 %v3048, %v3041
    %v3385 = vpack.c.b16 %v3049, %v3042
    %v3386 = vpack.c.b16 %v3057, %v3050
    %v3387 = vpack.c.b16 %v3058, %v3051
    %v3388 = vpack.c.b16 %v3059, %v3052
    %v3389 = vpack.c.b16 %v3060, %v3053
    %v3390 = vpack.c.b16 %v3061, %v3054
    %v3391 = vpack.c.b16 %v3062, %v3055
    %v3392 = vpack.c.b16 %v3063, %v3056
    %v3393 = vpack.c.b16 %v3071, %v3064
    %v3394 = vpack.c.b16 %v3072, %v3065
    %v3395 = vpack.c.b16 %v3073, %v3066
    %v3396 = vpack.c.b16 %v3074, %v3067
    %v3397 = vpack.c.b16 %v3075, %v3068
    %v3398 = vpack.c.b16 %v3076, %v3069
    %v3399 = vpack.c.b16 %v3077, %v3070
    %v3400 = vpack.c.b16 %v3085, %v3078
    %v3401 = vpack.c.b16 %v3086, %v3079
    %v3402 = vpack.c.b16 %v3087, %v3080
    %v3403 = vpack.c.b16 %v3088, %v3081
    %v3404 = vpack.c.b16 %v3089, %v3082
    %v3405 = vpack.c.b16 %v3090, %v3083
    %v3406 = vpack.c.b16 %v3091, %v3084
    %v3407 = vpack.c.b16 %v3099, %v3092
    %v3408 = vpack.c.b16 %v3100, %v3093
    %v3409 = vpack.c.b16 %v3101, %v3094
    %v3410 = vpack.c.b16 %v3102, %v3095
    %v3411 = vpack.c.b16 %v3103, %v3096
    %v3412 = vpack.c.b16 %v3104, %v3097
    %v3413 = vpack.c.b16 %v3105, %v3098
    %v3414 = vpack.c.b16 %v3113, %v3106
    %v3415 = vpack.c.b16 %v3114, %v3107
    %v3416 = vpack.c.b16 %v3115, %v3108
    %v3417 = vpack.c.b16 %v3116, %v3109
    %v3418 = vpack.c.b16 %v3117, %v3110
    %v3419 = vpack.c.b16 %v3118, %v3111
    %v3420 = vpack.c.b16 %v3119, %v3112
    %v3421 = vpack.c.b16 %v3127, %v3120
    %v3422 = vpack.c.b16 %v3128, %v3121
    %v3423 = vpack.c.b16 %v3129, %v3122
    %v3424 = vpack.c.b16 %v3130, %v3123
    %v3425 = vpack.c.b16 %v3131, %v3124
    %v3426 = vpack.c.b16 %v3132, %v3125
    %v3427 = vpack.c.b16 %v3133, %v3126
    %v3428 = vpack.c.b16 %v3141, %v3134
    %v3429 = vpack.c.b16 %v3142, %v3135
    %v3430 = vpack.c.b16 %v3143, %v3136
    %v3431 = vpack.c.b16 %v3144, %v3137
    %v3432 = vpack.c.b16 %v3145, %v3138
    %v3433 = vpack.c.b16 %v3146, %v3139
    %v3434 = vpack.c.b16 %v3147, %v3140
    %v3435 = vpack.c.b16 %v3155, %v3148
    %v3436 = vpack.c.b16 %v3156, %v3149
    %v3437 = vpack.c.b16 %v3157, %v3150
    %v3438 = vpack.c.b16 %v3158, %v3151
    %v3439 = vpack.c.b16 %v3159, %v3152
    %v3440 = vpack.c.b16 %v3160, %v3153
    %v3441 = vpack.c.b16 %v3161, %v3154
    %v3442 = vpack.c.b16 %v3169, %v3162
    %v3443 = vpack.c.b16 %v3170, %v3163
    %v3444 = vpack.c.b16 %v3171, %v3164
    %v3445 = vpack.c.b16 %v3172, %v3165
    %v3446 = vpack.c.b16 %v3173, %v3166
    %v3447 = vpack.c.b16 %v3174, %v3167
    %v3448 = vpack.c.b16 %v3175, %v3168
    %v3449 = vpack.c.b16 %v3183, %v3176
    %v3450 = vpack.c.b16 %v3184, %v3177
    %v3451 = vpack.c.b16 %v3185, %v3178
    %v3452 = vpack.c.b16 %v3186, %v3179
    %v3453 = vpack.c.b16 %v3187, %v3180
    %v3454 = vpack.c.b16 %v3188, %v3181
    %v3455 = vpack.c.b16 %v3189, %v3182
    %v3456 = vpack.c.b16 %v3197, %v3190
    %v3457 = vpack.c.b16 %v3198, %v3191
    %v3458 = vpack.c.b16 %v3199, %v3192
    %v3459 = vpack.c.b16 %v3200, %v3193
    %v3460 = vpack.c.b16 %v3201, %v3194
    %v3461 = vpack.c.b16 %v3202, %v3195
    %v3462 = vpack.c.b16 %v3203, %v3196
    %v3463 = vpack.c.b16 %v3211, %v3204
    %v3464 = vpack.c.b16 %v3212, %v3205
    %v3465 = vpack.c.b16 %v3213, %v3206
    %v3466 = vpack.c.b16 %v3214, %v3207
    %v3467 = vpack.c.b16 %v3215, %v3208
    %v3468 = vpack.c.b16 %v3216, %v3209
    %v3469 = vpack.c.b16 %v3217, %v3210
    %v3470 = vpack.c.b16 %v3225, %v3218
    %v3471 = vpack.c.b16 %v3226, %v3219
    %v3472 = vpack.c.b16 %v3227, %v3220
    %v3473 = vpack.c.b16 %v3228, %v3221
    %v3474 = vpack.c.b16 %v3229, %v3222
    %v3475 = vpack.c.b16 %v3230, %v3223
    %v3476 = vpack.c.b16 %v3231, %v3224
    %v3477 = vpack.c.b16 %v3239, %v3232
    %v3478 = vpack.c.b16 %v3240, %v3233
    %v3479 = vpack.c.b16 %v3241, %v3234
    %v3480 = vpack.c.b16 %v3242, %v3235
    %v3481 = vpack.c.b16 %v3243, %v3236
    %v3482 = vpack.c.b16 %v3244, %v3237
    %v3483 = vpack.c.b16 %v3245, %v3238
    %v3484 = vpack.c.b16 %v3253, %v3246
    %v3485 = vpack.c.b16 %v3254, %v3247
    %v3486 = vpack.c.b16 %v3255, %v3248
    %v3487 = vpack.c.b16 %v3256, %v3249
    %v3488 = vpack.c.b16 %v3257, %v3250
    %v3489 = vpack.c.b16 %v3258, %v3251
    %v3490 = vpack.c.b16 %v3259, %v3252
    %v3491 = vpack.c.b16 %v3267, %v3260
    %v3492 = vpack.c.b16 %v3268, %v3261
    %v3493 = vpack.c.b16 %v3269, %v3262
    %v3494 = vpack.c.b16 %v3270, %v3263
    %v3495 = vpack.c.b16 %v3271, %v3264
    %v3496 = vpack.c.b16 %v3272, %v3265
    %v3497 = vpack.c.b16 %v3273, %v3266
    %3722 = vmatprep.subr.bf16.mxu0 %v3275
    %3723 = vmatpush1.bf16.msra.mxu0 %v3274
    %3724 = vmatprep.subr.bf16.mxu0 %v3282
    %3725 = vmatpush1.bf16.msra.mxu0 %v3281
    %3726 = vmatprep.subr.bf16.mxu0 %v3289
    %3727 = vmatpush1.bf16.msra.mxu0 %v3288
    %3728 = vmatprep.subr.bf16.mxu0 %v3296
    %3729 = vmatpush1.bf16.msra.mxu0 %v3295
    %3730 = vmatprep.subr.bf16.mxu0 %v3303
    %3731 = vmatpush1.bf16.msra.mxu0 %v3302
    %3732 = vmatprep.subr.bf16.mxu0 %v3310
    %3733 = vmatpush1.bf16.msra.mxu0 %v3309
    %3734 = vmatprep.subr.bf16.mxu0 %v3317
    %3735 = vmatpush1.bf16.msra.mxu0 %v3316
    %3736 = vmatprep.subr.bf16.mxu0 %v3324
    %3737 = vmatpush1.bf16.msra.mxu0 %v3323
    %3738 = vmatprep.subr.bf16.mxu0 %v3331
    %3739 = vmatpush1.bf16.msra.mxu0 %v3330
    %3740 = vmatprep.subr.bf16.mxu0 %v3338
    %3741 = vmatpush1.bf16.msra.mxu0 %v3337
    %3742 = vmatprep.subr.bf16.mxu0 %v3345
    %3743 = vmatpush1.bf16.msra.mxu0 %v3344
    %3744 = vmatprep.subr.bf16.mxu0 %v3352
    %3745 = vmatpush1.bf16.msra.mxu0 %v3351
    %3746 = vmatprep.subr.bf16.mxu0 %v3359
    %3747 = vmatpush1.bf16.msra.mxu0 %v3358
    %3748 = vmatprep.subr.bf16.mxu0 %v3366
    %3749 = vmatpush1.bf16.msra.mxu0 %v3365
    %3750 = vmatprep.subr.bf16.mxu0 %v3373
    %3751 = vmatpush1.bf16.msra.mxu0 %v3372
    %3752 = vmatprep.subr.bf16.mxu0 %v3380
    %3753 = vmatpush1.bf16.msra.mxu0 %v3379
    %3754 = vmatprep.mubr.bf16.mxu0 %v2274
    %3755 = vmatmul.mubr.bf16.gmra.mrb[0].mxu0 %v2273
    %v3756 = vpop.f32.mrb[0].mxu0
    %v3757 = vadd.f32 %v2538, %v3756
    %v3758 = vpop.f32.mrb[0].mxu0
    %v3759 = vadd.f32 %v2542, %v3758
    %v3760 = vpop.f32.mrb[0].mxu0
    %v3761 = vadd.f32 %v2538, %v3760
    %v3762 = vpop.f32.mrb[0].mxu0
    %v3763 = vadd.f32 %v2542, %v3762
    %3764 = vdwg.mxu0
    %3765 = vmatprep.subr.bf16.mxu0 %v3387
    %3766 = vmatpush1.bf16.msra.mxu0 %v3386
    %3767 = vmatprep.subr.bf16.mxu0 %v3394
    %3768 = vmatpush1.bf16.msra.mxu0 %v3393
    %3769 = vmatprep.subr.bf16.mxu0 %v3401
    %3770 = vmatpush1.bf16.msra.mxu0 %v3400
    %3771 = vmatprep.subr.bf16.mxu0 %v3408
    %3772 = vmatpush1.bf16.msra.mxu0 %v3407
    %3773 = vmatprep.subr.bf16.mxu0 %v3415
    %3774 = vmatpush1.bf16.msra.mxu0 %v3414
    %3775 = vmatprep.subr.bf16.mxu0 %v3422
    %3776 = vmatpush1.bf16.msra.mxu0 %v3421
    %3777 = vmatprep.subr.bf16.mxu0 %v3429
    %3778 = vmatpush1.bf16.msra.mxu0 %v3428
    %3779 = vmatprep.subr.bf16.mxu0 %v3436
    %3780 = vmatpush1.bf16.msra.mxu0 %v3435
    %3781 = vmatprep.subr.bf16.mxu0 %v3443
    %3782 = vmatpush1.bf16.msra.mxu0 %v3442
    %3783 = vmatprep.subr.bf16.mxu0 %v3450
    %3784 = vmatpush1.bf16.msra.mxu0 %v3449
    %3785 = vmatprep.subr.bf16.mxu0 %v3457
    %3786 = vmatpush1.bf16.msra.mxu0 %v3456
    %3787 = vmatprep.subr.bf16.mxu0 %v3464
    %3788 = vmatpush1.bf16.msra.mxu0 %v3463
    %3789 = vmatprep.subr.bf16.mxu0 %v3471
    %3790 = vmatpush1.bf16.msra.mxu0 %v3470
    %3791 = vmatprep.subr.bf16.mxu0 %v3478
    %3792 = vmatpush1.bf16.msra.mxu0 %v3477
    %3793 = vmatprep.subr.bf16.mxu0 %v3485
    %3794 = vmatpush1.bf16.msra.mxu0 %v3484
    %3795 = vmatprep.subr.bf16.mxu0 %v3492
    %3796 = vmatpush1.bf16.msra.mxu0 %v3491
    %3797 = vmatprep.mubr.bf16.mxu0 %v2276
    %3798 = vmatmul.mubr.bf16.gmra.mrb[0].mxu0 %v2275
    %v3799 = vpop.f32.mrb[0].mxu0
    %v3800 = vadd.f32 %v3757, %v3799
    %v3801 = vpop.f32.mrb[0].mxu0
    %v3802 = vadd.f32 %v3759, %v3801
    %v3803 = vpop.f32.mrb[0].mxu0
    %v3804 = vadd.f32 %v3761, %v3803
    %v3805 = vpop.f32.mrb[0].mxu0
    %v3806 = vadd.f32 %v3763, %v3805
    %3807 = vdwg.mxu0
    %3808 = vmatprep.subr.bf16.mxu0 %v3277
    %3809 = vmatpush1.bf16.msra.mxu0 %v3276
    %3810 = vmatprep.subr.bf16.mxu0 %v3284
    %3811 = vmatpush1.bf16.msra.mxu0 %v3283
    %3812 = vmatprep.subr.bf16.mxu0 %v3291
    %3813 = vmatpush1.bf16.msra.mxu0 %v3290
    %3814 = vmatprep.subr.bf16.mxu0 %v3298
    %3815 = vmatpush1.bf16.msra.mxu0 %v3297
    %3816 = vmatprep.subr.bf16.mxu0 %v3305
    %3817 = vmatpush1.bf16.msra.mxu0 %v3304
    %3818 = vmatprep.subr.bf16.mxu0 %v3312
    %3819 = vmatpush1.bf16.msra.mxu0 %v3311
    %3820 = vmatprep.subr.bf16.mxu0 %v3319
    %3821 = vmatpush1.bf16.msra.mxu0 %v3318
    %3822 = vmatprep.subr.bf16.mxu0 %v3326
    %3823 = vmatpush1.bf16.msra.mxu0 %v3325
    %3824 = vmatprep.subr.bf16.mxu0 %v3333
    %3825 = vmatpush1.bf16.msra.mxu0 %v3332
    %3826 = vmatprep.subr.bf16.mxu0 %v3340
    %3827 = vmatpush1.bf16.msra.mxu0 %v3339
    %3828 = vmatprep.subr.bf16.mxu0 %v3347
    %3829 = vmatpush1.bf16.msra.mxu0 %v3346
    %3830 = vmatprep.subr.bf16.mxu0 %v3354
    %3831 = vmatpush1.bf16.msra.mxu0 %v3353
    %3832 = vmatprep.subr.bf16.mxu0 %v3361
    %3833 = vmatpush1.bf16.msra.mxu0 %v3360
    %3834 = vmatprep.subr.bf16.mxu0 %v3368
    %3835 = vmatpush1.bf16.msra.mxu0 %v3367
    %3836 = vmatprep.subr.bf16.mxu0 %v3375
    %3837 = vmatpush1.bf16.msra.mxu0 %v3374
    %3838 = vmatprep.subr.bf16.mxu0 %v3382
    %3839 = vmatpush1.bf16.msra.mxu0 %v3381
    %3840 = vmatprep.mubr.bf16.mxu0 %v2274
    %3841 = vmatmul.mubr.bf16.gmra.mrb[0].mxu0 %v2273
    %v3842 = vpop.f32.mrb[0].mxu0
    %v3843 = vadd.f32 %v2546, %v3842
    %v3844 = vpop.f32.mrb[0].mxu0
    %v3845 = vadd.f32 %v2550, %v3844
    %v3846 = vpop.f32.mrb[0].mxu0
    %v3847 = vadd.f32 %v2546, %v3846
    %v3848 = vpop.f32.mrb[0].mxu0
    %v3849 = vadd.f32 %v2550, %v3848
    %3850 = vdwg.mxu0
    %3851 = vmatprep.subr.bf16.mxu0 %v3389
    %3852 = vmatpush1.bf16.msra.mxu0 %v3388
    %3853 = vmatprep.subr.bf16.mxu0 %v3396
    %3854 = vmatpush1.bf16.msra.mxu0 %v3395
    %3855 = vmatprep.subr.bf16.mxu0 %v3403
    %3856 = vmatpush1.bf16.msra.mxu0 %v3402
    %3857 = vmatprep.subr.bf16.mxu0 %v3410
    %3858 = vmatpush1.bf16.msra.mxu0 %v3409
    %3859 = vmatprep.subr.bf16.mxu0 %v3417
    %3860 = vmatpush1.bf16.msra.mxu0 %v3416
    %3861 = vmatprep.subr.bf16.mxu0 %v3424
    %3862 = vmatpush1.bf16.msra.mxu0 %v3423
    %3863 = vmatprep.subr.bf16.mxu0 %v3431
    %3864 = vmatpush1.bf16.msra.mxu0 %v3430
    %3865 = vmatprep.subr.bf16.mxu0 %v3438
    %3866 = vmatpush1.bf16.msra.mxu0 %v3437
    %3867 = vmatprep.subr.bf16.mxu0 %v3445
    %3868 = vmatpush1.bf16.msra.mxu0 %v3444
    %3869 = vmatprep.subr.bf16.mxu0 %v3452
    %3870 = vmatpush1.bf16.msra.mxu0 %v3451
    %3871 = vmatprep.subr.bf16.mxu0 %v3459
    %3872 = vmatpush1.bf16.msra.mxu0 %v3458
    %3873 = vmatprep.subr.bf16.mxu0 %v3466
    %3874 = vmatpush1.bf16.msra.mxu0 %v3465
    %3875 = vmatprep.subr.bf16.mxu0 %v3473
    %3876 = vmatpush1.bf16.msra.mxu0 %v3472
    %3877 = vmatprep.subr.bf16.mxu0 %v3480
    %3878 = vmatpush1.bf16.msra.mxu0 %v3479
    %3879 = vmatprep.subr.bf16.mxu0 %v3487
    %3880 = vmatpush1.bf16.msra.mxu0 %v3486
    %3881 = vmatprep.subr.bf16.mxu0 %v3494
    %3882 = vmatpush1.bf16.msra.mxu0 %v3493
    %3883 = vmatprep.mubr.bf16.mxu0 %v2276
    %3884 = vmatmul.mubr.bf16.gmra.mrb[0].mxu0 %v2275
    %v3885 = vpop.f32.mrb[0].mxu0
    %v3886 = vadd.f32 %v3843, %v3885
    %v3887 = vpop.f32.mrb[0].mxu0
    %v3888 = vadd.f32 %v3845, %v3887
    %v3889 = vpop.f32.mrb[0].mxu0
    %v3890 = vadd.f32 %v3847, %v3889
    %v3891 = vpop.f32.mrb[0].mxu0
    %v3892 = vadd.f32 %v3849, %v3891
    %3893 = vdwg.mxu0
    %3894 = vmatprep.subr.bf16.mxu0 %v3279
    %3895 = vmatpush1.bf16.msra.mxu0 %v3278
    %3896 = vmatprep.subr.bf16.mxu0 %v3286
    %3897 = vmatpush1.bf16.msra.mxu0 %v3285
    %3898 = vmatprep.subr.bf16.mxu0 %v3293
    %3899 = vmatpush1.bf16.msra.mxu0 %v3292
    %3900 = vmatprep.subr.bf16.mxu0 %v3300
    %3901 = vmatpush1.bf16.msra.mxu0 %v3299
    %3902 = vmatprep.subr.bf16.mxu0 %v3307
    %3903 = vmatpush1.bf16.msra.mxu0 %v3306
    %3904 = vmatprep.subr.bf16.mxu0 %v3314
    %3905 = vmatpush1.bf16.msra.mxu0 %v3313
    %3906 = vmatprep.subr.bf16.mxu0 %v3321
    %3907 = vmatpush1.bf16.msra.mxu0 %v3320
    %3908 = vmatprep.subr.bf16.mxu0 %v3328
    %3909 = vmatpush1.bf16.msra.mxu0 %v3327
    %3910 = vmatprep.subr.bf16.mxu0 %v3335
    %3911 = vmatpush1.bf16.msra.mxu0 %v3334
    %3912 = vmatprep.subr.bf16.mxu0 %v3342
    %3913 = vmatpush1.bf16.msra.mxu0 %v3341
    %3914 = vmatprep.subr.bf16.mxu0 %v3349
    %3915 = vmatpush1.bf16.msra.mxu0 %v3348
    %3916 = vmatprep.subr.bf16.mxu0 %v3356
    %3917 = vmatpush1.bf16.msra.mxu0 %v3355
    %3918 = vmatprep.subr.bf16.mxu0 %v3363
    %3919 = vmatpush1.bf16.msra.mxu0 %v3362
    %3920 = vmatprep.subr.bf16.mxu0 %v3370
    %3921 = vmatpush1.bf16.msra.mxu0 %v3369
    %3922 = vmatprep.subr.bf16.mxu0 %v3377
    %3923 = vmatpush1.bf16.msra.mxu0 %v3376
    %3924 = vmatprep.subr.bf16.mxu0 %v3384
    %3925 = vmatpush1.bf16.msra.mxu0 %v3383
    %3926 = vmatprep.mubr.bf16.mxu0 %v2274
    %3927 = vmatmul.mubr.bf16.gmra.mrb[0].mxu0 %v2273
    %v3928 = vpop.f32.mrb[0].mxu0
    %v3929 = vadd.f32 %v2554, %v3928
    %v3930 = vpop.f32.mrb[0].mxu0
    %v3931 = vadd.f32 %v2558, %v3930
    %v3932 = vpop.f32.mrb[0].mxu0
    %v3933 = vadd.f32 %v2554, %v3932
    %v3934 = vpop.f32.mrb[0].mxu0
    %v3935 = vadd.f32 %v2558, %v3934
    %3936 = vdwg.mxu0
    %3937 = vmatprep.subr.bf16.mxu0 %v3391
    %3938 = vmatpush1.bf16.msra.mxu0 %v3390
    %3939 = vmatprep.subr.bf16.mxu0 %v3398
    %3940 = vmatpush1.bf16.msra.mxu0 %v3397
    %3941 = vmatprep.subr.bf16.mxu0 %v3405
    %3942 = vmatpush1.bf16.msra.mxu0 %v3404
    %3943 = vmatprep.subr.bf16.mxu0 %v3412
    %3944 = vmatpush1.bf16.msra.mxu0 %v3411
    %3945 = vmatprep.subr.bf16.mxu0 %v3419
    %3946 = vmatpush1.bf16.msra.mxu0 %v3418
    %3947 = vmatprep.subr.bf16.mxu0 %v3426
    %3948 = vmatpush1.bf16.msra.mxu0 %v3425
    %3949 = vmatprep.subr.bf16.mxu0 %v3433
    %3950 = vmatpush1.bf16.msra.mxu0 %v3432
    %3951 = vmatprep.subr.bf16.mxu0 %v3440
    %3952 = vmatpush1.bf16.msra.mxu0 %v3439
    %3953 = vmatprep.subr.bf16.mxu0 %v3447
    %3954 = vmatpush1.bf16.msra.mxu0 %v3446
    %3955 = vmatprep.subr.bf16.mxu0 %v3454
    %3956 = vmatpush1.bf16.msra.mxu0 %v3453
    %3957 = vmatprep.subr.bf16.mxu0 %v3461
    %3958 = vmatpush1.bf16.msra.mxu0 %v3460
    %3959 = vmatprep.subr.bf16.mxu0 %v3468
    %3960 = vmatpush1.bf16.msra.mxu0 %v3467
    %3961 = vmatprep.subr.bf16.mxu0 %v3475
    %3962 = vmatpush1.bf16.msra.mxu0 %v3474
    %3963 = vmatprep.subr.bf16.mxu0 %v3482
    %3964 = vmatpush1.bf16.msra.mxu0 %v3481
    %3965 = vmatprep.subr.bf16.mxu0 %v3489
    %3966 = vmatpush1.bf16.msra.mxu0 %v3488
    %3967 = vmatprep.subr.bf16.mxu0 %v3496
    %3968 = vmatpush1.bf16.msra.mxu0 %v3495
    %3969 = vmatprep.mubr.bf16.mxu0 %v2276
    %3970 = vmatmul.mubr.bf16.gmra.mrb[0].mxu0 %v2275
    %v3971 = vpop.f32.mrb[0].mxu0
    %v3972 = vadd.f32 %v3929, %v3971
    %v3973 = vpop.f32.mrb[0].mxu0
    %v3974 = vadd.f32 %v3931, %v3973
    %v3975 = vpop.f32.mrb[0].mxu0
    %v3976 = vadd.f32 %v3933, %v3975
    %v3977 = vpop.f32.mrb[0].mxu0
    %v3978 = vadd.f32 %v3935, %v3977
    %3979 = vdwg.mxu0
    %3980 = vmatprep.subr.bf16.mxu0 0
    %3981 = vmatpush1.bf16.msra.mxu0 %v3280
    %3982 = vmatprep.subr.bf16.mxu0 0
    %3983 = vmatpush1.bf16.msra.mxu0 %v3287
    %3984 = vmatprep.subr.bf16.mxu0 0
    %3985 = vmatpush1.bf16.msra.mxu0 %v3294
    %3986 = vmatprep.subr.bf16.mxu0 0
    %3987 = vmatpush1.bf16.msra.mxu0 %v3301
    %3988 = vmatprep.subr.bf16.mxu0 0
    %3989 = vmatpush1.bf16.msra.mxu0 %v3308
    %3990 = vmatprep.subr.bf16.mxu0 0
    %3991 = vmatpush1.bf16.msra.mxu0 %v3315
    %3992 = vmatprep.subr.bf16.mxu0 0
    %3993 = vmatpush1.bf16.msra.mxu0 %v3322
    %3994 = vmatprep.subr.bf16.mxu0 0
    %3995 = vmatpush1.bf16.msra.mxu0 %v3329
    %3996 = vmatprep.subr.bf16.mxu0 0
    %3997 = vmatpush1.bf16.msra.mxu0 %v3336
    %3998 = vmatprep.subr.bf16.mxu0 0
    %3999 = vmatpush1.bf16.msra.mxu0 %v3343
    %4000 = vmatprep.subr.bf16.mxu0 0
    %4001 = vmatpush1.bf16.msra.mxu0 %v3350
    %4002 = vmatprep.subr.bf16.mxu0 0
    %4003 = vmatpush1.bf16.msra.mxu0 %v3357
    %4004 = vmatprep.subr.bf16.mxu0 0
    %4005 = vmatpush1.bf16.msra.mxu0 %v3364
    %4006 = vmatprep.subr.bf16.mxu0 0
    %4007 = vmatpush1.bf16.msra.mxu0 %v3371
    %4008 = vmatprep.subr.bf16.mxu0 0
    %4009 = vmatpush1.bf16.msra.mxu0 %v3378
    %4010 = vmatprep.subr.bf16.mxu0 0
    %4011 = vmatpush1.bf16.msra.mxu0 %v3385
    %4012 = vmatprep.mubr.bf16.mxu0 %v2274
    %4013 = vmatmul.mubr.bf16.gmra.mrb[0].mxu0 %v2273
    %v4014 = vpop.f32.mrb[0].mxu0
    %v4015 = vadd.f32 %v2562, %v4014
    %v4016 = vpop.f32.mrb[0].mxu0
    %v4017 = vpop.f32.mrb[0].mxu0
    %v4018 = vadd.f32 %v2562, %v4017
    %v4019 = vpop.f32.mrb[0].mxu0
    %4020 = vdwg.mxu0
    %4021 = vmatprep.subr.bf16.mxu0 0
    %4022 = vmatpush1.bf16.msra.mxu0 %v3392
    %4023 = vmatprep.subr.bf16.mxu0 0
    %4024 = vmatpush1.bf16.msra.mxu0 %v3399
    %4025 = vmatprep.subr.bf16.mxu0 0
    %4026 = vmatpush1.bf16.msra.mxu0 %v3406
    %4027 = vmatprep.subr.bf16.mxu0 0
    %4028 = vmatpush1.bf16.msra.mxu0 %v3413
    %4029 = vmatprep.subr.bf16.mxu0 0
    %4030 = vmatpush1.bf16.msra.mxu0 %v3420
    %4031 = vmatprep.subr.bf16.mxu0 0
    %4032 = vmatpush1.bf16.msra.mxu0 %v3427
    %4033 = vmatprep.subr.bf16.mxu0 0
    %4034 = vmatpush1.bf16.msra.mxu0 %v3434
    %4035 = vmatprep.subr.bf16.mxu0 0
    %4036 = vmatpush1.bf16.msra.mxu0 %v3441
    %4037 = vmatprep.subr.bf16.mxu0 0
    %4038 = vmatpush1.bf16.msra.mxu0 %v3448
    %4039 = vmatprep.subr.bf16.mxu0 0
    %4040 = vmatpush1.bf16.msra.mxu0 %v3455
    %4041 = vmatprep.subr.bf16.mxu0 0
    %4042 = vmatpush1.bf16.msra.mxu0 %v3462
    %4043 = vmatprep.subr.bf16.mxu0 0
    %4044 = vmatpush1.bf16.msra.mxu0 %v3469
    %4045 = vmatprep.subr.bf16.mxu0 0
    %4046 = vmatpush1.bf16.msra.mxu0 %v3476
    %4047 = vmatprep.subr.bf16.mxu0 0
    %4048 = vmatpush1.bf16.msra.mxu0 %v3483
    %4049 = vmatprep.subr.bf16.mxu0 0
    %4050 = vmatpush1.bf16.msra.mxu0 %v3490
    %4051 = vmatprep.subr.bf16.mxu0 0
    %4052 = vmatpush1.bf16.msra.mxu0 %v3497
    %4053 = vmatprep.mubr.bf16.mxu0 %v2276
    %4054 = vmatmul.mubr.bf16.gmra.mrb[0].mxu0 %v2275
    %v4055 = vpop.f32.mrb[0].mxu0
    %v4056 = vadd.f32 %v4015, %v4055
    %v4057 = vpop.f32.mrb[0].mxu0
    %v4058 = vpop.f32.mrb[0].mxu0
    %v4059 = vadd.f32 %v4018, %v4058
    %v4060 = vpop.f32.mrb[0].mxu0
    %4061 = vdwg.mxu0
    %v4062 = vpack.c.bf16 %v3804, %v3800
    %v4063 = vpack.c.bf16 %v3806, %v3802
    %v4064 = vpack.c.bf16 %v3890, %v3886
    %v4065 = vpack.c.bf16 %v3892, %v3888
    %v4066 = vpack.c.bf16 %v3976, %v3972
    %v4067 = vpack.c.bf16 %v3978, %v3974
    %v4068 = vpack.c.bf16 %v4059, %v4056
    %v4076 = vunpack.c.l.b16 %v4062
    %v4077 = vunpack.c.l.b16 %v4063
    %v4078 = vunpack.c.l.b16 %v4064
    %v4079 = vunpack.c.l.b16 %v4065
    %v4080 = vunpack.c.l.b16 %v4066
    %v4081 = vunpack.c.l.b16 %v4067
    %v4082 = vunpack.c.l.b16 %v4068
    %v4083 = vunpack.c.h.b16 %v4062
    %v4084 = vunpack.c.h.b16 %v4063
    %v4085 = vunpack.c.h.b16 %v4064
    %v4086 = vunpack.c.h.b16 %v4065
    %v4087 = vunpack.c.h.b16 %v4066
    %v4088 = vunpack.c.h.b16 %v4067
    %v4089 = vunpack.c.h.b16 %v4068
    %v4090 = vpack.c.b16 %v4077, %v4076
    %v4091 = vpack.c.b16 %v4079, %v4078
    %v4092 = vpack.c.b16 %v4081, %v4080
    %v4093 = vpack.c.b16 %v4082, %v4082
    %v4094 = vpack.c.b16 %v4084, %v4083
    %v4095 = vpack.c.b16 %v4086, %v4085
    %v4096 = vpack.c.b16 %v4088, %v4087
    %v4097 = vpack.c.b16 %v4089, %v4089
    %4106 = vst [vmem:[#allocation2] sm:$0xff] %v4090
    %4107 = vst [vmem:[#allocation2 + $0x8] sm:$0xff] %v4091
    %4108 = vst [vmem:[#allocation2 + $0x10] sm:$0xff] %v4092
    %vm4109 = vcmask 125952
    %4110 = vst.msk [vmem:[#allocation2 + $0x18] sm:$0xf] %vm4109, %v4093
    %4111 = vst [vmem:[#allocation2 + $0x1c] sm:$0xff] %v4094
    %4112 = vst [vmem:[#allocation2 + $0x24] sm:$0xff] %v4095
    %4113 = vst [vmem:[#allocation2 + $0x2c] sm:$0xff] %v4096
    %4114 = vst.msk [vmem:[#allocation2 + $0x34] sm:$0xf] %vm4109, %v4097
    // Predicated region
    $region38: #{tpu_custom_call.1} parent=1 // pred_check
      _
    $region39: #{tpu_custom_call.1} parent=1 // pred_check_branch
      %4116 = sbr.rel (0) target = $region41
    $region40: #{tpu_custom_call.1} parent=1 // pred_region
      %s4118 = ssub.s32 896, 896
      %4119 = vsyncadd [#allocation3], %s4118
      %s4120 = sshll.u32 [#allocation2], 4
      %s4121 = int_to_ptr.vmem [resolvable:$true] %s4120
      %4126 = dma.vmem_to_hbm [thread:$0]  %s4121, 896, %s9, [#allocation3], 448, 448, 28
    $region41: #{tpu_custom_call.1} parent=1 // pred_fallthru
      _
    // Predicated region
    $region42: #{tpu_custom_call.1} parent=1 // pred_check
      _
    $region43: #{tpu_custom_call.1} parent=1 // pred_check_branch
      %4128 = sbr.rel (0) target = $region45
    $region44: #{tpu_custom_call.1} parent=1 // pred_region
      %4129 = dma.done [#allocation3], 896
    $region45: #{tpu_custom_call.1} parent=1 // pred_fallthru
      _
    %4130 = vsyncpa [#allocation3], 1

</llo_original>
